<compile_context>
chip_gen: v7x
topology: tpu7x:2x2x1
jax: 0.10.0
libtpu: 0.0.40
codegen_flags: <defaults>
</compile_context>

<pallas_src>
import functools
import numpy as np

import jax
import jax.numpy as jnp
from jax.experimental import pallas as pl
from jax.experimental.pallas import tpu as pltpu

NEG_SLOPE = 0.01  # PyTorch LeakyReLU default negative_slope


# ----------------------------------------------------------------------------
# Host-side (static, done once) construction of dense NCHW operators
# ----------------------------------------------------------------------------
def _conv3x3_matrix(w, H, W, stride):
    """Dense M (Cin*H*W, Cout*Ho*Wo) with vec_nchw(out) = vec_nchw(in) @ M for a
    3x3, padding=1 convolution.  w: PyTorch layout (Cout, Cin, 3, 3)."""
    w = np.asarray(w, np.float32)
    Cout, Cin, KH, KW = w.shape
    Ho = (H + 2 - KH) // stride + 1
    Wo = (W + 2 - KW) // stride + 1
    M = np.zeros((Cin * H * W, Cout * Ho * Wo), np.float32)
    for co in range(Cout):
        for ci in range(Cin):
            for oh in range(Ho):
                for ow in range(Wo):
                    ocol = (co * Ho + oh) * Wo + ow
                    for kh in range(KH):
                        ih = oh * stride + kh - 1
                        if ih < 0 or ih >= H:
                            continue
                        for kw in range(KW):
                            iw = ow * stride + kw - 1
                            if iw < 0 or iw >= W:
                                continue
                            M[(ci * H + ih) * W + iw, ocol] += w[co, ci, kh, kw]
    return M, Ho, Wo


def _bilinear_up_1d(n):
    """Exact PyTorch align_corners=False weights for 2x upsampling along one axis: (2n, n)."""
    U = np.zeros((2 * n, n), np.float32)
    for i in range(2 * n):
        src = max((i + 0.5) * 0.5 - 0.5, 0.0)
        j0 = int(np.floor(src))
        frac = src - j0
        j1 = min(j0 + 1, n - 1)
        j0 = min(j0, n - 1)
        U[i, j0] += 1.0 - frac
        U[i, j1] += frac
    return U


def _upsample2x_matrix(C, H, W):
    """(C*H*W, C*2H*2W) NCHW operator for bilinear(align_corners=False) 2x upsample."""
    Uh = _bilinear_up_1d(H)                                    # (2H, H)
    Uw = _bilinear_up_1d(W)                                    # (2W, W)
    S = np.einsum("oi,pj->ijop", Uh, Uw).reshape(H * W, 4 * H * W)
    return np.kron(np.eye(C, dtype=np.float32), S).astype(np.float32)


def prepare_fused_params(p, *, complexity, taille_image):
    """Bake convs / upsamples into dense operators; cast matmul weights to bf16, biases f32."""
    C, T = complexity, taille_image
    Q = T // 4
    f = {}

    def wb(mat, bias_vec):
        w = jnp.asarray(np.asarray(mat, np.float32)).astype(jnp.bfloat16)
        b = jnp.asarray(np.asarray(bias_vec, np.float32).reshape(1, -1), jnp.float32)
        return w, b

    # encoder convs (stride 2) as dense NCHW matmuls
    M1, H1, W1 = _conv3x3_matrix(p["enc_c1_w"], T, T, stride=2)
    f["e1_w"], f["e1_b"] = wb(M1, np.repeat(np.asarray(p["enc_c1_b"]), H1 * W1))
    M2, H2, W2 = _conv3x3_matrix(p["enc_c2_w"], H1, W1, stride=2)
    f["e2_w"], f["e2_b"] = wb(M2, np.repeat(np.asarray(p["enc_c2_b"]), H2 * W2))
    # encoder FCs (weights already stored (in, out); conv2's NCHW column order == Flatten order)
    f["f1_w"], f["f1_b"] = wb(np.asarray(p["enc_f1_w"]), np.asarray(p["enc_f1_b"]))
    f["f2_w"], f["f2_b"] = wb(np.asarray(p["enc_f2_w"]), np.asarray(p["enc_f2_b"]))
    # mini_decoder MLP
    for i in (1, 2, 3, 4):
        f[f"m{i}_w"], f[f"m{i}_b"] = wb(np.asarray(p[f"md_f{i}_w"]),
                                        np.asarray(p[f"md_f{i}_b"]))
    # mini_decoder_deconv: fuse each Conv2d with the Upsample that follows it (both linear,
    # no nonlinearity between them in the Sequential), so K/N become 128..1024 (MXU-friendly).
    Mc1, _, _ = _conv3x3_matrix(p["dc_c1_w"], Q, Q, stride=1)             # (C*Q*Q, C*Q*Q)
    Up1 = _upsample2x_matrix(C, Q, Q)                                     # (C*Q*Q, C*4Q*Q)
    f["a_w"], f["a_b"] = wb(Mc1 @ Up1,
                            np.repeat(np.asarray(p["dc_c1_b"]), Q * Q) @ Up1)
    Mc2, _, _ = _conv3x3_matrix(p["dc_c2_w"], 2 * Q, 2 * Q, stride=1)     # (C*4Q*Q, C/2*4Q*Q)
    Up2 = _upsample2x_matrix(C // 2, 2 * Q, 2 * Q)                        # (C/2*4Q*Q, C/2*T*T)
    f["b_w"], f["b_b"] = wb(Mc2 @ Up2,
                            np.repeat(np.asarray(p["dc_c2_b"]), 4 * Q * Q) @ Up2)
    Mc3, _, _ = _conv3x3_matrix(p["dc_c3_w"], T, T, stride=1)             # (C/2*T*T, T*T)
    f["c_w"], f["c_b"] = wb(Mc3, np.repeat(np.asarray(p["dc_c3_b"]), T * T))
    return f


# ----------------------------------------------------------------------------
# Pallas kernels
# ----------------------------------------------------------------------------
def _linear(a, w_ref, b_ref, leaky):
    """f32 activation -> bf16 MXU inputs -> f32 accumulate -> f32 bias + LeakyReLU."""
    acc = jnp.dot(a.astype(jnp.bfloat16), w_ref[...],
                  preferred_element_type=jnp.float32)
    acc = acc + b_ref[...]
    if leaky:
        acc = jnp.where(acc >= 0, acc, NEG_SLOPE * acc)
    return acc


def _encoder_kernel(x_ref, e1w, e1b, e2w, e2b, f1w, f1b, f2w, f2b, h_ref):
    h = x_ref[...]                       # (B, T*T) f32, NCHW-flattened input
    h = _linear(h, e1w, e1b, True)       # Conv(1, C/2, s=2) + LeakyReLU
    h = _linear(h, e2w, e2b, True)       # Conv(C/2, C, s=2) + LeakyReLU (== Flatten output)
    h = _linear(h, f1w, f1b, True)       # Linear(feat, 210) + LeakyReLU
    h = _linear(h, f2w, f2b, True)       # Linear(210, 200) + LeakyReLU
    h_ref[...] = h


def _decoder_kernel(z_ref, m1w, m1b, m2w, m2b, m3w, m3b, m4w, m4b,
                    aw, ab, bw, bb, cw, cb, o_ref, *, operation):
    d = z_ref[0]                         # (NB, SB) f32 — all NB blocks of one sample
    d = _linear(d, m1w, m1b, True)       # Linear(SB, 2SB) + LeakyReLU
    d = _linear(d, m2w, m2b, True)       # Linear(2SB, 100) + LeakyReLU
    d = _linear(d, m3w, m3b, True)       # Linear(100, 200) + LeakyReLU
    d = _linear(d, m4w, m4b, False)      # Linear(200, feat)      -> NCHW (C, T/4, T/4)
    d = _linear(d, aw, ab, True)         # Conv(C,C) + Upsample2x fused, + LeakyReLU
    d = _linear(d, bw, bb, True)         # Conv(C,C/2) + Upsample2x fused, + LeakyReLU
    d = _linear(d, cw, cb, False)        # Conv(C/2,1)            -> (NB, T*T)
    # Block reduction in the epilogue (data is already resident in VMEM/vregs).
    if operation == "sum":
        o_ref[0] = jnp.sum(d, axis=0, keepdims=True)
    elif operation == "max":
        o_ref[0] = jnp.max(d, axis=0, keepdims=True)
    else:
        o_ref[0] = d                     # no reduction: emit all NB blocks


# ----------------------------------------------------------------------------
# Forward pass (2 pallas_calls total)
# ----------------------------------------------------------------------------
def autoencoder_forward(x, fused, *, operation, num_blocks, size_blocks,
                        complexity, taille_image):
    T, NB, SB = taille_image, num_blocks, size_blocks
    assert NB * SB == 200, "encoder emits 200 features; num_blocks*size_blocks must be 200"

    x2 = x.reshape(-1, T * T).astype(jnp.float32)            # NCHW flatten (Cin == 1)
    B = x2.shape[0]

    # ---- kernel 1: encoder --------------------------------------------------
    enc_args = (x2, fused["e1_w"], fused["e1_b"], fused["e2_w"], fused["e2_b"],
                fused["f1_w"], fused["f1_b"], fused["f2_w"], fused["f2_b"])
    h = pl.pallas_call(
        _encoder_kernel,
        grid=(1,),
        in_specs=[pl.BlockSpec(a.shape, lambda i: (0, 0)) for a in enc_args],
        out_specs=pl.BlockSpec((B, NB * SB), lambda i: (0, 0)),
        out_shape=jax.ShapeDtypeStruct((B, NB * SB), jnp.float32),
        compiler_params=pltpu.CompilerParams(dimension_semantics=("arbitrary",)),
    )(*enc_args)

    # x.view(-1, num_block, size_block): free row-major reshape (no HBM copy)
    z = h.reshape(B, NB, SB)

    # ---- kernel 2: mini_decoder + deconv + block reduction -------------------
    dec_weights = (fused["m1_w"], fused["m1_b"], fused["m2_w"], fused["m2_b"],
                   fused["m3_w"], fused["m3_b"], fused["m4_w"], fused["m4_b"],
                   fused["a_w"], fused["a_b"], fused["b_w"], fused["b_b"],
                   fused["c_w"], fused["c_b"])
    reduce_blocks = operation in ("sum", "max")
    out_rows = 1 if reduce_blocks else NB

    out = pl.pallas_call(
        functools.partial(_decoder_kernel, operation=operation),
        grid=(B,),                                            # "parallel": 2 TCs on v7x
        in_specs=[pl.BlockSpec((1, NB, SB), lambda b: (b, 0, 0))]
                 + [pl.BlockSpec(w.shape, lambda b: (0, 0)) for w in dec_weights],
        out_specs=pl.BlockSpec((1, out_rows, T * T), lambda b: (b, 0, 0)),
        out_shape=jax.ShapeDtypeStruct((B, out_rows, T * T), jnp.float32),
        compiler_params=pltpu.CompilerParams(dimension_semantics=("parallel",)),
    )(z, *dec_weights)

    if reduce_blocks:
        return out.reshape(B, 1, T, T)
    return out.reshape(B * NB, 1, T, T)


# ----------------------------------------------------------------------------
# Parameter init (deterministic, synthetic — mirrors the nn.Module shapes;
# Linear weights are stored (in, out) so y = x @ W + b)
# ----------------------------------------------------------------------------
def init_params(key, C, T, NB, SB):
    feat = C * (T // 4) ** 2
    keys = iter(jax.random.split(key, 22))

    def conv(cout, cin):
        w = jax.random.normal(next(keys), (cout, cin, 3, 3), jnp.float32) / np.sqrt(cin * 9.0)
        b = jax.random.normal(next(keys), (cout,), jnp.float32) * 0.01
        return w, b

    def lin(fin, fout):
        w = jax.random.normal(next(keys), (fin, fout), jnp.float32) / np.sqrt(float(fin))
        b = jax.random.normal(next(keys), (fout,), jnp.float32) * 0.01
        return w, b

    p = {}
    p["enc_c1_w"], p["enc_c1_b"] = conv(C // 2, 1)
    p["enc_c2_w"], p["enc_c2_b"] = conv(C, C // 2)
    p["enc_f1_w"], p["enc_f1_b"] = lin(feat, 210)
    p["enc_f2_w"], p["enc_f2_b"] = lin(210, 200)
    p["md_f1_w"], p["md_f1_b"] = lin(SB, 2 * SB)
    p["md_f2_w"], p["md_f2_b"] = lin(2 * SB, 100)
    p["md_f3_w"], p["md_f3_b"] = lin(100, 200)
    p["md_f4_w"], p["md_f4_b"] = lin(200, feat)
    p["dc_c1_w"], p["dc_c1_b"] = conv(C, C)
    p["dc_c2_w"], p["dc_c2_b"] = conv(C // 2, C)
    p["dc_c3_w"], p["dc_c3_b"] = conv(1, C // 2)
    # multscal exists in the module but is unused in forward()
    p["multscal"] = jnp.zeros((NB,), jnp.float32)
    return p


# ----------------------------------------------------------------------------
if __name__ == "__main__":
    B, T, C = 2, 16, 8
    NB, SB = 10, 20
    operation = "sum"

    key = jax.random.PRNGKey(0)
    pkey, xkey = jax.random.split(key)
    params = init_params(pkey, C, T, NB, SB)
    fused = prepare_fused_params(params, complexity=C, taille_image=T)
    x = jax.random.normal(xkey, (B, 1, T, T), jnp.float32)

    @jax.jit
    def fwd(x_in, fp):
        return autoencoder_forward(x_in, fp, operation=operation, num_blocks=NB,
                                   size_blocks=SB, complexity=C, taille_image=T)

    out = jax.block_until_ready(fwd(x, fused))

    assert out.shape == (B, 1, T, T), out.shape
    assert bool(jnp.all(jnp.isfinite(out)))
    print("KERNEL_OK")
</pallas_src>

<mosaic_0001>
module attributes {stable_mosaic.version = 11 : i64} {
  func.func @_encoder_kernel(%arg0: i32, %arg1: memref<2x256xf32, #tpu.memory_space<vmem>>, %arg2: memref<256x256xbf16, #tpu.memory_space<vmem>>, %arg3: memref<1x256xf32, #tpu.memory_space<vmem>>, %arg4: memref<256x128xbf16, #tpu.memory_space<vmem>>, %arg5: memref<1x128xf32, #tpu.memory_space<vmem>>, %arg6: memref<128x210xbf16, #tpu.memory_space<vmem>>, %arg7: memref<1x210xf32, #tpu.memory_space<vmem>>, %arg8: memref<210x200xbf16, #tpu.memory_space<vmem>>, %arg9: memref<1x200xf32, #tpu.memory_space<vmem>>, %arg10: memref<2x200xf32, #tpu.memory_space<vmem>>) attributes {dimension_semantics = [#tpu.dimension_semantics<arbitrary>], iteration_bounds = array<i64: 1>, scalar_prefetch = 0 : i64, scratch_operands = 0 : i64, tpu.core_type = #tpu.core_type<tc>, window_params = [{pipeline_mode = #tpu.pipeline_mode<synchronous>, transform_indices = @transform_0, window_bounds = array<i64: 2, 256>}, {pipeline_mode = #tpu.pipeline_mode<synchronous>, transform_indices = @transform_1, window_bounds = array<i64: 256, 256>}, {pipeline_mode = #tpu.pipeline_mode<synchronous>, transform_indices = @transform_2, window_bounds = array<i64: 1, 256>}, {pipeline_mode = #tpu.pipeline_mode<synchronous>, transform_indices = @transform_3, window_bounds = array<i64: 256, 128>}, {pipeline_mode = #tpu.pipeline_mode<synchronous>, transform_indices = @transform_4, window_bounds = array<i64: 1, 128>}, {pipeline_mode = #tpu.pipeline_mode<synchronous>, transform_indices = @transform_5, window_bounds = array<i64: 128, 210>}, {pipeline_mode = #tpu.pipeline_mode<synchronous>, transform_indices = @transform_6, window_bounds = array<i64: 1, 210>}, {pipeline_mode = #tpu.pipeline_mode<synchronous>, transform_indices = @transform_7, window_bounds = array<i64: 210, 200>}, {pipeline_mode = #tpu.pipeline_mode<synchronous>, transform_indices = @transform_8, window_bounds = array<i64: 1, 200>}, {pipeline_mode = #tpu.pipeline_mode<synchronous>, transform_indices = @transform_9, window_bounds = array<i64: 2, 200>}]} {
    %c0 = arith.constant 0 : index
    %c0_0 = arith.constant 0 : index
    %0 = vector.load %arg1[%c0, %c0_0] : memref<2x256xf32, #tpu.memory_space<vmem>>, vector<2x256xf32>
    %1 = arith.truncf %0 : vector<2x256xf32> to vector<2x256xbf16>
    %c0_1 = arith.constant 0 : index
    %c0_2 = arith.constant 0 : index
    %2 = vector.load %arg2[%c0_1, %c0_2] : memref<256x256xbf16, #tpu.memory_space<vmem>>, vector<256x256xbf16>
    %cst = arith.constant dense<0.000000e+00> : vector<2x256xf32>
    %3 = tpu.matmul %1, %2, %cst {dimension_numbers = #tpu.dot_dimension_numbers<[1], [0], [0], [1], [0, 0, 1, 1], [], []>} : vector<2x256xbf16>, vector<256x256xbf16>, vector<2x256xf32> -> vector<2x256xf32>
    %c0_3 = arith.constant 0 : index
    %c0_4 = arith.constant 0 : index
    %4 = vector.load %arg3[%c0_3, %c0_4] : memref<1x256xf32, #tpu.memory_space<vmem>>, vector<1x256xf32>
    %5 = vector.broadcast %4 : vector<1x256xf32> to vector<2x256xf32>
    %6 = arith.addf %3, %5 : vector<2x256xf32>
    %cst_5 = arith.constant 0.000000e+00 : f32
    %7 = vector.broadcast %cst_5 : f32 to vector<2x256xf32>
    %8 = arith.cmpf oge, %6, %7 : vector<2x256xf32>
    %cst_6 = arith.constant 0.00999999977 : f32
    %9 = vector.broadcast %cst_6 : f32 to vector<2x256xf32>
    %10 = arith.mulf %9, %6 : vector<2x256xf32>
    %11 = arith.select %8, %6, %10 : vector<2x256xi1>, vector<2x256xf32>
    %12 = arith.truncf %11 : vector<2x256xf32> to vector<2x256xbf16>
    %c0_7 = arith.constant 0 : index
    %c0_8 = arith.constant 0 : index
    %13 = vector.load %arg4[%c0_7, %c0_8] : memref<256x128xbf16, #tpu.memory_space<vmem>>, vector<256x128xbf16>
    %cst_9 = arith.constant dense<0.000000e+00> : vector<2x128xf32>
    %14 = tpu.matmul %12, %13, %cst_9 {dimension_numbers = #tpu.dot_dimension_numbers<[1], [0], [0], [1], [0, 0, 1, 1], [], []>} : vector<2x256xbf16>, vector<256x128xbf16>, vector<2x128xf32> -> vector<2x128xf32>
    %c0_10 = arith.constant 0 : index
    %c0_11 = arith.constant 0 : index
    %15 = vector.load %arg5[%c0_10, %c0_11] : memref<1x128xf32, #tpu.memory_space<vmem>>, vector<1x128xf32>
    %16 = vector.broadcast %15 : vector<1x128xf32> to vector<2x128xf32>
    %17 = arith.addf %14, %16 : vector<2x128xf32>
    %cst_12 = arith.constant 0.000000e+00 : f32
    %18 = vector.broadcast %cst_12 : f32 to vector<2x128xf32>
    %19 = arith.cmpf oge, %17, %18 : vector<2x128xf32>
    %cst_13 = arith.constant 0.00999999977 : f32
    %20 = vector.broadcast %cst_13 : f32 to vector<2x128xf32>
    %21 = arith.mulf %20, %17 : vector<2x128xf32>
    %22 = arith.select %19, %17, %21 : vector<2x128xi1>, vector<2x128xf32>
    %23 = arith.truncf %22 : vector<2x128xf32> to vector<2x128xbf16>
    %c0_14 = arith.constant 0 : index
    %c0_15 = arith.constant 0 : index
    %24 = vector.load %arg6[%c0_14, %c0_15] : memref<128x210xbf16, #tpu.memory_space<vmem>>, vector<128x210xbf16>
    %cst_16 = arith.constant dense<0.000000e+00> : vector<2x210xf32>
    %25 = tpu.matmul %23, %24, %cst_16 {dimension_numbers = #tpu.dot_dimension_numbers<[1], [0], [0], [1], [0, 0, 1, 1], [], []>} : vector<2x128xbf16>, vector<128x210xbf16>, vector<2x210xf32> -> vector<2x210xf32>
    %c0_17 = arith.constant 0 : index
    %c0_18 = arith.constant 0 : index
    %26 = vector.load %arg7[%c0_17, %c0_18] : memref<1x210xf32, #tpu.memory_space<vmem>>, vector<1x210xf32>
    %27 = vector.broadcast %26 : vector<1x210xf32> to vector<2x210xf32>
    %28 = arith.addf %25, %27 : vector<2x210xf32>
    %cst_19 = arith.constant 0.000000e+00 : f32
    %29 = vector.broadcast %cst_19 : f32 to vector<2x210xf32>
    %30 = arith.cmpf oge, %28, %29 : vector<2x210xf32>
    %cst_20 = arith.constant 0.00999999977 : f32
    %31 = vector.broadcast %cst_20 : f32 to vector<2x210xf32>
    %32 = arith.mulf %31, %28 : vector<2x210xf32>
    %33 = arith.select %30, %28, %32 : vector<2x210xi1>, vector<2x210xf32>
    %34 = arith.truncf %33 : vector<2x210xf32> to vector<2x210xbf16>
    %c0_21 = arith.constant 0 : index
    %c0_22 = arith.constant 0 : index
    %35 = vector.load %arg8[%c0_21, %c0_22] : memref<210x200xbf16, #tpu.memory_space<vmem>>, vector<210x200xbf16>
    %cst_23 = arith.constant dense<0.000000e+00> : vector<2x200xf32>
    %36 = tpu.matmul %34, %35, %cst_23 {dimension_numbers = #tpu.dot_dimension_numbers<[1], [0], [0], [1], [0, 0, 1, 1], [], []>} : vector<2x210xbf16>, vector<210x200xbf16>, vector<2x200xf32> -> vector<2x200xf32>
    %c0_24 = arith.constant 0 : index
    %c0_25 = arith.constant 0 : index
    %37 = vector.load %arg9[%c0_24, %c0_25] : memref<1x200xf32, #tpu.memory_space<vmem>>, vector<1x200xf32>
    %38 = vector.broadcast %37 : vector<1x200xf32> to vector<2x200xf32>
    %39 = arith.addf %36, %38 : vector<2x200xf32>
    %cst_26 = arith.constant 0.000000e+00 : f32
    %40 = vector.broadcast %cst_26 : f32 to vector<2x200xf32>
    %41 = arith.cmpf oge, %39, %40 : vector<2x200xf32>
    %cst_27 = arith.constant 0.00999999977 : f32
    %42 = vector.broadcast %cst_27 : f32 to vector<2x200xf32>
    %43 = arith.mulf %42, %39 : vector<2x200xf32>
    %44 = arith.select %41, %39, %43 : vector<2x200xi1>, vector<2x200xf32>
    %c0_28 = arith.constant 0 : index
    %c0_29 = arith.constant 0 : index
    %45 = vector.load %arg10[%c0_28, %c0_29] : memref<2x200xf32, #tpu.memory_space<vmem>>, vector<2x200xf32>
    tpu.vector_store %arg10[%c0_28, %c0_29], %44 {strides = array<i32>} : memref<2x200xf32, #tpu.memory_space<vmem>>, vector<2x200xf32>,
    return
  }
  func.func @transform_0(%arg0: i32) -> (i32, i32) {
    %c0_i32 = arith.constant 0 : i32
    %c0_i32_0 = arith.constant 0 : i32
    %c0_i32_1 = arith.constant 0 : i32
    return %c0_i32, %c0_i32_0 : i32, i32
  }
  func.func @transform_1(%arg0: i32) -> (i32, i32) {
    %c0_i32 = arith.constant 0 : i32
    %c0_i32_0 = arith.constant 0 : i32
    %c0_i32_1 = arith.constant 0 : i32
    return %c0_i32, %c0_i32_0 : i32, i32
  }
  func.func @transform_2(%arg0: i32) -> (i32, i32) {
    %c0_i32 = arith.constant 0 : i32
    %c0_i32_0 = arith.constant 0 : i32
    %c0_i32_1 = arith.constant 0 : i32
    return %c0_i32, %c0_i32_0 : i32, i32
  }
  func.func @transform_3(%arg0: i32) -> (i32, i32) {
    %c0_i32 = arith.constant 0 : i32
    %c0_i32_0 = arith.constant 0 : i32
    %c0_i32_1 = arith.constant 0 : i32
    return %c0_i32, %c0_i32_0 : i32, i32
  }
  func.func @transform_4(%arg0: i32) -> (i32, i32) {
    %c0_i32 = arith.constant 0 : i32
    %c0_i32_0 = arith.constant 0 : i32
    %c0_i32_1 = arith.constant 0 : i32
    return %c0_i32, %c0_i32_0 : i32, i32
  }
  func.func @transform_5(%arg0: i32) -> (i32, i32) {
    %c0_i32 = arith.constant 0 : i32
    %c0_i32_0 = arith.constant 0 : i32
    %c0_i32_1 = arith.constant 0 : i32
    return %c0_i32, %c0_i32_0 : i32, i32
  }
  func.func @transform_6(%arg0: i32) -> (i32, i32) {
    %c0_i32 = arith.constant 0 : i32
    %c0_i32_0 = arith.constant 0 : i32
    %c0_i32_1 = arith.constant 0 : i32
    return %c0_i32, %c0_i32_0 : i32, i32
  }
  func.func @transform_7(%arg0: i32) -> (i32, i32) {
    %c0_i32 = arith.constant 0 : i32
    %c0_i32_0 = arith.constant 0 : i32
    %c0_i32_1 = arith.constant 0 : i32
    return %c0_i32, %c0_i32_0 : i32, i32
  }
  func.func @transform_8(%arg0: i32) -> (i32, i32) {
    %c0_i32 = arith.constant 0 : i32
    %c0_i32_0 = arith.constant 0 : i32
    %c0_i32_1 = arith.constant 0 : i32
    return %c0_i32, %c0_i32_0 : i32, i32
  }
  func.func @transform_9(%arg0: i32) -> (i32, i32) {
    %c0_i32 = arith.constant 0 : i32
    %c0_i32_0 = arith.constant 0 : i32
    %c0_i32_1 = arith.constant 0 : i32
    return %c0_i32, %c0_i32_0 : i32, i32
  }
}

module attributes {stable_mosaic.version = 11 : i64} {
  func.func @_decoder_kernel(%arg0: i32, %arg1: memref<1x10x20xf32, #tpu.memory_space<vmem>>, %arg2: memref<20x40xbf16, #tpu.memory_space<vmem>>, %arg3: memref<1x40xf32, #tpu.memory_space<vmem>>, %arg4: memref<40x100xbf16, #tpu.memory_space<vmem>>, %arg5: memref<1x100xf32, #tpu.memory_space<vmem>>, %arg6: memref<100x200xbf16, #tpu.memory_space<vmem>>, %arg7: memref<1x200xf32, #tpu.memory_space<vmem>>, %arg8: memref<200x128xbf16, #tpu.memory_space<vmem>>, %arg9: memref<1x128xf32, #tpu.memory_space<vmem>>, %arg10: memref<128x512xbf16, #tpu.memory_space<vmem>>, %arg11: memref<1x512xf32, #tpu.memory_space<vmem>>, %arg12: memref<512x1024xbf16, #tpu.memory_space<vmem>>, %arg13: memref<1x1024xf32, #tpu.memory_space<vmem>>, %arg14: memref<1024x256xbf16, #tpu.memory_space<vmem>>, %arg15: memref<1x256xf32, #tpu.memory_space<vmem>>, %arg16: memref<1x1x256xf32, #tpu.memory_space<vmem>>) attributes {dimension_semantics = [#tpu.dimension_semantics<parallel>], iteration_bounds = array<i64: 2>, scalar_prefetch = 0 : i64, scratch_operands = 0 : i64, tpu.core_type = #tpu.core_type<tc>, window_params = [{transform_indices = @transform_0, window_bounds = array<i64: 1, 10, 20>}, {pipeline_mode = #tpu.pipeline_mode<synchronous>, transform_indices = @transform_1, window_bounds = array<i64: 20, 40>}, {pipeline_mode = #tpu.pipeline_mode<synchronous>, transform_indices = @transform_2, window_bounds = array<i64: 1, 40>}, {pipeline_mode = #tpu.pipeline_mode<synchronous>, transform_indices = @transform_3, window_bounds = array<i64: 40, 100>}, {pipeline_mode = #tpu.pipeline_mode<synchronous>, transform_indices = @transform_4, window_bounds = array<i64: 1, 100>}, {pipeline_mode = #tpu.pipeline_mode<synchronous>, transform_indices = @transform_5, window_bounds = array<i64: 100, 200>}, {pipeline_mode = #tpu.pipeline_mode<synchronous>, transform_indices = @transform_6, window_bounds = array<i64: 1, 200>}, {pipeline_mode = #tpu.pipeline_mode<synchronous>, transform_indices = @transform_7, window_bounds = array<i64: 200, 128>}, {pipeline_mode = #tpu.pipeline_mode<synchronous>, transform_indices = @transform_8, window_bounds = array<i64: 1, 128>}, {pipeline_mode = #tpu.pipeline_mode<synchronous>, transform_indices = @transform_9, window_bounds = array<i64: 128, 512>}, {pipeline_mode = #tpu.pipeline_mode<synchronous>, transform_indices = @transform_10, window_bounds = array<i64: 1, 512>}, {pipeline_mode = #tpu.pipeline_mode<synchronous>, transform_indices = @transform_11, window_bounds = array<i64: 512, 1024>}, {pipeline_mode = #tpu.pipeline_mode<synchronous>, transform_indices = @transform_12, window_bounds = array<i64: 1, 1024>}, {pipeline_mode = #tpu.pipeline_mode<synchronous>, transform_indices = @transform_13, window_bounds = array<i64: 1024, 256>}, {pipeline_mode = #tpu.pipeline_mode<synchronous>, transform_indices = @transform_14, window_bounds = array<i64: 1, 256>}, {transform_indices = @transform_15, window_bounds = array<i64: 1, 1, 256>}]} {
    %c0 = arith.constant 0 : index
    %c0_0 = arith.constant 0 : index
    %c0_1 = arith.constant 0 : index
    %0 = vector.load %arg1[%c0, %c0_0, %c0_1] : memref<1x10x20xf32, #tpu.memory_space<vmem>>, vector<1x10x20xf32>
    %1 = vector.shape_cast %0 : vector<1x10x20xf32> to vector<10x20xf32>
    %2 = arith.truncf %1 : vector<10x20xf32> to vector<10x20xbf16>
    %c0_2 = arith.constant 0 : index
    %c0_3 = arith.constant 0 : index
    %3 = vector.load %arg2[%c0_2, %c0_3] : memref<20x40xbf16, #tpu.memory_space<vmem>>, vector<20x40xbf16>
    %cst = arith.constant dense<0.000000e+00> : vector<10x40xf32>
    %4 = tpu.matmul %2, %3, %cst {dimension_numbers = #tpu.dot_dimension_numbers<[1], [0], [0], [1], [0, 0, 1, 1], [], []>} : vector<10x20xbf16>, vector<20x40xbf16>, vector<10x40xf32> -> vector<10x40xf32>
    %c0_4 = arith.constant 0 : index
    %c0_5 = arith.constant 0 : index
    %5 = vector.load %arg3[%c0_4, %c0_5] : memref<1x40xf32, #tpu.memory_space<vmem>>, vector<1x40xf32>
    %6 = vector.broadcast %5 : vector<1x40xf32> to vector<10x40xf32>
    %7 = arith.addf %4, %6 : vector<10x40xf32>
    %cst_6 = arith.constant 0.000000e+00 : f32
    %8 = vector.broadcast %cst_6 : f32 to vector<10x40xf32>
    %9 = arith.cmpf oge, %7, %8 : vector<10x40xf32>
    %cst_7 = arith.constant 0.00999999977 : f32
    %10 = vector.broadcast %cst_7 : f32 to vector<10x40xf32>
    %11 = arith.mulf %10, %7 : vector<10x40xf32>
    %12 = arith.select %9, %7, %11 : vector<10x40xi1>, vector<10x40xf32>
    %13 = arith.truncf %12 : vector<10x40xf32> to vector<10x40xbf16>
    %c0_8 = arith.constant 0 : index
    %c0_9 = arith.constant 0 : index
    %14 = vector.load %arg4[%c0_8, %c0_9] : memref<40x100xbf16, #tpu.memory_space<vmem>>, vector<40x100xbf16>
    %cst_10 = arith.constant dense<0.000000e+00> : vector<10x100xf32>
    %15 = tpu.matmul %13, %14, %cst_10 {dimension_numbers = #tpu.dot_dimension_numbers<[1], [0], [0], [1], [0, 0, 1, 1], [], []>} : vector<10x40xbf16>, vector<40x100xbf16>, vector<10x100xf32> -> vector<10x100xf32>
    %c0_11 = arith.constant 0 : index
    %c0_12 = arith.constant 0 : index
    %16 = vector.load %arg5[%c0_11, %c0_12] : memref<1x100xf32, #tpu.memory_space<vmem>>, vector<1x100xf32>
    %17 = vector.broadcast %16 : vector<1x100xf32> to vector<10x100xf32>
    %18 = arith.addf %15, %17 : vector<10x100xf32>
    %cst_13 = arith.constant 0.000000e+00 : f32
    %19 = vector.broadcast %cst_13 : f32 to vector<10x100xf32>
    %20 = arith.cmpf oge, %18, %19 : vector<10x100xf32>
    %cst_14 = arith.constant 0.00999999977 : f32
    %21 = vector.broadcast %cst_14 : f32 to vector<10x100xf32>
    %22 = arith.mulf %21, %18 : vector<10x100xf32>
    %23 = arith.select %20, %18, %22 : vector<10x100xi1>, vector<10x100xf32>
    %24 = arith.truncf %23 : vector<10x100xf32> to vector<10x100xbf16>
    %c0_15 = arith.constant 0 : index
    %c0_16 = arith.constant 0 : index
    %25 = vector.load %arg6[%c0_15, %c0_16] : memref<100x200xbf16, #tpu.memory_space<vmem>>, vector<100x200xbf16>
    %cst_17 = arith.constant dense<0.000000e+00> : vector<10x200xf32>
    %26 = tpu.matmul %24, %25, %cst_17 {dimension_numbers = #tpu.dot_dimension_numbers<[1], [0], [0], [1], [0, 0, 1, 1], [], []>} : vector<10x100xbf16>, vector<100x200xbf16>, vector<10x200xf32> -> vector<10x200xf32>
    %c0_18 = arith.constant 0 : index
    %c0_19 = arith.constant 0 : index
    %27 = vector.load %arg7[%c0_18, %c0_19] : memref<1x200xf32, #tpu.memory_space<vmem>>, vector<1x200xf32>
    %28 = vector.broadcast %27 : vector<1x200xf32> to vector<10x200xf32>
    %29 = arith.addf %26, %28 : vector<10x200xf32>
    %cst_20 = arith.constant 0.000000e+00 : f32
    %30 = vector.broadcast %cst_20 : f32 to vector<10x200xf32>
    %31 = arith.cmpf oge, %29, %30 : vector<10x200xf32>
    %cst_21 = arith.constant 0.00999999977 : f32
    %32 = vector.broadcast %cst_21 : f32 to vector<10x200xf32>
    %33 = arith.mulf %32, %29 : vector<10x200xf32>
    %34 = arith.select %31, %29, %33 : vector<10x200xi1>, vector<10x200xf32>
    %35 = arith.truncf %34 : vector<10x200xf32> to vector<10x200xbf16>
    %c0_22 = arith.constant 0 : index
    %c0_23 = arith.constant 0 : index
    %36 = vector.load %arg8[%c0_22, %c0_23] : memref<200x128xbf16, #tpu.memory_space<vmem>>, vector<200x128xbf16>
    %cst_24 = arith.constant dense<0.000000e+00> : vector<10x128xf32>
    %37 = tpu.matmul %35, %36, %cst_24 {dimension_numbers = #tpu.dot_dimension_numbers<[1], [0], [0], [1], [0, 0, 1, 1], [], []>} : vector<10x200xbf16>, vector<200x128xbf16>, vector<10x128xf32> -> vector<10x128xf32>
    %c0_25 = arith.constant 0 : index
    %c0_26 = arith.constant 0 : index
    %38 = vector.load %arg9[%c0_25, %c0_26] : memref<1x128xf32, #tpu.memory_space<vmem>>, vector<1x128xf32>
    %39 = vector.broadcast %38 : vector<1x128xf32> to vector<10x128xf32>
    %40 = arith.addf %37, %39 : vector<10x128xf32>
    %41 = arith.truncf %40 : vector<10x128xf32> to vector<10x128xbf16>
    %c0_27 = arith.constant 0 : index
    %c0_28 = arith.constant 0 : index
    %42 = vector.load %arg10[%c0_27, %c0_28] : memref<128x512xbf16, #tpu.memory_space<vmem>>, vector<128x512xbf16>
    %cst_29 = arith.constant dense<0.000000e+00> : vector<10x512xf32>
    %43 = tpu.matmul %41, %42, %cst_29 {dimension_numbers = #tpu.dot_dimension_numbers<[1], [0], [0], [1], [0, 0, 1, 1], [], []>} : vector<10x128xbf16>, vector<128x512xbf16>, vector<10x512xf32> -> vector<10x512xf32>
    %c0_30 = arith.constant 0 : index
    %c0_31 = arith.constant 0 : index
    %44 = vector.load %arg11[%c0_30, %c0_31] : memref<1x512xf32, #tpu.memory_space<vmem>>, vector<1x512xf32>
    %45 = vector.broadcast %44 : vector<1x512xf32> to vector<10x512xf32>
    %46 = arith.addf %43, %45 : vector<10x512xf32>
    %cst_32 = arith.constant 0.000000e+00 : f32
    %47 = vector.broadcast %cst_32 : f32 to vector<10x512xf32>
    %48 = arith.cmpf oge, %46, %47 : vector<10x512xf32>
    %cst_33 = arith.constant 0.00999999977 : f32
    %49 = vector.broadcast %cst_33 : f32 to vector<10x512xf32>
    %50 = arith.mulf %49, %46 : vector<10x512xf32>
    %51 = arith.select %48, %46, %50 : vector<10x512xi1>, vector<10x512xf32>
    %52 = arith.truncf %51 : vector<10x512xf32> to vector<10x512xbf16>
    %c0_34 = arith.constant 0 : index
    %c0_35 = arith.constant 0 : index
    %53 = vector.load %arg12[%c0_34, %c0_35] : memref<512x1024xbf16, #tpu.memory_space<vmem>>, vector<512x1024xbf16>
    %cst_36 = arith.constant dense<0.000000e+00> : vector<10x1024xf32>
    %54 = tpu.matmul %52, %53, %cst_36 {dimension_numbers = #tpu.dot_dimension_numbers<[1], [0], [0], [1], [0, 0, 1, 1], [], []>} : vector<10x512xbf16>, vector<512x1024xbf16>, vector<10x1024xf32> -> vector<10x1024xf32>
    %c0_37 = arith.constant 0 : index
    %c0_38 = arith.constant 0 : index
    %55 = vector.load %arg13[%c0_37, %c0_38] : memref<1x1024xf32, #tpu.memory_space<vmem>>, vector<1x1024xf32>
    %56 = vector.broadcast %55 : vector<1x1024xf32> to vector<10x1024xf32>
    %57 = arith.addf %54, %56 : vector<10x1024xf32>
    %cst_39 = arith.constant 0.000000e+00 : f32
    %58 = vector.broadcast %cst_39 : f32 to vector<10x1024xf32>
    %59 = arith.cmpf oge, %57, %58 : vector<10x1024xf32>
    %cst_40 = arith.constant 0.00999999977 : f32
    %60 = vector.broadcast %cst_40 : f32 to vector<10x1024xf32>
    %61 = arith.mulf %60, %57 : vector<10x1024xf32>
    %62 = arith.select %59, %57, %61 : vector<10x1024xi1>, vector<10x1024xf32>
    %63 = arith.truncf %62 : vector<10x1024xf32> to vector<10x1024xbf16>
    %c0_41 = arith.constant 0 : index
    %c0_42 = arith.constant 0 : index
    %64 = vector.load %arg14[%c0_41, %c0_42] : memref<1024x256xbf16, #tpu.memory_space<vmem>>, vector<1024x256xbf16>
    %cst_43 = arith.constant dense<0.000000e+00> : vector<10x256xf32>
    %65 = tpu.matmul %63, %64, %cst_43 {dimension_numbers = #tpu.dot_dimension_numbers<[1], [0], [0], [1], [0, 0, 1, 1], [], []>} : vector<10x1024xbf16>, vector<1024x256xbf16>, vector<10x256xf32> -> vector<10x256xf32>
    %c0_44 = arith.constant 0 : index
    %c0_45 = arith.constant 0 : index
    %66 = vector.load %arg15[%c0_44, %c0_45] : memref<1x256xf32, #tpu.memory_space<vmem>>, vector<1x256xf32>
    %67 = vector.broadcast %66 : vector<1x256xf32> to vector<10x256xf32>
    %68 = arith.addf %65, %67 : vector<10x256xf32>
    %cst_46 = arith.constant dense<0.000000e+00> : vector<256xf32>
    %69 = vector.multi_reduction <add>, %68, %cst_46 [0] : vector<10x256xf32> to vector<256xf32>
    %70 = vector.shape_cast %69 : vector<256xf32> to vector<1x256xf32>
    %c0_47 = arith.constant 0 : index
    %c0_48 = arith.constant 0 : index
    %c0_49 = arith.constant 0 : index
    %71 = vector.load %arg16[%c0_47, %c0_48, %c0_49] : memref<1x1x256xf32, #tpu.memory_space<vmem>>, vector<1x1x256xf32>
    %72 = vector.shape_cast %71 : vector<1x1x256xf32> to vector<1x256xf32>
    %73 = vector.shape_cast %70 : vector<1x256xf32> to vector<1x1x256xf32>
    tpu.vector_store %arg16[%c0_47, %c0_48, %c0_49], %73 {strides = array<i32>} : memref<1x1x256xf32, #tpu.memory_space<vmem>>, vector<1x1x256xf32>,
    return
  }
  func.func @transform_0(%arg0: i32) -> (i32, i32, i32) {
    %c0_i32 = arith.constant 0 : i32
    %c0_i32_0 = arith.constant 0 : i32
    %c0_i32_1 = arith.constant 0 : i32
    return %arg0, %c0_i32, %c0_i32_0 : i32, i32, i32
  }
  func.func @transform_1(%arg0: i32) -> (i32, i32) {
    %c0_i32 = arith.constant 0 : i32
    %c0_i32_0 = arith.constant 0 : i32
    %c0_i32_1 = arith.constant 0 : i32
    return %c0_i32, %c0_i32_0 : i32, i32
  }
  func.func @transform_2(%arg0: i32) -> (i32, i32) {
    %c0_i32 = arith.constant 0 : i32
    %c0_i32_0 = arith.constant 0 : i32
    %c0_i32_1 = arith.constant 0 : i32
    return %c0_i32, %c0_i32_0 : i32, i32
  }
  func.func @transform_3(%arg0: i32) -> (i32, i32) {
    %c0_i32 = arith.constant 0 : i32
    %c0_i32_0 = arith.constant 0 : i32
    %c0_i32_1 = arith.constant 0 : i32
    return %c0_i32, %c0_i32_0 : i32, i32
  }
  func.func @transform_4(%arg0: i32) -> (i32, i32) {
    %c0_i32 = arith.constant 0 : i32
    %c0_i32_0 = arith.constant 0 : i32
    %c0_i32_1 = arith.constant 0 : i32
    return %c0_i32, %c0_i32_0 : i32, i32
  }
  func.func @transform_5(%arg0: i32) -> (i32, i32) {
    %c0_i32 = arith.constant 0 : i32
    %c0_i32_0 = arith.constant 0 : i32
    %c0_i32_1 = arith.constant 0 : i32
    return %c0_i32, %c0_i32_0 : i32, i32
  }
  func.func @transform_6(%arg0: i32) -> (i32, i32) {
    %c0_i32 = arith.constant 0 : i32
    %c0_i32_0 = arith.constant 0 : i32
    %c0_i32_1 = arith.constant 0 : i32
    return %c0_i32, %c0_i32_0 : i32, i32
  }
  func.func @transform_7(%arg0: i32) -> (i32, i32) {
    %c0_i32 = arith.constant 0 : i32
    %c0_i32_0 = arith.constant 0 : i32
    %c0_i32_1 = arith.constant 0 : i32
    return %c0_i32, %c0_i32_0 : i32, i32
  }
  func.func @transform_8(%arg0: i32) -> (i32, i32) {
    %c0_i32 = arith.constant 0 : i32
    %c0_i32_0 = arith.constant 0 : i32
    %c0_i32_1 = arith.constant 0 : i32
    return %c0_i32, %c0_i32_0 : i32, i32
  }
  func.func @transform_9(%arg0: i32) -> (i32, i32) {
    %c0_i32 = arith.constant 0 : i32
    %c0_i32_0 = arith.constant 0 : i32
    %c0_i32_1 = arith.constant 0 : i32
    return %c0_i32, %c0_i32_0 : i32, i32
  }
  func.func @transform_10(%arg0: i32) -> (i32, i32) {
    %c0_i32 = arith.constant 0 : i32
    %c0_i32_0 = arith.constant 0 : i32
    %c0_i32_1 = arith.constant 0 : i32
    return %c0_i32, %c0_i32_0 : i32, i32
  }
  func.func @transform_11(%arg0: i32) -> (i32, i32) {
    %c0_i32 = arith.constant 0 : i32
    %c0_i32_0 = arith.constant 0 : i32
    %c0_i32_1 = arith.constant 0 : i32
    return %c0_i32, %c0_i32_0 : i32, i32
  }
  func.func @transform_12(%arg0: i32) -> (i32, i32) {
    %c0_i32 = arith.constant 0 : i32
    %c0_i32_0 = arith.constant 0 : i32
    %c0_i32_1 = arith.constant 0 : i32
    return %c0_i32, %c0_i32_0 : i32, i32
  }
  func.func @transform_13(%arg0: i32) -> (i32, i32) {
    %c0_i32 = arith.constant 0 : i32
    %c0_i32_0 = arith.constant 0 : i32
    %c0_i32_1 = arith.constant 0 : i32
    return %c0_i32, %c0_i32_0 : i32, i32
  }
  func.func @transform_14(%arg0: i32) -> (i32, i32) {
    %c0_i32 = arith.constant 0 : i32
    %c0_i32_0 = arith.constant 0 : i32
    %c0_i32_1 = arith.constant 0 : i32
    return %c0_i32, %c0_i32_0 : i32, i32
  }
  func.func @transform_15(%arg0: i32) -> (i32, i32, i32) {
    %c0_i32 = arith.constant 0 : i32
    %c0_i32_0 = arith.constant 0 : i32
    %c0_i32_1 = arith.constant 0 : i32
    return %arg0, %c0_i32, %c0_i32_0 : i32, i32, i32
  }
}

</mosaic_0001>

<llo_original>
// kernel: fwd.2
$region0: #{fwd.2}
  #allocation0 [shape = 'u32[]', space=smem, size = 0x4, offset = 0x4, fixed_abs, tag = 'smem constant byte address 0x4 - core index']
  #allocation1 [shape = 'u32[144,128]{1,0:T(1,128)}', space=vmem, size = 0x12000, scoped, tag = 'internal scratch']
  %s0 = inlined_call_operand.vmem [shape: f32[2,256], index: 0, kind: input, shape index: {}]
  %s1 = inlined_call_operand.vmem [shape: bf16[256,256], index: 1, kind: input, shape index: {}]
  %s2 = inlined_call_operand.vmem [shape: f32[1,256], index: 2, kind: input, shape index: {}]
  %s3 = inlined_call_operand.vmem [shape: bf16[256,128], index: 3, kind: input, shape index: {}]
  %s4 = inlined_call_operand.vmem [shape: f32[1,128], index: 4, kind: input, shape index: {}]
  %s5 = inlined_call_operand.vmem [shape: bf16[128,210], index: 5, kind: input, shape index: {}]
  %s6 = inlined_call_operand.vmem [shape: f32[1,210], index: 6, kind: input, shape index: {}]
  %s7 = inlined_call_operand.vmem [shape: bf16[210,200], index: 7, kind: input, shape index: {}]
  %s8 = inlined_call_operand.vmem [shape: f32[1,200], index: 8, kind: input, shape index: {}]
  %s9 = inlined_call_operand.vmem [shape: f32[2,200], index: 9, kind: output, shape index: {}]
  %s10 = sld [smem:[#allocation0]]
  $region46: #{fwd.2} parent=0
    _
  %s12 = ssub.s32 1, %s10
  %s13 = scalar_select 0, %s12, %s10
  // Predicated region
  $region2: #{fwd.2} parent=0 // pred_check
    _
  $region3: #{fwd.2} parent=0 // pred_check_branch
    %15 = sbr.rel (0) target = $region5
  $region4: #{fwd.2} parent=0 // pred_region
    _
  $region5: #{fwd.2} parent=0 // pred_fallthru
    _
  // Predicated region
  $region6: #{fwd.2} parent=0 // pred_check
    _
  $region7: #{fwd.2} parent=0 // pred_check_branch
    %17 = sbr.rel (0) target = $region9
  $region8: #{fwd.2} parent=0 // pred_region
    _
  $region9: #{fwd.2} parent=0 // pred_fallthru
    _
  // Predicated region
  $region10: #{fwd.2} parent=0 // pred_check
    _
  $region11: #{fwd.2} parent=0 // pred_check_branch
    %19 = sbr.rel (0) target = $region13
  $region12: #{fwd.2} parent=0 // pred_region
    _
  $region13: #{fwd.2} parent=0 // pred_fallthru
    _
  // Predicated region
  $region14: #{fwd.2} parent=0 // pred_check
    _
  $region15: #{fwd.2} parent=0 // pred_check_branch
    %21 = sbr.rel (0) target = $region17
  $region16: #{fwd.2} parent=0 // pred_region
    _
  $region17: #{fwd.2} parent=0 // pred_fallthru
    _
  // Predicated region
  $region18: #{fwd.2} parent=0 // pred_check
    _
  $region19: #{fwd.2} parent=0 // pred_check_branch
    %23 = sbr.rel (0) target = $region21
  $region20: #{fwd.2} parent=0 // pred_region
    _
  $region21: #{fwd.2} parent=0 // pred_fallthru
    _
  // Predicated region
  $region22: #{fwd.2} parent=0 // pred_check
    _
  $region23: #{fwd.2} parent=0 // pred_check_branch
    %25 = sbr.rel (0) target = $region25
  $region24: #{fwd.2} parent=0 // pred_region
    _
  $region25: #{fwd.2} parent=0 // pred_fallthru
    _
  // Predicated region
  $region26: #{fwd.2} parent=0 // pred_check
    _
  $region27: #{fwd.2} parent=0 // pred_check_branch
    %27 = sbr.rel (0) target = $region29
  $region28: #{fwd.2} parent=0 // pred_region
    _
  $region29: #{fwd.2} parent=0 // pred_fallthru
    _
  // Predicated region
  $region30: #{fwd.2} parent=0 // pred_check
    _
  $region31: #{fwd.2} parent=0 // pred_check_branch
    %29 = sbr.rel (0) target = $region33
  $region32: #{fwd.2} parent=0 // pred_region
    _
  $region33: #{fwd.2} parent=0 // pred_fallthru
    _
  // Predicated region
  $region34: #{fwd.2} parent=0 // pred_check
    _
  $region35: #{fwd.2} parent=0 // pred_check_branch
    %31 = sbr.rel (0) target = $region37
  $region36: #{fwd.2} parent=0 // pred_region
    _
  $region37: #{fwd.2} parent=0 // pred_fallthru
    _
  %v33 = vld [vmem:[%s0] sm:$0xf]
  %v36 = vunpack.c.l.s4 1983009808
  %v37 = vunpack.c.0.s8 %v36
  %v38 = vlaneseq
  %v39 = vshrl.u32 %v38, 7
  %v40 = vsub.s32 %v37, %v39
  %v41 = vrot.slane %v33, %v40
  %v42 = vcombine.high %v41, %v41
  %v45 = vpack.c.bf16 %v41, %v41
  %v46 = vpack.c.bf16 %v42, %v42
  %v47 = vld [vmem:[%s1] sm:$0xff]
  %v48 = vld [vmem:[%s1 + $0x8] sm:$0xff]
  %v49 = vld [vmem:[%s1 + $0x10] sm:$0xff]
  %v50 = vld [vmem:[%s1 + $0x18] sm:$0xff]
  %v51 = vld [vmem:[%s1 + $0x20] sm:$0xff]
  %v52 = vld [vmem:[%s1 + $0x28] sm:$0xff]
  %v53 = vld [vmem:[%s1 + $0x30] sm:$0xff]
  %v54 = vld [vmem:[%s1 + $0x38] sm:$0xff]
  %v55 = vld [vmem:[%s1 + $0x40] sm:$0xff]
  %v56 = vld [vmem:[%s1 + $0x48] sm:$0xff]
  %v57 = vld [vmem:[%s1 + $0x50] sm:$0xff]
  %v58 = vld [vmem:[%s1 + $0x58] sm:$0xff]
  %v59 = vld [vmem:[%s1 + $0x60] sm:$0xff]
  %v60 = vld [vmem:[%s1 + $0x68] sm:$0xff]
  %v61 = vld [vmem:[%s1 + $0x70] sm:$0xff]
  %v62 = vld [vmem:[%s1 + $0x78] sm:$0xff]
  %v63 = vld [vmem:[%s1 + $0x80] sm:$0xff]
  %v64 = vld [vmem:[%s1 + $0x88] sm:$0xff]
  %v65 = vld [vmem:[%s1 + $0x90] sm:$0xff]
  %v66 = vld [vmem:[%s1 + $0x98] sm:$0xff]
  %v67 = vld [vmem:[%s1 + $0xa0] sm:$0xff]
  %v68 = vld [vmem:[%s1 + $0xa8] sm:$0xff]
  %v69 = vld [vmem:[%s1 + $0xb0] sm:$0xff]
  %v70 = vld [vmem:[%s1 + $0xb8] sm:$0xff]
  %v71 = vld [vmem:[%s1 + $0xc0] sm:$0xff]
  %v72 = vld [vmem:[%s1 + $0xc8] sm:$0xff]
  %v73 = vld [vmem:[%s1 + $0xd0] sm:$0xff]
  %v74 = vld [vmem:[%s1 + $0xd8] sm:$0xff]
  %v75 = vld [vmem:[%s1 + $0xe0] sm:$0xff]
  %v76 = vld [vmem:[%s1 + $0xe8] sm:$0xff]
  %v77 = vld [vmem:[%s1 + $0xf0] sm:$0xff]
  %v78 = vld [vmem:[%s1 + $0xf8] sm:$0xff]
  %v79 = vld [vmem:[%s2] sm:$0x3]
  %v81 = vlaneseq
  %v82 = vshrl.u32 %v81, 7
  %v83 = vsub.s32 0, %v82
  %v84 = vrot.slane %v79, %v83
  %v85 = vlaneseq
  %v86 = vshrl.u32 %v85, 7
  %v87 = vsub.s32 1, %v86
  %v88 = vrot.slane %v79, %v87
  %v123 = vunpack.c.l.b16 %v47
  %v124 = vunpack.c.h.b16 %v47
  %v125 = vunpack.c.l.b16 %v48
  %v126 = vunpack.c.h.b16 %v48
  %v127 = vunpack.c.l.b16 %v49
  %v128 = vunpack.c.h.b16 %v49
  %v129 = vunpack.c.l.b16 %v50
  %v130 = vunpack.c.h.b16 %v50
  %v131 = vunpack.c.l.b16 %v51
  %v132 = vunpack.c.h.b16 %v51
  %v133 = vunpack.c.l.b16 %v52
  %v134 = vunpack.c.h.b16 %v52
  %v135 = vunpack.c.l.b16 %v53
  %v136 = vunpack.c.h.b16 %v53
  %v137 = vunpack.c.l.b16 %v54
  %v138 = vunpack.c.h.b16 %v54
  %v139 = vunpack.c.l.b16 %v55
  %v140 = vunpack.c.h.b16 %v55
  %v141 = vunpack.c.l.b16 %v56
  %v142 = vunpack.c.h.b16 %v56
  %v143 = vunpack.c.l.b16 %v57
  %v144 = vunpack.c.h.b16 %v57
  %v145 = vunpack.c.l.b16 %v58
  %v146 = vunpack.c.h.b16 %v58
  %v147 = vunpack.c.l.b16 %v59
  %v148 = vunpack.c.h.b16 %v59
  %v149 = vunpack.c.l.b16 %v60
  %v150 = vunpack.c.h.b16 %v60
  %v151 = vunpack.c.l.b16 %v61
  %v152 = vunpack.c.h.b16 %v61
  %v153 = vunpack.c.l.b16 %v62
  %v154 = vunpack.c.h.b16 %v62
  %v155 = vunpack.c.l.b16 %v63
  %v156 = vunpack.c.h.b16 %v63
  %v157 = vunpack.c.l.b16 %v64
  %v158 = vunpack.c.h.b16 %v64
  %v159 = vunpack.c.l.b16 %v65
  %v160 = vunpack.c.h.b16 %v65
  %v161 = vunpack.c.l.b16 %v66
  %v162 = vunpack.c.h.b16 %v66
  %v163 = vunpack.c.l.b16 %v67
  %v164 = vunpack.c.h.b16 %v67
  %v165 = vunpack.c.l.b16 %v68
  %v166 = vunpack.c.h.b16 %v68
  %v167 = vunpack.c.l.b16 %v69
  %v168 = vunpack.c.h.b16 %v69
  %v169 = vunpack.c.l.b16 %v70
  %v170 = vunpack.c.h.b16 %v70
  %v171 = vunpack.c.l.b16 %v71
  %v172 = vunpack.c.h.b16 %v71
  %v173 = vunpack.c.l.b16 %v72
  %v174 = vunpack.c.h.b16 %v72
  %v175 = vunpack.c.l.b16 %v73
  %v176 = vunpack.c.h.b16 %v73
  %v177 = vunpack.c.l.b16 %v74
  %v178 = vunpack.c.h.b16 %v74
  %v179 = vunpack.c.l.b16 %v75
  %v180 = vunpack.c.h.b16 %v75
  %v181 = vunpack.c.l.b16 %v76
  %v182 = vunpack.c.h.b16 %v76
  %v183 = vunpack.c.l.b16 %v77
  %v184 = vunpack.c.h.b16 %v77
  %v185 = vunpack.c.l.b16 %v78
  %v186 = vunpack.c.h.b16 %v78
  %v187 = vpack.c.b16 %v125, %v123
  %v188 = vpack.c.b16 %v126, %v124
  %v189 = vpack.c.b16 %v129, %v127
  %v190 = vpack.c.b16 %v130, %v128
  %v191 = vpack.c.b16 %v133, %v131
  %v192 = vpack.c.b16 %v134, %v132
  %v193 = vpack.c.b16 %v137, %v135
  %v194 = vpack.c.b16 %v138, %v136
  %v195 = vpack.c.b16 %v141, %v139
  %v196 = vpack.c.b16 %v142, %v140
  %v197 = vpack.c.b16 %v145, %v143
  %v198 = vpack.c.b16 %v146, %v144
  %v199 = vpack.c.b16 %v149, %v147
  %v200 = vpack.c.b16 %v150, %v148
  %v201 = vpack.c.b16 %v153, %v151
  %v202 = vpack.c.b16 %v154, %v152
  %v203 = vpack.c.b16 %v157, %v155
  %v204 = vpack.c.b16 %v158, %v156
  %v205 = vpack.c.b16 %v161, %v159
  %v206 = vpack.c.b16 %v162, %v160
  %v207 = vpack.c.b16 %v165, %v163
  %v208 = vpack.c.b16 %v166, %v164
  %v209 = vpack.c.b16 %v169, %v167
  %v210 = vpack.c.b16 %v170, %v168
  %v211 = vpack.c.b16 %v173, %v171
  %v212 = vpack.c.b16 %v174, %v172
  %v213 = vpack.c.b16 %v177, %v175
  %v214 = vpack.c.b16 %v178, %v176
  %v215 = vpack.c.b16 %v181, %v179
  %v216 = vpack.c.b16 %v182, %v180
  %v217 = vpack.c.b16 %v185, %v183
  %v218 = vpack.c.b16 %v186, %v184
  %251 = vmatprep.subr.bf16.mxu0 %v188
  %252 = vmatpush1.bf16.msra.mxu0 %v187
  %253 = vmatprep.subr.bf16.mxu0 %v190
  %254 = vmatpush1.bf16.msra.mxu0 %v189
  %255 = vmatprep.subr.bf16.mxu0 %v192
  %256 = vmatpush1.bf16.msra.mxu0 %v191
  %257 = vmatprep.subr.bf16.mxu0 %v194
  %258 = vmatpush1.bf16.msra.mxu0 %v193
  %259 = vmatprep.subr.bf16.mxu0 %v196
  %260 = vmatpush1.bf16.msra.mxu0 %v195
  %261 = vmatprep.subr.bf16.mxu0 %v198
  %262 = vmatpush1.bf16.msra.mxu0 %v197
  %263 = vmatprep.subr.bf16.mxu0 %v200
  %264 = vmatpush1.bf16.msra.mxu0 %v199
  %265 = vmatprep.subr.bf16.mxu0 %v202
  %266 = vmatpush1.bf16.msra.mxu0 %v201
  %267 = vmatprep.subr.bf16.mxu0 %v204
  %268 = vmatpush1.bf16.msra.mxu0 %v203
  %269 = vmatprep.subr.bf16.mxu0 %v206
  %270 = vmatpush1.bf16.msra.mxu0 %v205
  %271 = vmatprep.subr.bf16.mxu0 %v208
  %272 = vmatpush1.bf16.msra.mxu0 %v207
  %273 = vmatprep.subr.bf16.mxu0 %v210
  %274 = vmatpush1.bf16.msra.mxu0 %v209
  %275 = vmatprep.subr.bf16.mxu0 %v212
  %276 = vmatpush1.bf16.msra.mxu0 %v211
  %277 = vmatprep.subr.bf16.mxu0 %v214
  %278 = vmatpush1.bf16.msra.mxu0 %v213
  %279 = vmatprep.subr.bf16.mxu0 %v216
  %280 = vmatpush1.bf16.msra.mxu0 %v215
  %281 = vmatprep.subr.bf16.mxu0 %v218
  %282 = vmatpush1.bf16.msra.mxu0 %v217
  %283 = vmatprep.mubr.bf16.mxu0 %v46
  %284 = vmatmul.mubr.bf16.gmra.mrb[0].mxu0 %v45
  %v285 = vpop.f32.mrb[0].mxu0
  %v286 = vadd.f32 %v84, %v285
  %v287 = vpop.f32.mrb[0].mxu0
  %v288 = vadd.f32 %v88, %v287
  %v289 = vpop.f32.mrb[0].mxu0
  %v290 = vpop.f32.mrb[0].mxu0
  %291 = vdwg.mxu0
  %vm292 = vcmp.ge.f32.partialorder %v286, 0.0
  %vm293 = vcmp.ge.f32.partialorder %v288, 0.0
  %v294 = vmul.f32 %v286, 0.01
  %v295 = vmul.f32 %v288, 0.01
  %v296 = vsel %vm292, %v286, %v294
  %v297 = vsel %vm293, %v288, %v295
  %v298 = vpack.c.bf16 %v296, %v296
  %v299 = vpack.c.bf16 %v297, %v297
  %v300 = vld [vmem:[%s3] sm:$0xf]
  %v301 = vld [vmem:[%s3 + $0x4] sm:$0xf]
  %v302 = vld [vmem:[%s3 + $0x8] sm:$0xf]
  %v303 = vld [vmem:[%s3 + $0xc] sm:$0xf]
  %v304 = vld [vmem:[%s3 + $0x10] sm:$0xf]
  %v305 = vld [vmem:[%s3 + $0x14] sm:$0xf]
  %v306 = vld [vmem:[%s3 + $0x18] sm:$0xf]
  %v307 = vld [vmem:[%s3 + $0x1c] sm:$0xf]
  %v308 = vld [vmem:[%s3 + $0x20] sm:$0xf]
  %v309 = vld [vmem:[%s3 + $0x24] sm:$0xf]
  %v310 = vld [vmem:[%s3 + $0x28] sm:$0xf]
  %v311 = vld [vmem:[%s3 + $0x2c] sm:$0xf]
  %v312 = vld [vmem:[%s3 + $0x30] sm:$0xf]
  %v313 = vld [vmem:[%s3 + $0x34] sm:$0xf]
  %v314 = vld [vmem:[%s3 + $0x38] sm:$0xf]
  %v315 = vld [vmem:[%s3 + $0x3c] sm:$0xf]
  %v316 = vld [vmem:[%s3 + $0x40] sm:$0xf]
  %v317 = vld [vmem:[%s3 + $0x44] sm:$0xf]
  %v318 = vld [vmem:[%s3 + $0x48] sm:$0xf]
  %v319 = vld [vmem:[%s3 + $0x4c] sm:$0xf]
  %v320 = vld [vmem:[%s3 + $0x50] sm:$0xf]
  %v321 = vld [vmem:[%s3 + $0x54] sm:$0xf]
  %v322 = vld [vmem:[%s3 + $0x58] sm:$0xf]
  %v323 = vld [vmem:[%s3 + $0x5c] sm:$0xf]
  %v324 = vld [vmem:[%s3 + $0x60] sm:$0xf]
  %v325 = vld [vmem:[%s3 + $0x64] sm:$0xf]
  %v326 = vld [vmem:[%s3 + $0x68] sm:$0xf]
  %v327 = vld [vmem:[%s3 + $0x6c] sm:$0xf]
  %v328 = vld [vmem:[%s3 + $0x70] sm:$0xf]
  %v329 = vld [vmem:[%s3 + $0x74] sm:$0xf]
  %v330 = vld [vmem:[%s3 + $0x78] sm:$0xf]
  %v331 = vld [vmem:[%s3 + $0x7c] sm:$0xf]
  %v332 = vld [vmem:[%s4] sm:$0x1]
  %v334 = vlaneseq
  %v335 = vshrl.u32 %v334, 7
  %v336 = vsub.s32 0, %v335
  %v337 = vrot.slane %v332, %v336
  %v371 = vunpack.c.l.b16 %v300
  %v372 = vunpack.c.l.b16 %v301
  %v373 = vunpack.c.l.b16 %v302
  %v374 = vunpack.c.l.b16 %v303
  %v375 = vunpack.c.l.b16 %v304
  %v376 = vunpack.c.l.b16 %v305
  %v377 = vunpack.c.l.b16 %v306
  %v378 = vunpack.c.l.b16 %v307
  %v379 = vunpack.c.l.b16 %v308
  %v380 = vunpack.c.l.b16 %v309
  %v381 = vunpack.c.l.b16 %v310
  %v382 = vunpack.c.l.b16 %v311
  %v383 = vunpack.c.l.b16 %v312
  %v384 = vunpack.c.l.b16 %v313
  %v385 = vunpack.c.l.b16 %v314
  %v386 = vunpack.c.l.b16 %v315
  %v387 = vunpack.c.l.b16 %v316
  %v388 = vunpack.c.l.b16 %v317
  %v389 = vunpack.c.l.b16 %v318
  %v390 = vunpack.c.l.b16 %v319
  %v391 = vunpack.c.l.b16 %v320
  %v392 = vunpack.c.l.b16 %v321
  %v393 = vunpack.c.l.b16 %v322
  %v394 = vunpack.c.l.b16 %v323
  %v395 = vunpack.c.l.b16 %v324
  %v396 = vunpack.c.l.b16 %v325
  %v397 = vunpack.c.l.b16 %v326
  %v398 = vunpack.c.l.b16 %v327
  %v399 = vunpack.c.l.b16 %v328
  %v400 = vunpack.c.l.b16 %v329
  %v401 = vunpack.c.l.b16 %v330
  %v402 = vunpack.c.l.b16 %v331
  %v403 = vpack.c.b16 %v372, %v371
  %v404 = vpack.c.b16 %v374, %v373
  %v405 = vpack.c.b16 %v376, %v375
  %v406 = vpack.c.b16 %v378, %v377
  %v407 = vpack.c.b16 %v380, %v379
  %v408 = vpack.c.b16 %v382, %v381
  %v409 = vpack.c.b16 %v384, %v383
  %v410 = vpack.c.b16 %v386, %v385
  %v411 = vpack.c.b16 %v388, %v387
  %v412 = vpack.c.b16 %v390, %v389
  %v413 = vpack.c.b16 %v392, %v391
  %v414 = vpack.c.b16 %v394, %v393
  %v415 = vpack.c.b16 %v396, %v395
  %v416 = vpack.c.b16 %v398, %v397
  %v417 = vpack.c.b16 %v400, %v399
  %v418 = vpack.c.b16 %v402, %v401
  %435 = vmatprep.subr.bf16.mxu0 0
  %436 = vmatpush1.bf16.msra.mxu0 %v403
  %437 = vmatprep.subr.bf16.mxu0 0
  %438 = vmatpush1.bf16.msra.mxu0 %v404
  %439 = vmatprep.subr.bf16.mxu0 0
  %440 = vmatpush1.bf16.msra.mxu0 %v405
  %441 = vmatprep.subr.bf16.mxu0 0
  %442 = vmatpush1.bf16.msra.mxu0 %v406
  %443 = vmatprep.subr.bf16.mxu0 0
  %444 = vmatpush1.bf16.msra.mxu0 %v407
  %445 = vmatprep.subr.bf16.mxu0 0
  %446 = vmatpush1.bf16.msra.mxu0 %v408
  %447 = vmatprep.subr.bf16.mxu0 0
  %448 = vmatpush1.bf16.msra.mxu0 %v409
  %449 = vmatprep.subr.bf16.mxu0 0
  %450 = vmatpush1.bf16.msra.mxu0 %v410
  %451 = vmatprep.subr.bf16.mxu0 0
  %452 = vmatpush1.bf16.msra.mxu0 %v411
  %453 = vmatprep.subr.bf16.mxu0 0
  %454 = vmatpush1.bf16.msra.mxu0 %v412
  %455 = vmatprep.subr.bf16.mxu0 0
  %456 = vmatpush1.bf16.msra.mxu0 %v413
  %457 = vmatprep.subr.bf16.mxu0 0
  %458 = vmatpush1.bf16.msra.mxu0 %v414
  %459 = vmatprep.subr.bf16.mxu0 0
  %460 = vmatpush1.bf16.msra.mxu0 %v415
  %461 = vmatprep.subr.bf16.mxu0 0
  %462 = vmatpush1.bf16.msra.mxu0 %v416
  %463 = vmatprep.subr.bf16.mxu0 0
  %464 = vmatpush1.bf16.msra.mxu0 %v417
  %465 = vmatprep.subr.bf16.mxu0 0
  %466 = vmatpush1.bf16.msra.mxu0 %v418
  %467 = vmatprep.mubr.bf16.mxu0 %v299
  %468 = vmatmul.mubr.bf16.gmra.mrb[0].mxu0 %v298
  %v469 = vpop.f32.mrb[0].mxu0
  %v470 = vadd.f32 %v337, %v469
  %v471 = vpop.f32.mrb[0].mxu0
  %v472 = vpop.f32.mrb[0].mxu0
  %v473 = vpop.f32.mrb[0].mxu0
  %474 = vdwg.mxu0
  %vm475 = vcmp.ge.f32.partialorder %v470, 0.0
  %v476 = vmul.f32 %v470, 0.01
  %v477 = vsel %vm475, %v470, %v476
  %v478 = vpack.c.bf16 %v477, %v477
  %v479 = vld [vmem:[%s5] sm:$0xff]
  %v480 = vld [vmem:[%s5 + $0x8] sm:$0xff]
  %v481 = vld [vmem:[%s5 + $0x10] sm:$0xff]
  %v482 = vld [vmem:[%s5 + $0x18] sm:$0xff]
  %v483 = vld [vmem:[%s5 + $0x20] sm:$0xff]
  %v484 = vld [vmem:[%s5 + $0x28] sm:$0xff]
  %v485 = vld [vmem:[%s5 + $0x30] sm:$0xff]
  %v486 = vld [vmem:[%s5 + $0x38] sm:$0xff]
  %v487 = vld [vmem:[%s5 + $0x40] sm:$0xff]
  %v488 = vld [vmem:[%s5 + $0x48] sm:$0xff]
  %v489 = vld [vmem:[%s5 + $0x50] sm:$0xff]
  %v490 = vld [vmem:[%s5 + $0x58] sm:$0xff]
  %v491 = vld [vmem:[%s5 + $0x60] sm:$0xff]
  %v492 = vld [vmem:[%s5 + $0x68] sm:$0xff]
  %v493 = vld [vmem:[%s5 + $0x70] sm:$0xff]
  %v494 = vld [vmem:[%s5 + $0x78] sm:$0xff]
  %v495 = vld [vmem:[%s6] sm:$0x3]
  %v497 = vlaneseq
  %v498 = vshrl.u32 %v497, 7
  %v499 = vsub.s32 0, %v498
  %v500 = vrot.slane %v495, %v499
  %v501 = vlaneseq
  %v502 = vshrl.u32 %v501, 7
  %v503 = vsub.s32 1, %v502
  %v504 = vrot.slane %v495, %v503
  %v523 = vunpack.c.l.b16 %v479
  %v524 = vunpack.c.h.b16 %v479
  %v525 = vunpack.c.l.b16 %v480
  %v526 = vunpack.c.h.b16 %v480
  %v527 = vunpack.c.l.b16 %v481
  %v528 = vunpack.c.h.b16 %v481
  %v529 = vunpack.c.l.b16 %v482
  %v530 = vunpack.c.h.b16 %v482
  %v531 = vunpack.c.l.b16 %v483
  %v532 = vunpack.c.h.b16 %v483
  %v533 = vunpack.c.l.b16 %v484
  %v534 = vunpack.c.h.b16 %v484
  %v535 = vunpack.c.l.b16 %v485
  %v536 = vunpack.c.h.b16 %v485
  %v537 = vunpack.c.l.b16 %v486
  %v538 = vunpack.c.h.b16 %v486
  %v539 = vunpack.c.l.b16 %v487
  %v540 = vunpack.c.h.b16 %v487
  %v541 = vunpack.c.l.b16 %v488
  %v542 = vunpack.c.h.b16 %v488
  %v543 = vunpack.c.l.b16 %v489
  %v544 = vunpack.c.h.b16 %v489
  %v545 = vunpack.c.l.b16 %v490
  %v546 = vunpack.c.h.b16 %v490
  %v547 = vunpack.c.l.b16 %v491
  %v548 = vunpack.c.h.b16 %v491
  %v549 = vunpack.c.l.b16 %v492
  %v550 = vunpack.c.h.b16 %v492
  %v551 = vunpack.c.l.b16 %v493
  %v552 = vunpack.c.h.b16 %v493
  %v553 = vunpack.c.l.b16 %v494
  %v554 = vunpack.c.h.b16 %v494
  %v555 = vpack.c.b16 %v525, %v523
  %v556 = vpack.c.b16 %v526, %v524
  %v557 = vpack.c.b16 %v529, %v527
  %v558 = vpack.c.b16 %v530, %v528
  %v559 = vpack.c.b16 %v533, %v531
  %v560 = vpack.c.b16 %v534, %v532
  %v561 = vpack.c.b16 %v537, %v535
  %v562 = vpack.c.b16 %v538, %v536
  %v563 = vpack.c.b16 %v541, %v539
  %v564 = vpack.c.b16 %v542, %v540
  %v565 = vpack.c.b16 %v545, %v543
  %v566 = vpack.c.b16 %v546, %v544
  %v567 = vpack.c.b16 %v549, %v547
  %v568 = vpack.c.b16 %v550, %v548
  %v569 = vpack.c.b16 %v553, %v551
  %v570 = vpack.c.b16 %v554, %v552
  %587 = vmatprep.subr.bf16.mxu0 %v556
  %588 = vmatpush1.bf16.msra.mxu0 %v555
  %589 = vmatprep.subr.bf16.mxu0 %v558
  %590 = vmatpush1.bf16.msra.mxu0 %v557
  %591 = vmatprep.subr.bf16.mxu0 %v560
  %592 = vmatpush1.bf16.msra.mxu0 %v559
  %593 = vmatprep.subr.bf16.mxu0 %v562
  %594 = vmatpush1.bf16.msra.mxu0 %v561
  %595 = vmatprep.subr.bf16.mxu0 %v564
  %596 = vmatpush1.bf16.msra.mxu0 %v563
  %597 = vmatprep.subr.bf16.mxu0 %v566
  %598 = vmatpush1.bf16.msra.mxu0 %v565
  %599 = vmatprep.subr.bf16.mxu0 %v568
  %600 = vmatpush1.bf16.msra.mxu0 %v567
  %601 = vmatprep.subr.bf16.mxu0 %v570
  %602 = vmatpush1.bf16.msra.mxu0 %v569
  %603 = vmatprep.subr.bf16.mxu0 0
  %604 = vmatpush1.bf16.msra.mxu0 0
  %605 = vmatprep.subr.bf16.mxu0 0
  %606 = vmatpush1.bf16.msra.mxu0 0
  %607 = vmatprep.subr.bf16.mxu0 0
  %608 = vmatpush1.bf16.msra.mxu0 0
  %609 = vmatprep.subr.bf16.mxu0 0
  %610 = vmatpush1.bf16.msra.mxu0 0
  %611 = vmatprep.subr.bf16.mxu0 0
  %612 = vmatpush1.bf16.msra.mxu0 0
  %613 = vmatprep.subr.bf16.mxu0 0
  %614 = vmatpush1.bf16.msra.mxu0 0
  %615 = vmatprep.subr.bf16.mxu0 0
  %616 = vmatpush1.bf16.msra.mxu0 0
  %617 = vmatprep.subr.bf16.mxu0 0
  %618 = vmatpush1.bf16.msra.mxu0 0
  %619 = vmatprep.mubr.bf16.mxu0 0
  %620 = vmatmul.mubr.bf16.gmra.mrb[0].mxu0 %v478
  %v621 = vpop.f32.mrb[0].mxu0
  %v622 = vadd.f32 %v500, %v621
  %v623 = vpop.f32.mrb[0].mxu0
  %v624 = vadd.f32 %v504, %v623
  %v625 = vpop.f32.mrb[0].mxu0
  %v626 = vpop.f32.mrb[0].mxu0
  %627 = vdwg.mxu0
  %vm628 = vcmp.ge.f32.partialorder %v622, 0.0
  %vm629 = vcmp.ge.f32.partialorder %v624, 0.0
  %v630 = vmul.f32 %v622, 0.01
  %v631 = vmul.f32 %v624, 0.01
  %v632 = vsel %vm628, %v622, %v630
  %v633 = vsel %vm629, %v624, %v631
  %v634 = vpack.c.bf16 %v632, %v632
  %v635 = vpack.c.bf16 %v633, %v633
  %v636 = vld [vmem:[%s7] sm:$0xff]
  %v637 = vld [vmem:[%s7 + $0x8] sm:$0xff]
  %v638 = vld [vmem:[%s7 + $0x10] sm:$0xff]
  %v639 = vld [vmem:[%s7 + $0x18] sm:$0xff]
  %v640 = vld [vmem:[%s7 + $0x20] sm:$0xff]
  %v641 = vld [vmem:[%s7 + $0x28] sm:$0xff]
  %v642 = vld [vmem:[%s7 + $0x30] sm:$0xff]
  %v643 = vld [vmem:[%s7 + $0x38] sm:$0xff]
  %v644 = vld [vmem:[%s7 + $0x40] sm:$0xff]
  %v645 = vld [vmem:[%s7 + $0x48] sm:$0xff]
  %v646 = vld [vmem:[%s7 + $0x50] sm:$0xff]
  %v647 = vld [vmem:[%s7 + $0x58] sm:$0xff]
  %v648 = vld [vmem:[%s7 + $0x60] sm:$0xff]
  %v649 = vld [vmem:[%s7 + $0x68] sm:$0xff]
  %v650 = vld [vmem:[%s7 + $0x70] sm:$0xff]
  %v651 = vld [vmem:[%s7 + $0x78] sm:$0xff]
  %v652 = vld [vmem:[%s7 + $0x80] sm:$0xff]
  %v653 = vld [vmem:[%s7 + $0x88] sm:$0xff]
  %v654 = vld [vmem:[%s7 + $0x90] sm:$0xff]
  %v655 = vld [vmem:[%s7 + $0x98] sm:$0xff]
  %v656 = vld [vmem:[%s7 + $0xa0] sm:$0xff]
  %v657 = vld [vmem:[%s7 + $0xa8] sm:$0xff]
  %v658 = vld [vmem:[%s7 + $0xb0] sm:$0xff]
  %v659 = vld [vmem:[%s7 + $0xb8] sm:$0xff]
  %v660 = vld [vmem:[%s7 + $0xc0] sm:$0xff]
  %v661 = vld [vmem:[%s7 + $0xc8] sm:$0xff]
  %v662 = vld [vmem:[%s7 + $0xd0] sm:$0x11]
  %v663 = vld [vmem:[%s8] sm:$0x3]
  %v665 = vlaneseq
  %v666 = vshrl.u32 %v665, 7
  %v667 = vsub.s32 0, %v666
  %v668 = vrot.slane %v663, %v667
  %v669 = vlaneseq
  %v670 = vshrl.u32 %v669, 7
  %v671 = vsub.s32 1, %v670
  %v672 = vrot.slane %v663, %v671
  %v702 = vunpack.c.l.b16 %v636
  %v703 = vunpack.c.h.b16 %v636
  %v704 = vunpack.c.l.b16 %v637
  %v705 = vunpack.c.h.b16 %v637
  %v706 = vunpack.c.l.b16 %v638
  %v707 = vunpack.c.h.b16 %v638
  %v708 = vunpack.c.l.b16 %v639
  %v709 = vunpack.c.h.b16 %v639
  %v710 = vunpack.c.l.b16 %v640
  %v711 = vunpack.c.h.b16 %v640
  %v712 = vunpack.c.l.b16 %v641
  %v713 = vunpack.c.h.b16 %v641
  %v714 = vunpack.c.l.b16 %v642
  %v715 = vunpack.c.h.b16 %v642
  %v716 = vunpack.c.l.b16 %v643
  %v717 = vunpack.c.h.b16 %v643
  %v718 = vunpack.c.l.b16 %v644
  %v719 = vunpack.c.h.b16 %v644
  %v720 = vunpack.c.l.b16 %v645
  %v721 = vunpack.c.h.b16 %v645
  %v722 = vunpack.c.l.b16 %v646
  %v723 = vunpack.c.h.b16 %v646
  %v724 = vunpack.c.l.b16 %v647
  %v725 = vunpack.c.h.b16 %v647
  %v726 = vunpack.c.l.b16 %v648
  %v727 = vunpack.c.h.b16 %v648
  %v728 = vunpack.c.l.b16 %v649
  %v729 = vunpack.c.h.b16 %v649
  %v730 = vunpack.c.l.b16 %v650
  %v731 = vunpack.c.h.b16 %v650
  %v732 = vunpack.c.l.b16 %v651
  %v733 = vunpack.c.h.b16 %v651
  %v734 = vunpack.c.l.b16 %v652
  %v735 = vunpack.c.h.b16 %v652
  %v736 = vunpack.c.l.b16 %v653
  %v737 = vunpack.c.h.b16 %v653
  %v738 = vunpack.c.l.b16 %v654
  %v739 = vunpack.c.h.b16 %v654
  %v740 = vunpack.c.l.b16 %v655
  %v741 = vunpack.c.h.b16 %v655
  %v742 = vunpack.c.l.b16 %v656
  %v743 = vunpack.c.h.b16 %v656
  %v744 = vunpack.c.l.b16 %v657
  %v745 = vunpack.c.h.b16 %v657
  %v746 = vunpack.c.l.b16 %v658
  %v747 = vunpack.c.h.b16 %v658
  %v748 = vunpack.c.l.b16 %v659
  %v749 = vunpack.c.h.b16 %v659
  %v750 = vunpack.c.l.b16 %v660
  %v751 = vunpack.c.h.b16 %v660
  %v752 = vunpack.c.l.b16 %v661
  %v753 = vunpack.c.h.b16 %v661
  %v754 = vunpack.c.l.b16 %v662
  %v755 = vunpack.c.h.b16 %v662
  %v756 = vpack.c.b16 %v704, %v702
  %v757 = vpack.c.b16 %v705, %v703
  %v758 = vpack.c.b16 %v708, %v706
  %v759 = vpack.c.b16 %v709, %v707
  %v760 = vpack.c.b16 %v712, %v710
  %v761 = vpack.c.b16 %v713, %v711
  %v762 = vpack.c.b16 %v716, %v714
  %v763 = vpack.c.b16 %v717, %v715
  %v764 = vpack.c.b16 %v720, %v718
  %v765 = vpack.c.b16 %v721, %v719
  %v766 = vpack.c.b16 %v724, %v722
  %v767 = vpack.c.b16 %v725, %v723
  %v768 = vpack.c.b16 %v728, %v726
  %v769 = vpack.c.b16 %v729, %v727
  %v770 = vpack.c.b16 %v732, %v730
  %v771 = vpack.c.b16 %v733, %v731
  %v772 = vpack.c.b16 %v736, %v734
  %v773 = vpack.c.b16 %v737, %v735
  %v774 = vpack.c.b16 %v740, %v738
  %v775 = vpack.c.b16 %v741, %v739
  %v776 = vpack.c.b16 %v744, %v742
  %v777 = vpack.c.b16 %v745, %v743
  %v778 = vpack.c.b16 %v748, %v746
  %v779 = vpack.c.b16 %v749, %v747
  %v780 = vpack.c.b16 %v752, %v750
  %v781 = vpack.c.b16 %v753, %v751
  %v782 = vpack.c.b16 %v754, %v754
  %v783 = vpack.c.b16 %v755, %v755
  %vm810 = vcmask 670720
  %v812 = vsel %vm810, %v635, 0
  %vm814 = vcmask 1040384
  %v816 = vsel %vm814, %v782, 0
  %v819 = vsel %vm814, %v783, 0
  %821 = vmatprep.subr.bf16.mxu0 %v757
  %822 = vmatpush1.bf16.msra.mxu0 %v756
  %823 = vmatprep.subr.bf16.mxu0 %v759
  %824 = vmatpush1.bf16.msra.mxu0 %v758
  %825 = vmatprep.subr.bf16.mxu0 %v761
  %826 = vmatpush1.bf16.msra.mxu0 %v760
  %827 = vmatprep.subr.bf16.mxu0 %v763
  %828 = vmatpush1.bf16.msra.mxu0 %v762
  %829 = vmatprep.subr.bf16.mxu0 %v765
  %830 = vmatpush1.bf16.msra.mxu0 %v764
  %831 = vmatprep.subr.bf16.mxu0 %v767
  %832 = vmatpush1.bf16.msra.mxu0 %v766
  %833 = vmatprep.subr.bf16.mxu0 %v769
  %834 = vmatpush1.bf16.msra.mxu0 %v768
  %835 = vmatprep.subr.bf16.mxu0 %v771
  %836 = vmatpush1.bf16.msra.mxu0 %v770
  %837 = vmatprep.subr.bf16.mxu0 %v773
  %838 = vmatpush1.bf16.msra.mxu0 %v772
  %839 = vmatprep.subr.bf16.mxu0 %v775
  %840 = vmatpush1.bf16.msra.mxu0 %v774
  %841 = vmatprep.subr.bf16.mxu0 %v777
  %842 = vmatpush1.bf16.msra.mxu0 %v776
  %843 = vmatprep.subr.bf16.mxu0 %v779
  %844 = vmatpush1.bf16.msra.mxu0 %v778
  %845 = vmatprep.subr.bf16.mxu0 %v781
  %846 = vmatpush1.bf16.msra.mxu0 %v780
  %847 = vmatprep.subr.bf16.mxu0 %v819
  %848 = vmatpush1.bf16.msra.mxu0 %v816
  %849 = vmatprep.subr.bf16.mxu0 0
  %850 = vmatpush1.bf16.msra.mxu0 0
  %851 = vmatprep.subr.bf16.mxu0 0
  %852 = vmatpush1.bf16.msra.mxu0 0
  %853 = vmatprep.mubr.bf16.mxu0 %v812
  %854 = vmatmul.mubr.bf16.gmra.mrb[0].mxu0 %v634
  %v855 = vpop.f32.mrb[0].mxu0
  %v856 = vadd.f32 %v668, %v855
  %v857 = vpop.f32.mrb[0].mxu0
  %v858 = vadd.f32 %v672, %v857
  %v859 = vpop.f32.mrb[0].mxu0
  %v860 = vpop.f32.mrb[0].mxu0
  %861 = vdwg.mxu0
  %vm862 = vcmp.ge.f32.partialorder %v856, 0.0
  %vm863 = vcmp.ge.f32.partialorder %v858, 0.0
  %v864 = vmul.f32 %v856, 0.01
  %v865 = vmul.f32 %v858, 0.01
  %v866 = vsel %vm862, %v856, %v864
  %v867 = vsel %vm863, %v858, %v865
  %v870 = vcombine.low %v866, %v867
  %v872 = vunpack.c.l.s4 1983009808
  %v873 = vunpack.c.0.s8 %v872
  %v874 = vlaneseq
  %v875 = vshrl.u32 %v874, 7
  %v876 = vsub.s32 %v873, %v875
  %v877 = vrot.slane %v870, %v876
  %vm879 = vcmask 1041408
  %vm880 = vcmask 584706
  %vm881 = vmor %vm880, %vm879
  %882 = vst.msk [vmem:[%s9] sm:$0xf] %vm881, %v877
  // Predicated region
  $region38: #{fwd.2} parent=0 // pred_check
    _
  $region39: #{fwd.2} parent=0 // pred_check_branch
    %884 = sbr.rel (0) target = $region41
  $region40: #{fwd.2} parent=0 // pred_region
    _
  $region41: #{fwd.2} parent=0 // pred_fallthru
    _
  // Predicated region
  $region42: #{fwd.2} parent=0 // pred_check
    _
  $region43: #{fwd.2} parent=0 // pred_check_branch
    %886 = sbr.rel (0) target = $region45
  $region44: #{fwd.2} parent=0 // pred_region
    _
  $region45: #{fwd.2} parent=0 // pred_fallthru
    _

// kernel: fwd.3
$region0: #{fwd.3}
  #allocation0 [shape = 'u32[]', space=smem, size = 0x4, offset = 0x4, fixed_abs, tag = 'smem constant byte address 0x4 - core index']
  #allocation1 [shape = 'u32[144,128]{1,0:T(1,128)}', space=vmem, size = 0x12000, scoped, tag = 'internal scratch']
  %s0 = inlined_call_operand.vmem [shape: f32[2,10,20], index: 0, kind: input, shape index: {}]
  %s1 = inlined_call_operand.hbm [shape: bf16[20,40], index: 1, kind: input, shape index: {}]
  %s2 = inlined_call_operand.hbm [shape: f32[1,40], index: 2, kind: input, shape index: {}]
  %s3 = inlined_call_operand.hbm [shape: bf16[40,100], index: 3, kind: input, shape index: {}]
  %s4 = inlined_call_operand.hbm [shape: f32[1,100], index: 4, kind: input, shape index: {}]
  %s5 = inlined_call_operand.vmem [shape: bf16[100,200], index: 5, kind: input, shape index: {}]
  %s6 = inlined_call_operand.hbm [shape: f32[1,200], index: 6, kind: input, shape index: {}]
  %s7 = inlined_call_operand.hbm [shape: bf16[200,128], index: 7, kind: input, shape index: {}]
  %s8 = inlined_call_operand.hbm [shape: f32[1,128], index: 8, kind: input, shape index: {}]
  %s9 = inlined_call_operand.vmem [shape: bf16[128,512], index: 9, kind: input, shape index: {}]
  %s10 = inlined_call_operand.vmem [shape: f32[1,512], index: 10, kind: input, shape index: {}]
  %s11 = inlined_call_operand.hbm [shape: bf16[512,1024], index: 11, kind: input, shape index: {}]
  %s12 = inlined_call_operand.vmem [shape: f32[1,1024], index: 12, kind: input, shape index: {}]
  %s13 = inlined_call_operand.vmem [shape: bf16[1024,256], index: 13, kind: input, shape index: {}]
  %s14 = inlined_call_operand.hbm [shape: f32[1,256], index: 14, kind: input, shape index: {}]
  %s15 = inlined_call_operand.vmem [shape: f32[2,1,256], index: 15, kind: output, shape index: {}]
  %s16 = sld [smem:[#allocation0]]
  $region129: #{fwd.3} parent=0
    _
  %s18 = ssub.s32 1, %s16
  %s19 = scalar_select 0, %s18, %s16
  $region1: #{fwd.3} parent=0
    #allocation2 [shape = 'u8[6144]{0}', space=vmem, size = 0x1800, scoped, tag = 'input window, operand 1, single buffered']
    #allocation3 [shape = 's32[2]{0}', space=sflag, size = 0x8, scoped, tag = 'scoped memory for fwd.3']
    #allocation4 [shape = 'u8[512]{0}', space=vmem, size = 0x400, scoped, tag = 'input window, operand 2, single buffered']
    #allocation5 [shape = 's32[1]{0}', space=sflag, size = 0x4, scoped, tag = 'scoped memory for fwd.3']
    #allocation6 [shape = 'u8[10240]{0}', space=vmem, size = 0x2800, scoped, tag = 'input window, operand 3, single buffered']
    #allocation7 [shape = 'u8[512]{0}', space=vmem, size = 0x400, scoped, tag = 'input window, operand 4, single buffered']
    #allocation8 [shape = 's32[1]{0}', space=sflag, size = 0x4, scoped, tag = 'scoped memory for fwd.3']
    #allocation9 [shape = 'u8[1024]{0}', space=vmem, size = 0x400, scoped, tag = 'input window, operand 6, single buffered']
    #allocation10 [shape = 'u8[51200]{0}', space=vmem, size = 0xc800, scoped, tag = 'input window, operand 7, single buffered']
    #allocation11 [shape = 's32[1]{0}', space=sflag, size = 0x4, scoped, tag = 'scoped memory for fwd.3']
    #allocation12 [shape = 'u8[512]{0}', space=vmem, size = 0x400, scoped, tag = 'input window, operand 8, single buffered']
    #allocation13 [shape = 'u8[1048576]{0}', space=vmem, size = 0x100000, scoped, tag = 'input window, operand 11, single buffered']
    #allocation14 [shape = 's32[1]{0}', space=sflag, size = 0x4, scoped, tag = 'scoped memory for fwd.3']
    #allocation15 [shape = 'u8[1024]{0}', space=vmem, size = 0x400, scoped, tag = 'input window, operand 14, single buffered']
    %20 = vsyncpa [#allocation3], 0
    %21 = vsyncpa [#allocation5], 0
    %22 = vsyncpa [#allocation8], 0
    %23 = vsyncpa [#allocation11], 0
    %24 = vsyncpa [#allocation14], 0
    loop: start=0, step=1, limit=4
    $region2: #{fwd.3} parent=1 // loop_pre_header
      _
    $region3: #{fwd.3} parent=1 // loop_header
      %s26 = sphi 0, %s30
      %p27 = scmp.ge.s32.totalorder %s26, 4
      %s36 = sphi 0, %s38
      %s39 = sphi 0, %s36
      %s40 = sphi 0, %s39
      %s56 = sphi 0, %s40
      %s60 = sphi 0, %s60
      %s62 = sphi 0, %s60
      %s63 = sphi 0, %s62
      %s77 = sphi 0, %s63
      %s81 = sphi 0, %s81
      %s83 = sphi 0, %s81
      %s84 = sphi 0, %s83
      %s98 = sphi 0, %s84
      %s102 = sphi 0, %s102
      %s104 = sphi 0, %s102
      %s105 = sphi 0, %s104
      %s119 = sphi 0, %s105
      %s123 = sphi 0, %s123
      %s125 = sphi 0, %s123
      %s126 = sphi 0, %s125
      %s140 = sphi 0, %s126
      %s144 = sphi 0, %s144
      %s146 = sphi 0, %s144
      %s147 = sphi 0, %s146
      %s161 = sphi 0, %s147
      %s165 = sphi 0, %s165
      %s167 = sphi 0, %s165
      %s168 = sphi 0, %s167
      %s182 = sphi 0, %s168
      %s186 = sphi 0, %s186
      %s188 = sphi 0, %s186
      %s189 = sphi 0, %s188
      %s203 = sphi 0, %s189
      %s207 = sphi 0, %s207
      %s209 = sphi 0, %s207
      %s210 = sphi 0, %s209
      %s224 = sphi 0, %s210
      %s228 = sphi 0, %s228
      %s230 = sphi 0, %s228
      %s231 = sphi 0, %s230
      %s245 = sphi 0, %s231
      %s249 = sphi 0, %s249
      %s251 = sphi 0, %s249
      %s252 = sphi 0, %s251
      %s266 = sphi 0, %s252
      %s270 = sphi 0, %s270
      %s272 = sphi 0, %s270
      %s273 = sphi 0, %s272
      %s287 = sphi 0, %s273
      %s291 = sphi 0, %s291
      %s293 = sphi 0, %s291
      %s294 = sphi 0, %s293
      %s308 = sphi 0, %s294
      %s312 = sphi 0, %s312
      %s314 = sphi 0, %s312
      %s315 = sphi 0, %s314
      %s329 = sphi 0, %s315
      %s333 = sphi 0, %s333
      %s335 = sphi 0, %s333
      %s336 = sphi 0, %s335
      %s350 = sphi 0, %s336
      %s356 = sphi 0, %s358
      %s359 = sphi 0, %s356
      %s360 = sphi 0, %s359
      %s376 = sphi 0, %s360
    $region4: #{fwd.3} parent=1 // loop_header_branch
      %29 = sbr.rel (%p27) target = $region8
    $region5: #{fwd.3} parent=1 // loop_body
      %s31 = ssub.s32 %s26, 1
      %s32 = ssub.s32 %s26, 2
      %s33 = sadd.s32 %s26, 1
      %s34 = ssub.s32 %s26, %s33
      %p35 = scmp.eq.s32.totalorder %s34, 0
      %s37 = sadd.s32 %s36, 1
      %s38 = scalar_select %p35, %s36, %s37
      %p41 = pneg %p35
      %p42 = scmp.eq.s32.totalorder %s26, 1
      %p43 = por %p41, %p42
      %p44 = scmp.ne.s32.totalorder %s36, %s39
      %p45 = scmp.eq.s32.totalorder %s26, 0
      %p46 = por %p44, %p45
      %p47 = scmp.ne.s32.totalorder %s36, %s39
      %p48 = scmp.eq.s32.totalorder %s31, 1
      %p49 = por %p47, %p48
      %p50 = scmp.ne.s32.totalorder %s39, %s40
      %p51 = scmp.eq.s32.totalorder %s31, 0
      %p52 = por %p50, %p51
      %p53 = scmp.ne.s32.totalorder %s39, %s40
      %p54 = scmp.eq.s32.totalorder %s32, 1
      %p55 = por %p53, %p54
      %p57 = scmp.ne.s32.totalorder %s40, %s56
      %p58 = scmp.eq.s32.totalorder %s32, 0
      %p59 = por %p57, %p58
      %s61 = sadd.s32 %s60, 1
      %p64 = scmp.eq.s32.totalorder %s26, 1
      %p65 = scmp.ne.s32.totalorder %s60, %s62
      %p66 = scmp.eq.s32.totalorder %s26, 0
      %p67 = por %p65, %p66
      %p68 = scmp.ne.s32.totalorder %s60, %s62
      %p69 = scmp.eq.s32.totalorder %s31, 1
      %p70 = por %p68, %p69
      %p71 = scmp.ne.s32.totalorder %s62, %s63
      %p72 = scmp.eq.s32.totalorder %s31, 0
      %p73 = por %p71, %p72
      %p74 = scmp.ne.s32.totalorder %s62, %s63
      %p75 = scmp.eq.s32.totalorder %s32, 1
      %p76 = por %p74, %p75
      %p78 = scmp.ne.s32.totalorder %s63, %s77
      %p79 = scmp.eq.s32.totalorder %s32, 0
      %p80 = por %p78, %p79
      %s82 = sadd.s32 %s81, 1
      %p85 = scmp.eq.s32.totalorder %s26, 1
      %p86 = scmp.ne.s32.totalorder %s81, %s83
      %p87 = scmp.eq.s32.totalorder %s26, 0
      %p88 = por %p86, %p87
      %p89 = scmp.ne.s32.totalorder %s81, %s83
      %p90 = scmp.eq.s32.totalorder %s31, 1
      %p91 = por %p89, %p90
      %p92 = scmp.ne.s32.totalorder %s83, %s84
      %p93 = scmp.eq.s32.totalorder %s31, 0
      %p94 = por %p92, %p93
      %p95 = scmp.ne.s32.totalorder %s83, %s84
      %p96 = scmp.eq.s32.totalorder %s32, 1
      %p97 = por %p95, %p96
      %p99 = scmp.ne.s32.totalorder %s84, %s98
      %p100 = scmp.eq.s32.totalorder %s32, 0
      %p101 = por %p99, %p100
      %s103 = sadd.s32 %s102, 1
      %p106 = scmp.eq.s32.totalorder %s26, 1
      %p107 = scmp.ne.s32.totalorder %s102, %s104
      %p108 = scmp.eq.s32.totalorder %s26, 0
      %p109 = por %p107, %p108
      %p110 = scmp.ne.s32.totalorder %s102, %s104
      %p111 = scmp.eq.s32.totalorder %s31, 1
      %p112 = por %p110, %p111
      %p113 = scmp.ne.s32.totalorder %s104, %s105
      %p114 = scmp.eq.s32.totalorder %s31, 0
      %p115 = por %p113, %p114
      %p116 = scmp.ne.s32.totalorder %s104, %s105
      %p117 = scmp.eq.s32.totalorder %s32, 1
      %p118 = por %p116, %p117
      %p120 = scmp.ne.s32.totalorder %s105, %s119
      %p121 = scmp.eq.s32.totalorder %s32, 0
      %p122 = por %p120, %p121
      %s124 = sadd.s32 %s123, 1
      %p127 = scmp.eq.s32.totalorder %s26, 1
      %p128 = scmp.ne.s32.totalorder %s123, %s125
      %p129 = scmp.eq.s32.totalorder %s26, 0
      %p130 = por %p128, %p129
      %p131 = scmp.ne.s32.totalorder %s123, %s125
      %p132 = scmp.eq.s32.totalorder %s31, 1
      %p133 = por %p131, %p132
      %p134 = scmp.ne.s32.totalorder %s125, %s126
      %p135 = scmp.eq.s32.totalorder %s31, 0
      %p136 = por %p134, %p135
      %p137 = scmp.ne.s32.totalorder %s125, %s126
      %p138 = scmp.eq.s32.totalorder %s32, 1
      %p139 = por %p137, %p138
      %p141 = scmp.ne.s32.totalorder %s126, %s140
      %p142 = scmp.eq.s32.totalorder %s32, 0
      %p143 = por %p141, %p142
      %s145 = sadd.s32 %s144, 1
      %p148 = scmp.eq.s32.totalorder %s26, 1
      %p149 = scmp.ne.s32.totalorder %s144, %s146
      %p150 = scmp.eq.s32.totalorder %s26, 0
      %p151 = por %p149, %p150
      %p152 = scmp.ne.s32.totalorder %s144, %s146
      %p153 = scmp.eq.s32.totalorder %s31, 1
      %p154 = por %p152, %p153
      %p155 = scmp.ne.s32.totalorder %s146, %s147
      %p156 = scmp.eq.s32.totalorder %s31, 0
      %p157 = por %p155, %p156
      %p158 = scmp.ne.s32.totalorder %s146, %s147
      %p159 = scmp.eq.s32.totalorder %s32, 1
      %p160 = por %p158, %p159
      %p162 = scmp.ne.s32.totalorder %s147, %s161
      %p163 = scmp.eq.s32.totalorder %s32, 0
      %p164 = por %p162, %p163
      %s166 = sadd.s32 %s165, 1
      %p169 = scmp.eq.s32.totalorder %s26, 1
      %p170 = scmp.ne.s32.totalorder %s165, %s167
      %p171 = scmp.eq.s32.totalorder %s26, 0
      %p172 = por %p170, %p171
      %p173 = scmp.ne.s32.totalorder %s165, %s167
      %p174 = scmp.eq.s32.totalorder %s31, 1
      %p175 = por %p173, %p174
      %p176 = scmp.ne.s32.totalorder %s167, %s168
      %p177 = scmp.eq.s32.totalorder %s31, 0
      %p178 = por %p176, %p177
      %p179 = scmp.ne.s32.totalorder %s167, %s168
      %p180 = scmp.eq.s32.totalorder %s32, 1
      %p181 = por %p179, %p180
      %p183 = scmp.ne.s32.totalorder %s168, %s182
      %p184 = scmp.eq.s32.totalorder %s32, 0
      %p185 = por %p183, %p184
      %s187 = sadd.s32 %s186, 1
      %p190 = scmp.eq.s32.totalorder %s26, 1
      %p191 = scmp.ne.s32.totalorder %s186, %s188
      %p192 = scmp.eq.s32.totalorder %s26, 0
      %p193 = por %p191, %p192
      %p194 = scmp.ne.s32.totalorder %s186, %s188
      %p195 = scmp.eq.s32.totalorder %s31, 1
      %p196 = por %p194, %p195
      %p197 = scmp.ne.s32.totalorder %s188, %s189
      %p198 = scmp.eq.s32.totalorder %s31, 0
      %p199 = por %p197, %p198
      %p200 = scmp.ne.s32.totalorder %s188, %s189
      %p201 = scmp.eq.s32.totalorder %s32, 1
      %p202 = por %p200, %p201
      %p204 = scmp.ne.s32.totalorder %s189, %s203
      %p205 = scmp.eq.s32.totalorder %s32, 0
      %p206 = por %p204, %p205
      %s208 = sadd.s32 %s207, 1
      %p211 = scmp.eq.s32.totalorder %s26, 1
      %p212 = scmp.ne.s32.totalorder %s207, %s209
      %p213 = scmp.eq.s32.totalorder %s26, 0
      %p214 = por %p212, %p213
      %p215 = scmp.ne.s32.totalorder %s207, %s209
      %p216 = scmp.eq.s32.totalorder %s31, 1
      %p217 = por %p215, %p216
      %p218 = scmp.ne.s32.totalorder %s209, %s210
      %p219 = scmp.eq.s32.totalorder %s31, 0
      %p220 = por %p218, %p219
      %p221 = scmp.ne.s32.totalorder %s209, %s210
      %p222 = scmp.eq.s32.totalorder %s32, 1
      %p223 = por %p221, %p222
      %p225 = scmp.ne.s32.totalorder %s210, %s224
      %p226 = scmp.eq.s32.totalorder %s32, 0
      %p227 = por %p225, %p226
      %s229 = sadd.s32 %s228, 1
      %p232 = scmp.eq.s32.totalorder %s26, 1
      %p233 = scmp.ne.s32.totalorder %s228, %s230
      %p234 = scmp.eq.s32.totalorder %s26, 0
      %p235 = por %p233, %p234
      %p236 = scmp.ne.s32.totalorder %s228, %s230
      %p237 = scmp.eq.s32.totalorder %s31, 1
      %p238 = por %p236, %p237
      %p239 = scmp.ne.s32.totalorder %s230, %s231
      %p240 = scmp.eq.s32.totalorder %s31, 0
      %p241 = por %p239, %p240
      %p242 = scmp.ne.s32.totalorder %s230, %s231
      %p243 = scmp.eq.s32.totalorder %s32, 1
      %p244 = por %p242, %p243
      %p246 = scmp.ne.s32.totalorder %s231, %s245
      %p247 = scmp.eq.s32.totalorder %s32, 0
      %p248 = por %p246, %p247
      %s250 = sadd.s32 %s249, 1
      %p253 = scmp.eq.s32.totalorder %s26, 1
      %p254 = scmp.ne.s32.totalorder %s249, %s251
      %p255 = scmp.eq.s32.totalorder %s26, 0
      %p256 = por %p254, %p255
      %p257 = scmp.ne.s32.totalorder %s249, %s251
      %p258 = scmp.eq.s32.totalorder %s31, 1
      %p259 = por %p257, %p258
      %p260 = scmp.ne.s32.totalorder %s251, %s252
      %p261 = scmp.eq.s32.totalorder %s31, 0
      %p262 = por %p260, %p261
      %p263 = scmp.ne.s32.totalorder %s251, %s252
      %p264 = scmp.eq.s32.totalorder %s32, 1
      %p265 = por %p263, %p264
      %p267 = scmp.ne.s32.totalorder %s252, %s266
      %p268 = scmp.eq.s32.totalorder %s32, 0
      %p269 = por %p267, %p268
      %s271 = sadd.s32 %s270, 1
      %p274 = scmp.eq.s32.totalorder %s26, 1
      %p275 = scmp.ne.s32.totalorder %s270, %s272
      %p276 = scmp.eq.s32.totalorder %s26, 0
      %p277 = por %p275, %p276
      %p278 = scmp.ne.s32.totalorder %s270, %s272
      %p279 = scmp.eq.s32.totalorder %s31, 1
      %p280 = por %p278, %p279
      %p281 = scmp.ne.s32.totalorder %s272, %s273
      %p282 = scmp.eq.s32.totalorder %s31, 0
      %p283 = por %p281, %p282
      %p284 = scmp.ne.s32.totalorder %s272, %s273
      %p285 = scmp.eq.s32.totalorder %s32, 1
      %p286 = por %p284, %p285
      %p288 = scmp.ne.s32.totalorder %s273, %s287
      %p289 = scmp.eq.s32.totalorder %s32, 0
      %p290 = por %p288, %p289
      %s292 = sadd.s32 %s291, 1
      %p295 = scmp.eq.s32.totalorder %s26, 1
      %p296 = scmp.ne.s32.totalorder %s291, %s293
      %p297 = scmp.eq.s32.totalorder %s26, 0
      %p298 = por %p296, %p297
      %p299 = scmp.ne.s32.totalorder %s291, %s293
      %p300 = scmp.eq.s32.totalorder %s31, 1
      %p301 = por %p299, %p300
      %p302 = scmp.ne.s32.totalorder %s293, %s294
      %p303 = scmp.eq.s32.totalorder %s31, 0
      %p304 = por %p302, %p303
      %p305 = scmp.ne.s32.totalorder %s293, %s294
      %p306 = scmp.eq.s32.totalorder %s32, 1
      %p307 = por %p305, %p306
      %p309 = scmp.ne.s32.totalorder %s294, %s308
      %p310 = scmp.eq.s32.totalorder %s32, 0
      %p311 = por %p309, %p310
      %s313 = sadd.s32 %s312, 1
      %p316 = scmp.eq.s32.totalorder %s26, 1
      %p317 = scmp.ne.s32.totalorder %s312, %s314
      %p318 = scmp.eq.s32.totalorder %s26, 0
      %p319 = por %p317, %p318
      %p320 = scmp.ne.s32.totalorder %s312, %s314
      %p321 = scmp.eq.s32.totalorder %s31, 1
      %p322 = por %p320, %p321
      %p323 = scmp.ne.s32.totalorder %s314, %s315
      %p324 = scmp.eq.s32.totalorder %s31, 0
      %p325 = por %p323, %p324
      %p326 = scmp.ne.s32.totalorder %s314, %s315
      %p327 = scmp.eq.s32.totalorder %s32, 1
      %p328 = por %p326, %p327
      %p330 = scmp.ne.s32.totalorder %s315, %s329
      %p331 = scmp.eq.s32.totalorder %s32, 0
      %p332 = por %p330, %p331
      %s334 = sadd.s32 %s333, 1
      %p337 = scmp.eq.s32.totalorder %s26, 1
      %p338 = scmp.ne.s32.totalorder %s333, %s335
      %p339 = scmp.eq.s32.totalorder %s26, 0
      %p340 = por %p338, %p339
      %p341 = scmp.ne.s32.totalorder %s333, %s335
      %p342 = scmp.eq.s32.totalorder %s31, 1
      %p343 = por %p341, %p342
      %p344 = scmp.ne.s32.totalorder %s335, %s336
      %p345 = scmp.eq.s32.totalorder %s31, 0
      %p346 = por %p344, %p345
      %p347 = scmp.ne.s32.totalorder %s335, %s336
      %p348 = scmp.eq.s32.totalorder %s32, 1
      %p349 = por %p347, %p348
      %p351 = scmp.ne.s32.totalorder %s336, %s350
      %p352 = scmp.eq.s32.totalorder %s32, 0
      %p353 = por %p351, %p352
      %s354 = ssub.s32 %s26, %s33
      %p355 = scmp.eq.s32.totalorder %s354, 0
      %s357 = sadd.s32 %s356, 1
      %s358 = scalar_select %p355, %s356, %s357
      %p361 = pneg %p355
      %p362 = scmp.eq.s32.totalorder %s26, 1
      %p363 = por %p361, %p362
      %p364 = scmp.ne.s32.totalorder %s356, %s359
      %p365 = scmp.eq.s32.totalorder %s26, 0
      %p366 = por %p364, %p365
      %p367 = scmp.ne.s32.totalorder %s356, %s359
      %p368 = scmp.eq.s32.totalorder %s31, 1
      %p369 = por %p367, %p368
      %p370 = scmp.ne.s32.totalorder %s359, %s360
      %p371 = scmp.eq.s32.totalorder %s31, 0
      %p372 = por %p370, %p371
      %p373 = scmp.ne.s32.totalorder %s359, %s360
      %p374 = scmp.eq.s32.totalorder %s32, 1
      %p375 = por %p373, %p374
      %p377 = scmp.ne.s32.totalorder %s360, %s376
      %p378 = scmp.eq.s32.totalorder %s32, 0
      %p379 = por %p377, %p378
      %p380 = scmp.le.s32.totalorder 1, %s26
      %p381 = scmp.lt.s32.totalorder %s26, 3
      %p382 = pnand %p380, %p381
      %p383 = pneg %p382
      // Predicated region
      $region9: #{fwd.3} parent=5 // pred_check
        _
      $region10: #{fwd.3} parent=5 // pred_check_branch
        %385 = sbr.rel (%p382) target = $region12
      $region11: #{fwd.3} parent=5 // pred_region
        %s386 = ssub.s32 %s26, 1
        // Predicated region
        $region13: #{fwd.3} parent=11 // pred_check
          %p387 = pneg %p73
        $region14: #{fwd.3} parent=11 // pred_check_branch
          %389 = sbr.rel (%p387) target = $region16
        $region15: #{fwd.3} parent=11 // pred_region
          %s391 = ssub.s32 192, 192
          %392 = vsyncadd [#allocation3], %s391
          %s393 = sshll.u32 [#allocation2], 4
          %s394 = int_to_ptr.vmem [resolvable:$true] %s393
          %399 = dma.hbm_to_vmem [thread:$0]  %s1, 192, %s394, [#allocation3], 64, 64, 4
        $region16: #{fwd.3} parent=11 // pred_fallthru
          _
        // Predicated region
        $region17: #{fwd.3} parent=11 // pred_check
          %p400 = pneg %p94
        $region18: #{fwd.3} parent=11 // pred_check_branch
          %402 = sbr.rel (%p400) target = $region20
        $region19: #{fwd.3} parent=11 // pred_region
          %s404 = ssub.s32 16, 16
          %405 = vsyncadd [#allocation5], %s404
          %s407 = sshll.u32 [#allocation4], 4
          %s408 = int_to_ptr.vmem [resolvable:$true] %s407
          %410 = dma.hbm_to_vmem [thread:$0]  %s2, 16, %s408, [#allocation5]
        $region20: #{fwd.3} parent=11 // pred_fallthru
          _
        // Predicated region
        $region21: #{fwd.3} parent=11 // pred_check
          %p411 = pneg %p115
        $region22: #{fwd.3} parent=11 // pred_check_branch
          %413 = sbr.rel (%p411) target = $region24
        $region23: #{fwd.3} parent=11 // pred_region
          %s415 = ssub.s32 320, 320
          %416 = vsyncadd [#allocation5], %s415
          %s417 = sshll.u32 [#allocation6], 4
          %s418 = int_to_ptr.vmem [resolvable:$true] %s417
          %423 = dma.hbm_to_vmem [thread:$0]  %s3, 320, %s418, [#allocation5], 64, 64, 4
        $region24: #{fwd.3} parent=11 // pred_fallthru
          _
        // Predicated region
        $region25: #{fwd.3} parent=11 // pred_check
          %p424 = pneg %p136
        $region26: #{fwd.3} parent=11 // pred_check_branch
          %426 = sbr.rel (%p424) target = $region28
        $region27: #{fwd.3} parent=11 // pred_region
          %s428 = ssub.s32 16, 16
          %429 = vsyncadd [#allocation8], %s428
          %s431 = sshll.u32 [#allocation7], 4
          %s432 = int_to_ptr.vmem [resolvable:$true] %s431
          %434 = dma.hbm_to_vmem [thread:$0]  %s4, 16, %s432, [#allocation8]
        $region28: #{fwd.3} parent=11 // pred_fallthru
          _
        // Predicated region
        $region29: #{fwd.3} parent=11 // pred_check
          %p435 = pneg %p157
        $region30: #{fwd.3} parent=11 // pred_check_branch
          %437 = sbr.rel (%p435) target = $region32
        $region31: #{fwd.3} parent=11 // pred_region
          _
        $region32: #{fwd.3} parent=11 // pred_fallthru
          _
        // Predicated region
        $region33: #{fwd.3} parent=11 // pred_check
          %p438 = pneg %p178
        $region34: #{fwd.3} parent=11 // pred_check_branch
          %440 = sbr.rel (%p438) target = $region36
        $region35: #{fwd.3} parent=11 // pred_region
          %s442 = ssub.s32 32, 32
          %443 = vsyncadd [#allocation8], %s442
          %s445 = sshll.u32 [#allocation9], 4
          %s446 = int_to_ptr.vmem [resolvable:$true] %s445
          %448 = dma.hbm_to_vmem [thread:$0]  %s6, 32, %s446, [#allocation8]
        $region36: #{fwd.3} parent=11 // pred_fallthru
          _
        // Predicated region
        $region37: #{fwd.3} parent=11 // pred_check
          %p449 = pneg %p199
        $region38: #{fwd.3} parent=11 // pred_check_branch
          %451 = sbr.rel (%p449) target = $region40
        $region39: #{fwd.3} parent=11 // pred_region
          %s453 = ssub.s32 1600, 1600
          %454 = vsyncadd [#allocation11], %s453
          %s455 = sshll.u32 [#allocation10], 4
          %s456 = int_to_ptr.vmem [resolvable:$true] %s455
          %461 = dma.hbm_to_vmem [thread:$0]  %s7, 1600, %s456, [#allocation11], 64, 64, 4
        $region40: #{fwd.3} parent=11 // pred_fallthru
          _
        // Predicated region
        $region41: #{fwd.3} parent=11 // pred_check
          %p462 = pneg %p220
        $region42: #{fwd.3} parent=11 // pred_check_branch
          %464 = sbr.rel (%p462) target = $region44
        $region43: #{fwd.3} parent=11 // pred_region
          %s466 = ssub.s32 16, 16
          %467 = vsyncadd [#allocation11], %s466
          %s469 = sshll.u32 [#allocation12], 4
          %s470 = int_to_ptr.vmem [resolvable:$true] %s469
          %472 = dma.hbm_to_vmem [thread:$0]  %s8, 16, %s470, [#allocation11]
        $region44: #{fwd.3} parent=11 // pred_fallthru
          _
        // Predicated region
        $region45: #{fwd.3} parent=11 // pred_check
          %p473 = pneg %p241
        $region46: #{fwd.3} parent=11 // pred_check_branch
          %475 = sbr.rel (%p473) target = $region48
        $region47: #{fwd.3} parent=11 // pred_region
          _
        $region48: #{fwd.3} parent=11 // pred_fallthru
          _
        // Predicated region
        $region49: #{fwd.3} parent=11 // pred_check
          %p476 = pneg %p262
        $region50: #{fwd.3} parent=11 // pred_check_branch
          %478 = sbr.rel (%p476) target = $region52
        $region51: #{fwd.3} parent=11 // pred_region
          _
        $region52: #{fwd.3} parent=11 // pred_fallthru
          _
        // Predicated region
        $region53: #{fwd.3} parent=11 // pred_check
          %p479 = pneg %p283
        $region54: #{fwd.3} parent=11 // pred_check_branch
          %481 = sbr.rel (%p479) target = $region56
        $region55: #{fwd.3} parent=11 // pred_region
          %s483 = ssub.s32 32768, 32768
          %484 = vsyncadd [#allocation14], %s483
          %s485 = sshll.u32 [#allocation13], 4
          %s486 = int_to_ptr.vmem [resolvable:$true] %s485
          %491 = dma.hbm_to_vmem [thread:$0]  %s11, 32768, %s486, [#allocation14], 512, 512, 32
        $region56: #{fwd.3} parent=11 // pred_fallthru
          _
        // Predicated region
        $region57: #{fwd.3} parent=11 // pred_check
          %p492 = pneg %p304
        $region58: #{fwd.3} parent=11 // pred_check_branch
          %494 = sbr.rel (%p492) target = $region60
        $region59: #{fwd.3} parent=11 // pred_region
          _
        $region60: #{fwd.3} parent=11 // pred_fallthru
          _
        // Predicated region
        $region61: #{fwd.3} parent=11 // pred_check
          %p495 = pneg %p325
        $region62: #{fwd.3} parent=11 // pred_check_branch
          %497 = sbr.rel (%p495) target = $region64
        $region63: #{fwd.3} parent=11 // pred_region
          _
        $region64: #{fwd.3} parent=11 // pred_fallthru
          _
        // Predicated region
        $region65: #{fwd.3} parent=11 // pred_check
          %p498 = pneg %p346
        $region66: #{fwd.3} parent=11 // pred_check_branch
          %500 = sbr.rel (%p498) target = $region68
        $region67: #{fwd.3} parent=11 // pred_region
          %s502 = ssub.s32 32, 32
          %503 = vsyncadd [#allocation14], %s502
          %s505 = sshll.u32 [#allocation15], 4
          %s506 = int_to_ptr.vmem [resolvable:$true] %s505
          %508 = dma.hbm_to_vmem [thread:$0]  %s14, 32, %s506, [#allocation14]
        $region68: #{fwd.3} parent=11 // pred_fallthru
          _
      $region12: #{fwd.3} parent=5 // pred_fallthru
        _
      %p509 = scmp.lt.s32.totalorder %s26, 2
      // Predicated region
      $region69: #{fwd.3} parent=5 // pred_check
        %p510 = pneg %p509
      $region70: #{fwd.3} parent=5 // pred_check_branch
        %512 = sbr.rel (%p510) target = $region72
      $region71: #{fwd.3} parent=5 // pred_region
        // Predicated region
        $region73: #{fwd.3} parent=71 // pred_check
          %p513 = pneg %p46
        $region74: #{fwd.3} parent=71 // pred_check_branch
          %515 = sbr.rel (%p513) target = $region76
        $region75: #{fwd.3} parent=71 // pred_region
          %p516 = scmp.lt.s32.totalorder %s26, 1
          %s517 = scalar_select %p516, %s26, 1
          %s518 = smul.addr %s517, 2
          %s519 = smul.addr %s518, 8
          %s520 = scalar_lea.vmem %s0, %s519
        $region76: #{fwd.3} parent=71 // pred_fallthru
          _
      $region72: #{fwd.3} parent=5 // pred_fallthru
        _
      %p521 = scmp.le.s32.totalorder 1, %s26
      %p522 = scmp.lt.s32.totalorder %s26, 3
      %p523 = pnand %p521, %p522
      %p524 = pneg %p523
      // Predicated region
      $region77: #{fwd.3} parent=5 // pred_check
        _
      $region78: #{fwd.3} parent=5 // pred_check_branch
        %526 = sbr.rel (%p523) target = $region80
      $region79: #{fwd.3} parent=5 // pred_region
        %s527 = ssub.s32 %s26, 1
        // Predicated region
        $region81: #{fwd.3} parent=79 // pred_check
          %p528 = pneg %p73
        $region82: #{fwd.3} parent=79 // pred_check_branch
          %530 = sbr.rel (%p528) target = $region84
        $region83: #{fwd.3} parent=79 // pred_region
          %531 = dma.done [#allocation3], 192
        $region84: #{fwd.3} parent=79 // pred_fallthru
          _
        // Predicated region
        $region85: #{fwd.3} parent=79 // pred_check
          %p532 = pneg %p94
        $region86: #{fwd.3} parent=79 // pred_check_branch
          %534 = sbr.rel (%p532) target = $region88
        $region87: #{fwd.3} parent=79 // pred_region
          %535 = dma.done [#allocation5], 16
        $region88: #{fwd.3} parent=79 // pred_fallthru
          _
        // Predicated region
        $region89: #{fwd.3} parent=79 // pred_check
          %p536 = pneg %p115
        $region90: #{fwd.3} parent=79 // pred_check_branch
          %538 = sbr.rel (%p536) target = $region92
        $region91: #{fwd.3} parent=79 // pred_region
          %539 = dma.done [#allocation5], 320
        $region92: #{fwd.3} parent=79 // pred_fallthru
          _
        // Predicated region
        $region93: #{fwd.3} parent=79 // pred_check
          %p540 = pneg %p136
        $region94: #{fwd.3} parent=79 // pred_check_branch
          %542 = sbr.rel (%p540) target = $region96
        $region95: #{fwd.3} parent=79 // pred_region
          %543 = dma.done [#allocation8], 16
        $region96: #{fwd.3} parent=79 // pred_fallthru
          _
        // Predicated region
        $region97: #{fwd.3} parent=79 // pred_check
          %p544 = pneg %p178
        $region98: #{fwd.3} parent=79 // pred_check_branch
          %546 = sbr.rel (%p544) target = $region100
        $region99: #{fwd.3} parent=79 // pred_region
          %547 = dma.done [#allocation8], 32
        $region100: #{fwd.3} parent=79 // pred_fallthru
          _
        // Predicated region
        $region101: #{fwd.3} parent=79 // pred_check
          %p548 = pneg %p199
        $region102: #{fwd.3} parent=79 // pred_check_branch
          %550 = sbr.rel (%p548) target = $region104
        $region103: #{fwd.3} parent=79 // pred_region
          %551 = dma.done [#allocation11], 1600
        $region104: #{fwd.3} parent=79 // pred_fallthru
          _
        // Predicated region
        $region105: #{fwd.3} parent=79 // pred_check
          %p552 = pneg %p220
        $region106: #{fwd.3} parent=79 // pred_check_branch
          %554 = sbr.rel (%p552) target = $region108
        $region107: #{fwd.3} parent=79 // pred_region
          %555 = dma.done [#allocation11], 16
        $region108: #{fwd.3} parent=79 // pred_fallthru
          _
        // Predicated region
        $region109: #{fwd.3} parent=79 // pred_check
          %p556 = pneg %p283
        $region110: #{fwd.3} parent=79 // pred_check_branch
          %558 = sbr.rel (%p556) target = $region112
        $region111: #{fwd.3} parent=79 // pred_region
          %559 = dma.done [#allocation14], 32768
        $region112: #{fwd.3} parent=79 // pred_fallthru
          _
        // Predicated region
        $region113: #{fwd.3} parent=79 // pred_check
          %p560 = pneg %p346
        $region114: #{fwd.3} parent=79 // pred_check_branch
          %562 = sbr.rel (%p560) target = $region116
        $region115: #{fwd.3} parent=79 // pred_region
          %563 = dma.done [#allocation14], 32
        $region116: #{fwd.3} parent=79 // pred_fallthru
          _
        %p564 = scmp.lt.s32.totalorder %s31, 1
        %s565 = scalar_select %p564, %s31, 1
        %s566 = smul.addr %s565, 2
        %s567 = smul.addr %s566, 8
        %s568 = scalar_lea.vmem %s0, %s567
        %p569 = pneg %p52
        %p570 = pneg %p49
        %p571 = pneg %p73
        %p572 = pneg %p70
        %p573 = pneg %p94
        %p574 = pneg %p91
        %p575 = pneg %p115
        %p576 = pneg %p112
        %p577 = pneg %p136
        %p578 = pneg %p133
        %p579 = pneg %p157
        %p580 = pneg %p154
        %p581 = pneg %p178
        %p582 = pneg %p175
        %p583 = pneg %p199
        %p584 = pneg %p196
        %p585 = pneg %p220
        %p586 = pneg %p217
        %p587 = pneg %p241
        %p588 = pneg %p238
        %p589 = pneg %p262
        %p590 = pneg %p259
        %p591 = pneg %p283
        %p592 = pneg %p280
        %p593 = pneg %p304
        %p594 = pneg %p301
        %p595 = pneg %p325
        %p596 = pneg %p322
        %p597 = pneg %p346
        %p598 = pneg %p343
        %p599 = pneg %p372
        %p600 = pneg %p369
        %p601 = scmp.lt.s32.totalorder %s31, 1
        %s602 = scalar_select %p601, %s31, 1
        %s603 = smul.addr %s602, 2
        %s604 = scalar_lea.vmem %s15, %s603
        %p605 = scmp.lt.s32.totalorder %s31, 1
        %s606 = scalar_select %p605, %s31, 1
        %s607 = smul.addr %s606, 2
        %s608 = smul.addr %s607, 8
        %s609 = scalar_lea.vmem %s0, %s608
        %p610 = scmp.lt.s32.totalorder %s31, 1
        %s611 = scalar_select %p610, %s31, 1
        %s612 = smul.addr %s611, 2
        %s613 = scalar_lea.vmem %s15, %s612
        %v615 = vld [vmem:[%s609] sm:$0xff]
        %v616 = vld [vmem:[%s609 + $0x8] sm:$0x3]
        %v617 = vpack.c.bf16 %v616, %v615
        %v618 = vld [vmem:[#allocation2] sm:$0xf]
        %v619 = vld [vmem:[#allocation2 + $0x4] sm:$0xf]
        %v620 = vld [vmem:[#allocation2 + $0x8] sm:$0x3]
        %v621 = vld [vmem:[#allocation4] sm:$0x1]
        %v623 = vlaneseq
        %v624 = vshrl.u32 %v623, 7
        %v625 = vsub.s32 0, %v624
        %v626 = vrot.slane %v621, %v625
        %v631 = vunpack.c.l.b16 %v618
        %v632 = vunpack.c.l.b16 %v619
        %v633 = vunpack.c.l.b16 %v620
        %v634 = vpack.c.b16 %v632, %v631
        %v635 = vpack.c.b16 %v633, %v633
        %vm637 = vcmask 162816
        %v639 = vsel %vm637, %v617, 0
        %vm641 = vcmask 1041408
        %v643 = vsel %vm641, %v635, 0
        %645 = vmatprep.subr.bf16.mxu0 0
        %646 = vmatpush1.bf16.msra.mxu0 %v634
        %647 = vmatprep.subr.bf16.mxu0 0
        %648 = vmatpush1.bf16.msra.mxu0 %v643
        %649 = vmatprep.subr.bf16.mxu0 0
        %650 = vmatpush1.bf16.msra.mxu0 0
        %651 = vmatprep.subr.bf16.mxu0 0
        %652 = vmatpush1.bf16.msra.mxu0 0
        %653 = vmatprep.subr.bf16.mxu0 0
        %654 = vmatpush1.bf16.msra.mxu0 0
        %655 = vmatprep.subr.bf16.mxu0 0
        %656 = vmatpush1.bf16.msra.mxu0 0
        %657 = vmatprep.subr.bf16.mxu0 0
        %658 = vmatpush1.bf16.msra.mxu0 0
        %659 = vmatprep.subr.bf16.mxu0 0
        %660 = vmatpush1.bf16.msra.mxu0 0
        %661 = vmatprep.subr.bf16.mxu0 0
        %662 = vmatpush1.bf16.msra.mxu0 0
        %663 = vmatprep.subr.bf16.mxu0 0
        %664 = vmatpush1.bf16.msra.mxu0 0
        %665 = vmatprep.subr.bf16.mxu0 0
        %666 = vmatpush1.bf16.msra.mxu0 0
        %667 = vmatprep.subr.bf16.mxu0 0
        %668 = vmatpush1.bf16.msra.mxu0 0
        %669 = vmatprep.subr.bf16.mxu0 0
        %670 = vmatpush1.bf16.msra.mxu0 0
        %671 = vmatprep.subr.bf16.mxu0 0
        %672 = vmatpush1.bf16.msra.mxu0 0
        %673 = vmatprep.subr.bf16.mxu0 0
        %674 = vmatpush1.bf16.msra.mxu0 0
        %675 = vmatprep.subr.bf16.mxu0 0
        %676 = vmatpush1.bf16.msra.mxu0 0
        %677 = vmatprep.mubr.bf16.mxu0 0
        %678 = vmatmul.mubr.bf16.gmra.mrb[0].mxu0 %v639
        %v679 = vpop.f32.mrb[0].mxu0
        %v680 = vadd.f32 %v626, %v679
        %v681 = vpop.f32.mrb[0].mxu0
        %v682 = vpop.f32.mrb[0].mxu0
        %v683 = vadd.f32 %v626, %v682
        %v684 = vpop.f32.mrb[0].mxu0
        %685 = vdwg.mxu0
        %vm686 = vcmp.ge.f32.partialorder %v680, 0.0
        %vm687 = vcmp.ge.f32.partialorder %v683, 0.0
        %v688 = vmul.f32 %v680, 0.01
        %v689 = vmul.f32 %v683, 0.01
        %v690 = vsel %vm686, %v680, %v688
        %v691 = vsel %vm687, %v683, %v689
        %v692 = vpack.c.bf16 %v691, %v690
        %v693 = vld [vmem:[#allocation6] sm:$0xf]
        %v694 = vld [vmem:[#allocation6 + $0x4] sm:$0xf]
        %v695 = vld [vmem:[#allocation6 + $0x8] sm:$0xf]
        %v696 = vld [vmem:[#allocation6 + $0xc] sm:$0xf]
        %v697 = vld [vmem:[#allocation6 + $0x10] sm:$0xf]
        %v698 = vld [vmem:[#allocation7] sm:$0x1]
        %v700 = vlaneseq
        %v701 = vshrl.u32 %v700, 7
        %v702 = vsub.s32 0, %v701
        %v703 = vrot.slane %v698, %v702
        %v710 = vunpack.c.l.b16 %v693
        %v711 = vunpack.c.l.b16 %v694
        %v712 = vunpack.c.l.b16 %v695
        %v713 = vunpack.c.l.b16 %v696
        %v714 = vunpack.c.l.b16 %v697
        %v715 = vpack.c.b16 %v711, %v710
        %v716 = vpack.c.b16 %v713, %v712
        %v717 = vpack.c.b16 %v714, %v714
        %vm720 = vcmask 326656
        %v722 = vsel %vm720, %v692, 0
        %vm724 = vcmask 1043456
        %v726 = vsel %vm724, %v717, 0
        %728 = vmatprep.subr.bf16.mxu0 0
        %729 = vmatpush1.bf16.msra.mxu0 %v715
        %730 = vmatprep.subr.bf16.mxu0 0
        %731 = vmatpush1.bf16.msra.mxu0 %v716
        %732 = vmatprep.subr.bf16.mxu0 0
        %733 = vmatpush1.bf16.msra.mxu0 %v726
        %734 = vmatprep.subr.bf16.mxu0 0
        %735 = vmatpush1.bf16.msra.mxu0 0
        %736 = vmatprep.subr.bf16.mxu0 0
        %737 = vmatpush1.bf16.msra.mxu0 0
        %738 = vmatprep.subr.bf16.mxu0 0
        %739 = vmatpush1.bf16.msra.mxu0 0
        %740 = vmatprep.subr.bf16.mxu0 0
        %741 = vmatpush1.bf16.msra.mxu0 0
        %742 = vmatprep.subr.bf16.mxu0 0
        %743 = vmatpush1.bf16.msra.mxu0 0
        %744 = vmatprep.subr.bf16.mxu0 0
        %745 = vmatpush1.bf16.msra.mxu0 0
        %746 = vmatprep.subr.bf16.mxu0 0
        %747 = vmatpush1.bf16.msra.mxu0 0
        %748 = vmatprep.subr.bf16.mxu0 0
        %749 = vmatpush1.bf16.msra.mxu0 0
        %750 = vmatprep.subr.bf16.mxu0 0
        %751 = vmatpush1.bf16.msra.mxu0 0
        %752 = vmatprep.subr.bf16.mxu0 0
        %753 = vmatpush1.bf16.msra.mxu0 0
        %754 = vmatprep.subr.bf16.mxu0 0
        %755 = vmatpush1.bf16.msra.mxu0 0
        %756 = vmatprep.subr.bf16.mxu0 0
        %757 = vmatpush1.bf16.msra.mxu0 0
        %758 = vmatprep.subr.bf16.mxu0 0
        %759 = vmatpush1.bf16.msra.mxu0 0
        %760 = vmatprep.mubr.bf16.mxu0 0
        %761 = vmatmul.mubr.bf16.gmra.mrb[0].mxu0 %v722
        %v762 = vpop.f32.mrb[0].mxu0
        %v763 = vadd.f32 %v703, %v762
        %v764 = vpop.f32.mrb[0].mxu0
        %v765 = vpop.f32.mrb[0].mxu0
        %v766 = vadd.f32 %v703, %v765
        %v767 = vpop.f32.mrb[0].mxu0
        %768 = vdwg.mxu0
        %vm769 = vcmp.ge.f32.partialorder %v763, 0.0
        %vm770 = vcmp.ge.f32.partialorder %v766, 0.0
        %v771 = vmul.f32 %v763, 0.01
        %v772 = vmul.f32 %v766, 0.01
        %v773 = vsel %vm769, %v763, %v771
        %v774 = vsel %vm770, %v766, %v772
        %v775 = vpack.c.bf16 %v774, %v773
        %v776 = vld [vmem:[%s5] sm:$0xff]
        %v777 = vld [vmem:[%s5 + $0x8] sm:$0xff]
        %v778 = vld [vmem:[%s5 + $0x10] sm:$0xff]
        %v779 = vld [vmem:[%s5 + $0x18] sm:$0xff]
        %v780 = vld [vmem:[%s5 + $0x20] sm:$0xff]
        %v781 = vld [vmem:[%s5 + $0x28] sm:$0xff]
        %v782 = vld [vmem:[%s5 + $0x30] sm:$0xff]
        %v783 = vld [vmem:[%s5 + $0x38] sm:$0xff]
        %v784 = vld [vmem:[%s5 + $0x40] sm:$0xff]
        %v785 = vld [vmem:[%s5 + $0x48] sm:$0xff]
        %v786 = vld [vmem:[%s5 + $0x50] sm:$0xff]
        %v787 = vld [vmem:[%s5 + $0x58] sm:$0xff]
        %v788 = vld [vmem:[%s5 + $0x60] sm:$0x33]
        %v789 = vld [vmem:[#allocation9] sm:$0x3]
        %v791 = vlaneseq
        %v792 = vshrl.u32 %v791, 7
        %v793 = vsub.s32 0, %v792
        %v794 = vrot.slane %v789, %v793
        %v795 = vlaneseq
        %v796 = vshrl.u32 %v795, 7
        %v797 = vsub.s32 1, %v796
        %v798 = vrot.slane %v789, %v797
        %v814 = vunpack.c.l.b16 %v776
        %v815 = vunpack.c.h.b16 %v776
        %v816 = vunpack.c.l.b16 %v777
        %v817 = vunpack.c.h.b16 %v777
        %v818 = vunpack.c.l.b16 %v778
        %v819 = vunpack.c.h.b16 %v778
        %v820 = vunpack.c.l.b16 %v779
        %v821 = vunpack.c.h.b16 %v779
        %v822 = vunpack.c.l.b16 %v780
        %v823 = vunpack.c.h.b16 %v780
        %v824 = vunpack.c.l.b16 %v781
        %v825 = vunpack.c.h.b16 %v781
        %v826 = vunpack.c.l.b16 %v782
        %v827 = vunpack.c.h.b16 %v782
        %v828 = vunpack.c.l.b16 %v783
        %v829 = vunpack.c.h.b16 %v783
        %v830 = vunpack.c.l.b16 %v784
        %v831 = vunpack.c.h.b16 %v784
        %v832 = vunpack.c.l.b16 %v785
        %v833 = vunpack.c.h.b16 %v785
        %v834 = vunpack.c.l.b16 %v786
        %v835 = vunpack.c.h.b16 %v786
        %v836 = vunpack.c.l.b16 %v787
        %v837 = vunpack.c.h.b16 %v787
        %v838 = vunpack.c.l.b16 %v788
        %v839 = vunpack.c.h.b16 %v788
        %v840 = vpack.c.b16 %v816, %v814
        %v841 = vpack.c.b16 %v817, %v815
        %v842 = vpack.c.b16 %v820, %v818
        %v843 = vpack.c.b16 %v821, %v819
        %v844 = vpack.c.b16 %v824, %v822
        %v845 = vpack.c.b16 %v825, %v823
        %v846 = vpack.c.b16 %v828, %v826
        %v847 = vpack.c.b16 %v829, %v827
        %v848 = vpack.c.b16 %v832, %v830
        %v849 = vpack.c.b16 %v833, %v831
        %v850 = vpack.c.b16 %v836, %v834
        %v851 = vpack.c.b16 %v837, %v835
        %v852 = vpack.c.b16 %v838, %v838
        %v853 = vpack.c.b16 %v839, %v839
        %vm866 = vcmask 818176
        %v868 = vsel %vm866, %v775, 0
        %v871 = vsel %vm641, %v852, 0
        %v874 = vsel %vm641, %v853, 0
        %876 = vmatprep.subr.bf16.mxu0 %v841
        %877 = vmatpush1.bf16.msra.mxu0 %v840
        %878 = vmatprep.subr.bf16.mxu0 %v843
        %879 = vmatpush1.bf16.msra.mxu0 %v842
        %880 = vmatprep.subr.bf16.mxu0 %v845
        %881 = vmatpush1.bf16.msra.mxu0 %v844
        %882 = vmatprep.subr.bf16.mxu0 %v847
        %883 = vmatpush1.bf16.msra.mxu0 %v846
        %884 = vmatprep.subr.bf16.mxu0 %v849
        %885 = vmatpush1.bf16.msra.mxu0 %v848
        %886 = vmatprep.subr.bf16.mxu0 %v851
        %887 = vmatpush1.bf16.msra.mxu0 %v850
        %888 = vmatprep.subr.bf16.mxu0 %v874
        %889 = vmatpush1.bf16.msra.mxu0 %v871
        %890 = vmatprep.subr.bf16.mxu0 0
        %891 = vmatpush1.bf16.msra.mxu0 0
        %892 = vmatprep.subr.bf16.mxu0 0
        %893 = vmatpush1.bf16.msra.mxu0 0
        %894 = vmatprep.subr.bf16.mxu0 0
        %895 = vmatpush1.bf16.msra.mxu0 0
        %896 = vmatprep.subr.bf16.mxu0 0
        %897 = vmatpush1.bf16.msra.mxu0 0
        %898 = vmatprep.subr.bf16.mxu0 0
        %899 = vmatpush1.bf16.msra.mxu0 0
        %900 = vmatprep.subr.bf16.mxu0 0
        %901 = vmatpush1.bf16.msra.mxu0 0
        %902 = vmatprep.subr.bf16.mxu0 0
        %903 = vmatpush1.bf16.msra.mxu0 0
        %904 = vmatprep.subr.bf16.mxu0 0
        %905 = vmatpush1.bf16.msra.mxu0 0
        %906 = vmatprep.subr.bf16.mxu0 0
        %907 = vmatpush1.bf16.msra.mxu0 0
        %908 = vmatprep.mubr.bf16.mxu0 0
        %909 = vmatmul.mubr.bf16.gmra.mrb[0].mxu0 %v868
        %v910 = vpop.f32.mrb[0].mxu0
        %v911 = vadd.f32 %v794, %v910
        %v912 = vpop.f32.mrb[0].mxu0
        %v913 = vadd.f32 %v798, %v912
        %v914 = vpop.f32.mrb[0].mxu0
        %v915 = vadd.f32 %v794, %v914
        %v916 = vpop.f32.mrb[0].mxu0
        %v917 = vadd.f32 %v798, %v916
        %918 = vdwg.mxu0
        %vm919 = vcmp.ge.f32.partialorder %v911, 0.0
        %vm920 = vcmp.ge.f32.partialorder %v913, 0.0
        %vm921 = vcmp.ge.f32.partialorder %v915, 0.0
        %vm922 = vcmp.ge.f32.partialorder %v917, 0.0
        %v923 = vmul.f32 %v911, 0.01
        %v924 = vmul.f32 %v913, 0.01
        %v925 = vmul.f32 %v915, 0.01
        %v926 = vmul.f32 %v917, 0.01
        %v927 = vsel %vm919, %v911, %v923
        %v928 = vsel %vm920, %v913, %v924
        %v929 = vsel %vm921, %v915, %v925
        %v930 = vsel %vm922, %v917, %v926
        %v931 = vpack.c.bf16 %v929, %v927
        %v932 = vpack.c.bf16 %v930, %v928
        %v933 = vld [vmem:[#allocation10] sm:$0xf]
        %v934 = vld [vmem:[#allocation10 + $0x4] sm:$0xf]
        %v935 = vld [vmem:[#allocation10 + $0x8] sm:$0xf]
        %v936 = vld [vmem:[#allocation10 + $0xc] sm:$0xf]
        %v937 = vld [vmem:[#allocation10 + $0x10] sm:$0xf]
        %v938 = vld [vmem:[#allocation10 + $0x14] sm:$0xf]
        %v939 = vld [vmem:[#allocation10 + $0x18] sm:$0xf]
        %v940 = vld [vmem:[#allocation10 + $0x1c] sm:$0xf]
        %v941 = vld [vmem:[#allocation10 + $0x20] sm:$0xf]
        %v942 = vld [vmem:[#allocation10 + $0x24] sm:$0xf]
        %v943 = vld [vmem:[#allocation10 + $0x28] sm:$0xf]
        %v944 = vld [vmem:[#allocation10 + $0x2c] sm:$0xf]
        %v945 = vld [vmem:[#allocation10 + $0x30] sm:$0xf]
        %v946 = vld [vmem:[#allocation10 + $0x34] sm:$0xf]
        %v947 = vld [vmem:[#allocation10 + $0x38] sm:$0xf]
        %v948 = vld [vmem:[#allocation10 + $0x3c] sm:$0xf]
        %v949 = vld [vmem:[#allocation10 + $0x40] sm:$0xf]
        %v950 = vld [vmem:[#allocation10 + $0x44] sm:$0xf]
        %v951 = vld [vmem:[#allocation10 + $0x48] sm:$0xf]
        %v952 = vld [vmem:[#allocation10 + $0x4c] sm:$0xf]
        %v953 = vld [vmem:[#allocation10 + $0x50] sm:$0xf]
        %v954 = vld [vmem:[#allocation10 + $0x54] sm:$0xf]
        %v955 = vld [vmem:[#allocation10 + $0x58] sm:$0xf]
        %v956 = vld [vmem:[#allocation10 + $0x5c] sm:$0xf]
        %v957 = vld [vmem:[#allocation10 + $0x60] sm:$0xf]
        %v958 = vld [vmem:[#allocation12] sm:$0x1]
        %v960 = vlaneseq
        %v961 = vshrl.u32 %v960, 7
        %v962 = vsub.s32 0, %v961
        %v963 = vrot.slane %v958, %v962
        %v990 = vunpack.c.l.b16 %v933
        %v991 = vunpack.c.l.b16 %v934
        %v992 = vunpack.c.l.b16 %v935
        %v993 = vunpack.c.l.b16 %v936
        %v994 = vunpack.c.l.b16 %v937
        %v995 = vunpack.c.l.b16 %v938
        %v996 = vunpack.c.l.b16 %v939
        %v997 = vunpack.c.l.b16 %v940
        %v998 = vunpack.c.l.b16 %v941
        %v999 = vunpack.c.l.b16 %v942
        %v1000 = vunpack.c.l.b16 %v943
        %v1001 = vunpack.c.l.b16 %v944
        %v1002 = vunpack.c.l.b16 %v945
        %v1003 = vunpack.c.l.b16 %v946
        %v1004 = vunpack.c.l.b16 %v947
        %v1005 = vunpack.c.l.b16 %v948
        %v1006 = vunpack.c.l.b16 %v949
        %v1007 = vunpack.c.l.b16 %v950
        %v1008 = vunpack.c.l.b16 %v951
        %v1009 = vunpack.c.l.b16 %v952
        %v1010 = vunpack.c.l.b16 %v953
        %v1011 = vunpack.c.l.b16 %v954
        %v1012 = vunpack.c.l.b16 %v955
        %v1013 = vunpack.c.l.b16 %v956
        %v1014 = vunpack.c.l.b16 %v957
        %v1015 = vpack.c.b16 %v991, %v990
        %v1016 = vpack.c.b16 %v993, %v992
        %v1017 = vpack.c.b16 %v995, %v994
        %v1018 = vpack.c.b16 %v997, %v996
        %v1019 = vpack.c.b16 %v999, %v998
        %v1020 = vpack.c.b16 %v1001, %v1000
        %v1021 = vpack.c.b16 %v1003, %v1002
        %v1022 = vpack.c.b16 %v1005, %v1004
        %v1023 = vpack.c.b16 %v1007, %v1006
        %v1024 = vpack.c.b16 %v1009, %v1008
        %v1025 = vpack.c.b16 %v1011, %v1010
        %v1026 = vpack.c.b16 %v1013, %v1012
        %v1027 = vpack.c.b16 %v1014, %v1014
        %vm1040 = vcmask 588800
        %v1042 = vsel %vm1040, %v932, 0
        %v1045 = vsel %vm724, %v1027, 0
        %1047 = vmatprep.subr.bf16.mxu0 0
        %1048 = vmatpush1.bf16.msra.mxu0 %v1015
        %1049 = vmatprep.subr.bf16.mxu0 0
        %1050 = vmatpush1.bf16.msra.mxu0 %v1016
        %1051 = vmatprep.subr.bf16.mxu0 0
        %1052 = vmatpush1.bf16.msra.mxu0 %v1017
        %1053 = vmatprep.subr.bf16.mxu0 0
        %1054 = vmatpush1.bf16.msra.mxu0 %v1018
        %1055 = vmatprep.subr.bf16.mxu0 0
        %1056 = vmatpush1.bf16.msra.mxu0 %v1019
        %1057 = vmatprep.subr.bf16.mxu0 0
        %1058 = vmatpush1.bf16.msra.mxu0 %v1020
        %1059 = vmatprep.subr.bf16.mxu0 0
        %1060 = vmatpush1.bf16.msra.mxu0 %v1021
        %1061 = vmatprep.subr.bf16.mxu0 0
        %1062 = vmatpush1.bf16.msra.mxu0 %v1022
        %1063 = vmatprep.subr.bf16.mxu0 0
        %1064 = vmatpush1.bf16.msra.mxu0 %v1023
        %1065 = vmatprep.subr.bf16.mxu0 0
        %1066 = vmatpush1.bf16.msra.mxu0 %v1024
        %1067 = vmatprep.subr.bf16.mxu0 0
        %1068 = vmatpush1.bf16.msra.mxu0 %v1025
        %1069 = vmatprep.subr.bf16.mxu0 0
        %1070 = vmatpush1.bf16.msra.mxu0 %v1026
        %1071 = vmatprep.subr.bf16.mxu0 0
        %1072 = vmatpush1.bf16.msra.mxu0 %v1045
        %1073 = vmatprep.subr.bf16.mxu0 0
        %1074 = vmatpush1.bf16.msra.mxu0 0
        %1075 = vmatprep.subr.bf16.mxu0 0
        %1076 = vmatpush1.bf16.msra.mxu0 0
        %1077 = vmatprep.subr.bf16.mxu0 0
        %1078 = vmatpush1.bf16.msra.mxu0 0
        %1079 = vmatprep.mubr.bf16.mxu0 %v1042
        %1080 = vmatmul.mubr.bf16.gmra.mrb[0].mxu0 %v931
        %v1081 = vpop.f32.mrb[0].mxu0
        %v1082 = vadd.f32 %v963, %v1081
        %v1083 = vpop.f32.mrb[0].mxu0
        %v1084 = vpop.f32.mrb[0].mxu0
        %v1085 = vadd.f32 %v963, %v1084
        %v1086 = vpop.f32.mrb[0].mxu0
        %1087 = vdwg.mxu0
        %v1088 = vpack.c.bf16 %v1085, %v1082
        %v1089 = vld [vmem:[%s9] sm:$0xff]
        %v1090 = vld [vmem:[%s9 + $0x8] sm:$0xff]
        %v1091 = vld [vmem:[%s9 + $0x10] sm:$0xff]
        %v1092 = vld [vmem:[%s9 + $0x18] sm:$0xff]
        %v1093 = vld [vmem:[%s9 + $0x20] sm:$0xff]
        %v1094 = vld [vmem:[%s9 + $0x28] sm:$0xff]
        %v1095 = vld [vmem:[%s9 + $0x30] sm:$0xff]
        %v1096 = vld [vmem:[%s9 + $0x38] sm:$0xff]
        %v1097 = vld [vmem:[%s9 + $0x40] sm:$0xff]
        %v1098 = vld [vmem:[%s9 + $0x48] sm:$0xff]
        %v1099 = vld [vmem:[%s9 + $0x50] sm:$0xff]
        %v1100 = vld [vmem:[%s9 + $0x58] sm:$0xff]
        %v1101 = vld [vmem:[%s9 + $0x60] sm:$0xff]
        %v1102 = vld [vmem:[%s9 + $0x68] sm:$0xff]
        %v1103 = vld [vmem:[%s9 + $0x70] sm:$0xff]
        %v1104 = vld [vmem:[%s9 + $0x78] sm:$0xff]
        %v1105 = vld [vmem:[%s9 + $0x80] sm:$0xff]
        %v1106 = vld [vmem:[%s9 + $0x88] sm:$0xff]
        %v1107 = vld [vmem:[%s9 + $0x90] sm:$0xff]
        %v1108 = vld [vmem:[%s9 + $0x98] sm:$0xff]
        %v1109 = vld [vmem:[%s9 + $0xa0] sm:$0xff]
        %v1110 = vld [vmem:[%s9 + $0xa8] sm:$0xff]
        %v1111 = vld [vmem:[%s9 + $0xb0] sm:$0xff]
        %v1112 = vld [vmem:[%s9 + $0xb8] sm:$0xff]
        %v1113 = vld [vmem:[%s9 + $0xc0] sm:$0xff]
        %v1114 = vld [vmem:[%s9 + $0xc8] sm:$0xff]
        %v1115 = vld [vmem:[%s9 + $0xd0] sm:$0xff]
        %v1116 = vld [vmem:[%s9 + $0xd8] sm:$0xff]
        %v1117 = vld [vmem:[%s9 + $0xe0] sm:$0xff]
        %v1118 = vld [vmem:[%s9 + $0xe8] sm:$0xff]
        %v1119 = vld [vmem:[%s9 + $0xf0] sm:$0xff]
        %v1120 = vld [vmem:[%s9 + $0xf8] sm:$0xff]
        %v1121 = vld [vmem:[%s10] sm:$0xf]
        %v1123 = vlaneseq
        %v1124 = vshrl.u32 %v1123, 7
        %v1125 = vsub.s32 0, %v1124
        %v1126 = vrot.slane %v1121, %v1125
        %v1127 = vlaneseq
        %v1128 = vshrl.u32 %v1127, 7
        %v1129 = vsub.s32 1, %v1128
        %v1130 = vrot.slane %v1121, %v1129
        %v1131 = vlaneseq
        %v1132 = vshrl.u32 %v1131, 7
        %v1133 = vsub.s32 2, %v1132
        %v1134 = vrot.slane %v1121, %v1133
        %v1135 = vlaneseq
        %v1136 = vshrl.u32 %v1135, 7
        %v1137 = vsub.s32 3, %v1136
        %v1138 = vrot.slane %v1121, %v1137
        %v1175 = vunpack.c.l.b16 %v1089
        %v1176 = vunpack.c.h.b16 %v1089
        %v1177 = vunpack.c.l.b16 %v1090
        %v1178 = vunpack.c.h.b16 %v1090
        %v1179 = vunpack.c.l.b16 %v1091
        %v1180 = vunpack.c.h.b16 %v1091
        %v1181 = vunpack.c.l.b16 %v1092
        %v1182 = vunpack.c.h.b16 %v1092
        %v1183 = vunpack.c.l.b16 %v1093
        %v1184 = vunpack.c.h.b16 %v1093
        %v1185 = vunpack.c.l.b16 %v1094
        %v1186 = vunpack.c.h.b16 %v1094
        %v1187 = vunpack.c.l.b16 %v1095
        %v1188 = vunpack.c.h.b16 %v1095
        %v1189 = vunpack.c.l.b16 %v1096
        %v1190 = vunpack.c.h.b16 %v1096
        %v1191 = vunpack.c.l.b16 %v1097
        %v1192 = vunpack.c.h.b16 %v1097
        %v1193 = vunpack.c.l.b16 %v1098
        %v1194 = vunpack.c.h.b16 %v1098
        %v1195 = vunpack.c.l.b16 %v1099
        %v1196 = vunpack.c.h.b16 %v1099
        %v1197 = vunpack.c.l.b16 %v1100
        %v1198 = vunpack.c.h.b16 %v1100
        %v1199 = vunpack.c.l.b16 %v1101
        %v1200 = vunpack.c.h.b16 %v1101
        %v1201 = vunpack.c.l.b16 %v1102
        %v1202 = vunpack.c.h.b16 %v1102
        %v1203 = vunpack.c.l.b16 %v1103
        %v1204 = vunpack.c.h.b16 %v1103
        %v1205 = vunpack.c.l.b16 %v1104
        %v1206 = vunpack.c.h.b16 %v1104
        %v1207 = vunpack.c.l.b16 %v1105
        %v1208 = vunpack.c.h.b16 %v1105
        %v1209 = vunpack.c.l.b16 %v1106
        %v1210 = vunpack.c.h.b16 %v1106
        %v1211 = vunpack.c.l.b16 %v1107
        %v1212 = vunpack.c.h.b16 %v1107
        %v1213 = vunpack.c.l.b16 %v1108
        %v1214 = vunpack.c.h.b16 %v1108
        %v1215 = vunpack.c.l.b16 %v1109
        %v1216 = vunpack.c.h.b16 %v1109
        %v1217 = vunpack.c.l.b16 %v1110
        %v1218 = vunpack.c.h.b16 %v1110
        %v1219 = vunpack.c.l.b16 %v1111
        %v1220 = vunpack.c.h.b16 %v1111
        %v1221 = vunpack.c.l.b16 %v1112
        %v1222 = vunpack.c.h.b16 %v1112
        %v1223 = vunpack.c.l.b16 %v1113
        %v1224 = vunpack.c.h.b16 %v1113
        %v1225 = vunpack.c.l.b16 %v1114
        %v1226 = vunpack.c.h.b16 %v1114
        %v1227 = vunpack.c.l.b16 %v1115
        %v1228 = vunpack.c.h.b16 %v1115
        %v1229 = vunpack.c.l.b16 %v1116
        %v1230 = vunpack.c.h.b16 %v1116
        %v1231 = vunpack.c.l.b16 %v1117
        %v1232 = vunpack.c.h.b16 %v1117
        %v1233 = vunpack.c.l.b16 %v1118
        %v1234 = vunpack.c.h.b16 %v1118
        %v1235 = vunpack.c.l.b16 %v1119
        %v1236 = vunpack.c.h.b16 %v1119
        %v1237 = vunpack.c.l.b16 %v1120
        %v1238 = vunpack.c.h.b16 %v1120
        %v1239 = vpack.c.b16 %v1179, %v1175
        %v1240 = vpack.c.b16 %v1180, %v1176
        %v1241 = vpack.c.b16 %v1181, %v1177
        %v1242 = vpack.c.b16 %v1182, %v1178
        %v1243 = vpack.c.b16 %v1187, %v1183
        %v1244 = vpack.c.b16 %v1188, %v1184
        %v1245 = vpack.c.b16 %v1189, %v1185
        %v1246 = vpack.c.b16 %v1190, %v1186
        %v1247 = vpack.c.b16 %v1195, %v1191
        %v1248 = vpack.c.b16 %v1196, %v1192
        %v1249 = vpack.c.b16 %v1197, %v1193
        %v1250 = vpack.c.b16 %v1198, %v1194
        %v1251 = vpack.c.b16 %v1203, %v1199
        %v1252 = vpack.c.b16 %v1204, %v1200
        %v1253 = vpack.c.b16 %v1205, %v1201
        %v1254 = vpack.c.b16 %v1206, %v1202
        %v1255 = vpack.c.b16 %v1211, %v1207
        %v1256 = vpack.c.b16 %v1212, %v1208
        %v1257 = vpack.c.b16 %v1213, %v1209
        %v1258 = vpack.c.b16 %v1214, %v1210
        %v1259 = vpack.c.b16 %v1219, %v1215
        %v1260 = vpack.c.b16 %v1220, %v1216
        %v1261 = vpack.c.b16 %v1221, %v1217
        %v1262 = vpack.c.b16 %v1222, %v1218
        %v1263 = vpack.c.b16 %v1227, %v1223
        %v1264 = vpack.c.b16 %v1228, %v1224
        %v1265 = vpack.c.b16 %v1229, %v1225
        %v1266 = vpack.c.b16 %v1230, %v1226
        %v1267 = vpack.c.b16 %v1235, %v1231
        %v1268 = vpack.c.b16 %v1236, %v1232
        %v1269 = vpack.c.b16 %v1237, %v1233
        %v1270 = vpack.c.b16 %v1238, %v1234
        %1303 = vmatprep.subr.bf16.mxu0 %v1240
        %1304 = vmatpush1.bf16.msra.mxu0 %v1239
        %1305 = vmatprep.subr.bf16.mxu0 %v1244
        %1306 = vmatpush1.bf16.msra.mxu0 %v1243
        %1307 = vmatprep.subr.bf16.mxu0 %v1248
        %1308 = vmatpush1.bf16.msra.mxu0 %v1247
        %1309 = vmatprep.subr.bf16.mxu0 %v1252
        %1310 = vmatpush1.bf16.msra.mxu0 %v1251
        %1311 = vmatprep.subr.bf16.mxu0 %v1256
        %1312 = vmatpush1.bf16.msra.mxu0 %v1255
        %1313 = vmatprep.subr.bf16.mxu0 %v1260
        %1314 = vmatpush1.bf16.msra.mxu0 %v1259
        %1315 = vmatprep.subr.bf16.mxu0 %v1264
        %1316 = vmatpush1.bf16.msra.mxu0 %v1263
        %1317 = vmatprep.subr.bf16.mxu0 %v1268
        %1318 = vmatpush1.bf16.msra.mxu0 %v1267
        %1319 = vmatprep.subr.bf16.mxu0 0
        %1320 = vmatpush1.bf16.msra.mxu0 0
        %1321 = vmatprep.subr.bf16.mxu0 0
        %1322 = vmatpush1.bf16.msra.mxu0 0
        %1323 = vmatprep.subr.bf16.mxu0 0
        %1324 = vmatpush1.bf16.msra.mxu0 0
        %1325 = vmatprep.subr.bf16.mxu0 0
        %1326 = vmatpush1.bf16.msra.mxu0 0
        %1327 = vmatprep.subr.bf16.mxu0 0
        %1328 = vmatpush1.bf16.msra.mxu0 0
        %1329 = vmatprep.subr.bf16.mxu0 0
        %1330 = vmatpush1.bf16.msra.mxu0 0
        %1331 = vmatprep.subr.bf16.mxu0 0
        %1332 = vmatpush1.bf16.msra.mxu0 0
        %1333 = vmatprep.subr.bf16.mxu0 0
        %1334 = vmatpush1.bf16.msra.mxu0 0
        %1335 = vmatprep.mubr.bf16.mxu0 0
        %1336 = vmatmul.mubr.bf16.gmra.mrb[0].mxu0 %v1088
        %v1337 = vpop.f32.mrb[0].mxu0
        %v1338 = vadd.f32 %v1126, %v1337
        %v1339 = vpop.f32.mrb[0].mxu0
        %v1340 = vadd.f32 %v1130, %v1339
        %v1341 = vpop.f32.mrb[0].mxu0
        %v1342 = vadd.f32 %v1126, %v1341
        %v1343 = vpop.f32.mrb[0].mxu0
        %v1344 = vadd.f32 %v1130, %v1343
        %1345 = vdwg.mxu0
        %1346 = vmatprep.subr.bf16.mxu0 %v1242
        %1347 = vmatpush1.bf16.msra.mxu0 %v1241
        %1348 = vmatprep.subr.bf16.mxu0 %v1246
        %1349 = vmatpush1.bf16.msra.mxu0 %v1245
        %1350 = vmatprep.subr.bf16.mxu0 %v1250
        %1351 = vmatpush1.bf16.msra.mxu0 %v1249
        %1352 = vmatprep.subr.bf16.mxu0 %v1254
        %1353 = vmatpush1.bf16.msra.mxu0 %v1253
        %1354 = vmatprep.subr.bf16.mxu0 %v1258
        %1355 = vmatpush1.bf16.msra.mxu0 %v1257
        %1356 = vmatprep.subr.bf16.mxu0 %v1262
        %1357 = vmatpush1.bf16.msra.mxu0 %v1261
        %1358 = vmatprep.subr.bf16.mxu0 %v1266
        %1359 = vmatpush1.bf16.msra.mxu0 %v1265
        %1360 = vmatprep.subr.bf16.mxu0 %v1270
        %1361 = vmatpush1.bf16.msra.mxu0 %v1269
        %1362 = vmatprep.subr.bf16.mxu0 0
        %1363 = vmatpush1.bf16.msra.mxu0 0
        %1364 = vmatprep.subr.bf16.mxu0 0
        %1365 = vmatpush1.bf16.msra.mxu0 0
        %1366 = vmatprep.subr.bf16.mxu0 0
        %1367 = vmatpush1.bf16.msra.mxu0 0
        %1368 = vmatprep.subr.bf16.mxu0 0
        %1369 = vmatpush1.bf16.msra.mxu0 0
        %1370 = vmatprep.subr.bf16.mxu0 0
        %1371 = vmatpush1.bf16.msra.mxu0 0
        %1372 = vmatprep.subr.bf16.mxu0 0
        %1373 = vmatpush1.bf16.msra.mxu0 0
        %1374 = vmatprep.subr.bf16.mxu0 0
        %1375 = vmatpush1.bf16.msra.mxu0 0
        %1376 = vmatprep.subr.bf16.mxu0 0
        %1377 = vmatpush1.bf16.msra.mxu0 0
        %1378 = vmatprep.mubr.bf16.mxu0 0
        %1379 = vmatmul.mubr.bf16.gmra.mrb[0].mxu0 %v1088
        %v1380 = vpop.f32.mrb[0].mxu0
        %v1381 = vadd.f32 %v1134, %v1380
        %v1382 = vpop.f32.mrb[0].mxu0
        %v1383 = vadd.f32 %v1138, %v1382
        %v1384 = vpop.f32.mrb[0].mxu0
        %v1385 = vadd.f32 %v1134, %v1384
        %v1386 = vpop.f32.mrb[0].mxu0
        %v1387 = vadd.f32 %v1138, %v1386
        %1388 = vdwg.mxu0
        %vm1389 = vcmp.ge.f32.partialorder %v1338, 0.0
        %vm1390 = vcmp.ge.f32.partialorder %v1340, 0.0
        %vm1391 = vcmp.ge.f32.partialorder %v1381, 0.0
        %vm1392 = vcmp.ge.f32.partialorder %v1383, 0.0
        %vm1393 = vcmp.ge.f32.partialorder %v1342, 0.0
        %vm1394 = vcmp.ge.f32.partialorder %v1344, 0.0
        %vm1395 = vcmp.ge.f32.partialorder %v1385, 0.0
        %vm1396 = vcmp.ge.f32.partialorder %v1387, 0.0
        %v1397 = vmul.f32 %v1338, 0.01
        %v1398 = vmul.f32 %v1340, 0.01
        %v1399 = vmul.f32 %v1381, 0.01
        %v1400 = vmul.f32 %v1383, 0.01
        %v1401 = vmul.f32 %v1342, 0.01
        %v1402 = vmul.f32 %v1344, 0.01
        %v1403 = vmul.f32 %v1385, 0.01
        %v1404 = vmul.f32 %v1387, 0.01
        %v1405 = vsel %vm1389, %v1338, %v1397
        %v1406 = vsel %vm1390, %v1340, %v1398
        %v1407 = vsel %vm1391, %v1381, %v1399
        %v1408 = vsel %vm1392, %v1383, %v1400
        %v1409 = vsel %vm1393, %v1342, %v1401
        %v1410 = vsel %vm1394, %v1344, %v1402
        %v1411 = vsel %vm1395, %v1385, %v1403
        %v1412 = vsel %vm1396, %v1387, %v1404
        %v1413 = vpack.c.bf16 %v1409, %v1405
        %v1414 = vpack.c.bf16 %v1410, %v1406
        %v1415 = vpack.c.bf16 %v1411, %v1407
        %v1416 = vpack.c.bf16 %v1412, %v1408
        %v1417 = vld [vmem:[#allocation13] sm:$0xff]
        %v1418 = vld [vmem:[#allocation13 + $0x8] sm:$0xff]
        %v1419 = vld [vmem:[#allocation13 + $0x10] sm:$0xff]
        %v1420 = vld [vmem:[#allocation13 + $0x18] sm:$0xff]
        %v1421 = vld [vmem:[#allocation13 + $0x20] sm:$0xff]
        %v1422 = vld [vmem:[#allocation13 + $0x28] sm:$0xff]
        %v1423 = vld [vmem:[#allocation13 + $0x30] sm:$0xff]
        %v1424 = vld [vmem:[#allocation13 + $0x38] sm:$0xff]
        %v1425 = vld [vmem:[#allocation13 + $0x40] sm:$0xff]
        %v1426 = vld [vmem:[#allocation13 + $0x48] sm:$0xff]
        %v1427 = vld [vmem:[#allocation13 + $0x50] sm:$0xff]
        %v1428 = vld [vmem:[#allocation13 + $0x58] sm:$0xff]
        %v1429 = vld [vmem:[#allocation13 + $0x60] sm:$0xff]
        %v1430 = vld [vmem:[#allocation13 + $0x68] sm:$0xff]
        %v1431 = vld [vmem:[#allocation13 + $0x70] sm:$0xff]
        %v1432 = vld [vmem:[#allocation13 + $0x78] sm:$0xff]
        %v1433 = vld [vmem:[#allocation13 + $0x80] sm:$0xff]
        %v1434 = vld [vmem:[#allocation13 + $0x88] sm:$0xff]
        %v1435 = vld [vmem:[#allocation13 + $0x90] sm:$0xff]
        %v1436 = vld [vmem:[#allocation13 + $0x98] sm:$0xff]
        %v1437 = vld [vmem:[#allocation13 + $0xa0] sm:$0xff]
        %v1438 = vld [vmem:[#allocation13 + $0xa8] sm:$0xff]
        %v1439 = vld [vmem:[#allocation13 + $0xb0] sm:$0xff]
        %v1440 = vld [vmem:[#allocation13 + $0xb8] sm:$0xff]
        %v1441 = vld [vmem:[#allocation13 + $0xc0] sm:$0xff]
        %v1442 = vld [vmem:[#allocation13 + $0xc8] sm:$0xff]
        %v1443 = vld [vmem:[#allocation13 + $0xd0] sm:$0xff]
        %v1444 = vld [vmem:[#allocation13 + $0xd8] sm:$0xff]
        %v1445 = vld [vmem:[#allocation13 + $0xe0] sm:$0xff]
        %v1446 = vld [vmem:[#allocation13 + $0xe8] sm:$0xff]
        %v1447 = vld [vmem:[#allocation13 + $0xf0] sm:$0xff]
        %v1448 = vld [vmem:[#allocation13 + $0xf8] sm:$0xff]
        %v1449 = vld [vmem:[#allocation13 + $0x100] sm:$0xff]
        %v1450 = vld [vmem:[#allocation13 + $0x108] sm:$0xff]
        %v1451 = vld [vmem:[#allocation13 + $0x110] sm:$0xff]
        %v1452 = vld [vmem:[#allocation13 + $0x118] sm:$0xff]
        %v1453 = vld [vmem:[#allocation13 + $0x120] sm:$0xff]
        %v1454 = vld [vmem:[#allocation13 + $0x128] sm:$0xff]
        %v1455 = vld [vmem:[#allocation13 + $0x130] sm:$0xff]
        %v1456 = vld [vmem:[#allocation13 + $0x138] sm:$0xff]
        %v1457 = vld [vmem:[#allocation13 + $0x140] sm:$0xff]
        %v1458 = vld [vmem:[#allocation13 + $0x148] sm:$0xff]
        %v1459 = vld [vmem:[#allocation13 + $0x150] sm:$0xff]
        %v1460 = vld [vmem:[#allocation13 + $0x158] sm:$0xff]
        %v1461 = vld [vmem:[#allocation13 + $0x160] sm:$0xff]
        %v1462 = vld [vmem:[#allocation13 + $0x168] sm:$0xff]
        %v1463 = vld [vmem:[#allocation13 + $0x170] sm:$0xff]
        %v1464 = vld [vmem:[#allocation13 + $0x178] sm:$0xff]
        %v1465 = vld [vmem:[#allocation13 + $0x180] sm:$0xff]
        %v1466 = vld [vmem:[#allocation13 + $0x188] sm:$0xff]
        %v1467 = vld [vmem:[#allocation13 + $0x190] sm:$0xff]
        %v1468 = vld [vmem:[#allocation13 + $0x198] sm:$0xff]
        %v1469 = vld [vmem:[#allocation13 + $0x1a0] sm:$0xff]
        %v1470 = vld [vmem:[#allocation13 + $0x1a8] sm:$0xff]
        %v1471 = vld [vmem:[#allocation13 + $0x1b0] sm:$0xff]
        %v1472 = vld [vmem:[#allocation13 + $0x1b8] sm:$0xff]
        %v1473 = vld [vmem:[#allocation13 + $0x1c0] sm:$0xff]
        %v1474 = vld [vmem:[#allocation13 + $0x1c8] sm:$0xff]
        %v1475 = vld [vmem:[#allocation13 + $0x1d0] sm:$0xff]
        %v1476 = vld [vmem:[#allocation13 + $0x1d8] sm:$0xff]
        %v1477 = vld [vmem:[#allocation13 + $0x1e0] sm:$0xff]
        %v1478 = vld [vmem:[#allocation13 + $0x1e8] sm:$0xff]
        %v1479 = vld [vmem:[#allocation13 + $0x1f0] sm:$0xff]
        %v1480 = vld [vmem:[#allocation13 + $0x1f8] sm:$0xff]
        %v1481 = vld [vmem:[#allocation13 + $0x200] sm:$0xff]
        %v1482 = vld [vmem:[#allocation13 + $0x208] sm:$0xff]
        %v1483 = vld [vmem:[#allocation13 + $0x210] sm:$0xff]
        %v1484 = vld [vmem:[#allocation13 + $0x218] sm:$0xff]
        %v1485 = vld [vmem:[#allocation13 + $0x220] sm:$0xff]
        %v1486 = vld [vmem:[#allocation13 + $0x228] sm:$0xff]
        %v1487 = vld [vmem:[#allocation13 + $0x230] sm:$0xff]
        %v1488 = vld [vmem:[#allocation13 + $0x238] sm:$0xff]
        %v1489 = vld [vmem:[#allocation13 + $0x240] sm:$0xff]
        %v1490 = vld [vmem:[#allocation13 + $0x248] sm:$0xff]
        %v1491 = vld [vmem:[#allocation13 + $0x250] sm:$0xff]
        %v1492 = vld [vmem:[#allocation13 + $0x258] sm:$0xff]
        %v1493 = vld [vmem:[#allocation13 + $0x260] sm:$0xff]
        %v1494 = vld [vmem:[#allocation13 + $0x268] sm:$0xff]
        %v1495 = vld [vmem:[#allocation13 + $0x270] sm:$0xff]
        %v1496 = vld [vmem:[#allocation13 + $0x278] sm:$0xff]
        %v1497 = vld [vmem:[#allocation13 + $0x280] sm:$0xff]
        %v1498 = vld [vmem:[#allocation13 + $0x288] sm:$0xff]
        %v1499 = vld [vmem:[#allocation13 + $0x290] sm:$0xff]
        %v1500 = vld [vmem:[#allocation13 + $0x298] sm:$0xff]
        %v1501 = vld [vmem:[#allocation13 + $0x2a0] sm:$0xff]
        %v1502 = vld [vmem:[#allocation13 + $0x2a8] sm:$0xff]
        %v1503 = vld [vmem:[#allocation13 + $0x2b0] sm:$0xff]
        %v1504 = vld [vmem:[#allocation13 + $0x2b8] sm:$0xff]
        %v1505 = vld [vmem:[#allocation13 + $0x2c0] sm:$0xff]
        %v1506 = vld [vmem:[#allocation13 + $0x2c8] sm:$0xff]
        %v1507 = vld [vmem:[#allocation13 + $0x2d0] sm:$0xff]
        %v1508 = vld [vmem:[#allocation13 + $0x2d8] sm:$0xff]
        %v1509 = vld [vmem:[#allocation13 + $0x2e0] sm:$0xff]
        %v1510 = vld [vmem:[#allocation13 + $0x2e8] sm:$0xff]
        %v1511 = vld [vmem:[#allocation13 + $0x2f0] sm:$0xff]
        %v1512 = vld [vmem:[#allocation13 + $0x2f8] sm:$0xff]
        %v1513 = vld [vmem:[#allocation13 + $0x300] sm:$0xff]
        %v1514 = vld [vmem:[#allocation13 + $0x308] sm:$0xff]
        %v1515 = vld [vmem:[#allocation13 + $0x310] sm:$0xff]
        %v1516 = vld [vmem:[#allocation13 + $0x318] sm:$0xff]
        %v1517 = vld [vmem:[#allocation13 + $0x320] sm:$0xff]
        %v1518 = vld [vmem:[#allocation13 + $0x328] sm:$0xff]
        %v1519 = vld [vmem:[#allocation13 + $0x330] sm:$0xff]
        %v1520 = vld [vmem:[#allocation13 + $0x338] sm:$0xff]
        %v1521 = vld [vmem:[#allocation13 + $0x340] sm:$0xff]
        %v1522 = vld [vmem:[#allocation13 + $0x348] sm:$0xff]
        %v1523 = vld [vmem:[#allocation13 + $0x350] sm:$0xff]
        %v1524 = vld [vmem:[#allocation13 + $0x358] sm:$0xff]
        %v1525 = vld [vmem:[#allocation13 + $0x360] sm:$0xff]
        %v1526 = vld [vmem:[#allocation13 + $0x368] sm:$0xff]
        %v1527 = vld [vmem:[#allocation13 + $0x370] sm:$0xff]
        %v1528 = vld [vmem:[#allocation13 + $0x378] sm:$0xff]
        %v1529 = vld [vmem:[#allocation13 + $0x380] sm:$0xff]
        %v1530 = vld [vmem:[#allocation13 + $0x388] sm:$0xff]
        %v1531 = vld [vmem:[#allocation13 + $0x390] sm:$0xff]
        %v1532 = vld [vmem:[#allocation13 + $0x398] sm:$0xff]
        %v1533 = vld [vmem:[#allocation13 + $0x3a0] sm:$0xff]
        %v1534 = vld [vmem:[#allocation13 + $0x3a8] sm:$0xff]
        %v1535 = vld [vmem:[#allocation13 + $0x3b0] sm:$0xff]
        %v1536 = vld [vmem:[#allocation13 + $0x3b8] sm:$0xff]
        %v1537 = vld [vmem:[#allocation13 + $0x3c0] sm:$0xff]
        %v1538 = vld [vmem:[#allocation13 + $0x3c8] sm:$0xff]
        %v1539 = vld [vmem:[#allocation13 + $0x3d0] sm:$0xff]
        %v1540 = vld [vmem:[#allocation13 + $0x3d8] sm:$0xff]
        %v1541 = vld [vmem:[#allocation13 + $0x3e0] sm:$0xff]
        %v1542 = vld [vmem:[#allocation13 + $0x3e8] sm:$0xff]
        %v1543 = vld [vmem:[#allocation13 + $0x3f0] sm:$0xff]
        %v1544 = vld [vmem:[#allocation13 + $0x3f8] sm:$0xff]
        %v1545 = vld [vmem:[#allocation13 + $0x400] sm:$0xff]
        %v1546 = vld [vmem:[#allocation13 + $0x408] sm:$0xff]
        %v1547 = vld [vmem:[#allocation13 + $0x410] sm:$0xff]
        %v1548 = vld [vmem:[#allocation13 + $0x418] sm:$0xff]
        %v1549 = vld [vmem:[#allocation13 + $0x420] sm:$0xff]
        %v1550 = vld [vmem:[#allocation13 + $0x428] sm:$0xff]
        %v1551 = vld [vmem:[#allocation13 + $0x430] sm:$0xff]
        %v1552 = vld [vmem:[#allocation13 + $0x438] sm:$0xff]
        %v1553 = vld [vmem:[#allocation13 + $0x440] sm:$0xff]
        %v1554 = vld [vmem:[#allocation13 + $0x448] sm:$0xff]
        %v1555 = vld [vmem:[#allocation13 + $0x450] sm:$0xff]
        %v1556 = vld [vmem:[#allocation13 + $0x458] sm:$0xff]
        %v1557 = vld [vmem:[#allocation13 + $0x460] sm:$0xff]
        %v1558 = vld [vmem:[#allocation13 + $0x468] sm:$0xff]
        %v1559 = vld [vmem:[#allocation13 + $0x470] sm:$0xff]
        %v1560 = vld [vmem:[#allocation13 + $0x478] sm:$0xff]
        %v1561 = vld [vmem:[#allocation13 + $0x480] sm:$0xff]
        %v1562 = vld [vmem:[#allocation13 + $0x488] sm:$0xff]
        %v1563 = vld [vmem:[#allocation13 + $0x490] sm:$0xff]
        %v1564 = vld [vmem:[#allocation13 + $0x498] sm:$0xff]
        %v1565 = vld [vmem:[#allocation13 + $0x4a0] sm:$0xff]
        %v1566 = vld [vmem:[#allocation13 + $0x4a8] sm:$0xff]
        %v1567 = vld [vmem:[#allocation13 + $0x4b0] sm:$0xff]
        %v1568 = vld [vmem:[#allocation13 + $0x4b8] sm:$0xff]
        %v1569 = vld [vmem:[#allocation13 + $0x4c0] sm:$0xff]
        %v1570 = vld [vmem:[#allocation13 + $0x4c8] sm:$0xff]
        %v1571 = vld [vmem:[#allocation13 + $0x4d0] sm:$0xff]
        %v1572 = vld [vmem:[#allocation13 + $0x4d8] sm:$0xff]
        %v1573 = vld [vmem:[#allocation13 + $0x4e0] sm:$0xff]
        %v1574 = vld [vmem:[#allocation13 + $0x4e8] sm:$0xff]
        %v1575 = vld [vmem:[#allocation13 + $0x4f0] sm:$0xff]
        %v1576 = vld [vmem:[#allocation13 + $0x4f8] sm:$0xff]
        %v1577 = vld [vmem:[#allocation13 + $0x500] sm:$0xff]
        %v1578 = vld [vmem:[#allocation13 + $0x508] sm:$0xff]
        %v1579 = vld [vmem:[#allocation13 + $0x510] sm:$0xff]
        %v1580 = vld [vmem:[#allocation13 + $0x518] sm:$0xff]
        %v1581 = vld [vmem:[#allocation13 + $0x520] sm:$0xff]
        %v1582 = vld [vmem:[#allocation13 + $0x528] sm:$0xff]
        %v1583 = vld [vmem:[#allocation13 + $0x530] sm:$0xff]
        %v1584 = vld [vmem:[#allocation13 + $0x538] sm:$0xff]
        %v1585 = vld [vmem:[#allocation13 + $0x540] sm:$0xff]
        %v1586 = vld [vmem:[#allocation13 + $0x548] sm:$0xff]
        %v1587 = vld [vmem:[#allocation13 + $0x550] sm:$0xff]
        %v1588 = vld [vmem:[#allocation13 + $0x558] sm:$0xff]
        %v1589 = vld [vmem:[#allocation13 + $0x560] sm:$0xff]
        %v1590 = vld [vmem:[#allocation13 + $0x568] sm:$0xff]
        %v1591 = vld [vmem:[#allocation13 + $0x570] sm:$0xff]
        %v1592 = vld [vmem:[#allocation13 + $0x578] sm:$0xff]
        %v1593 = vld [vmem:[#allocation13 + $0x580] sm:$0xff]
        %v1594 = vld [vmem:[#allocation13 + $0x588] sm:$0xff]
        %v1595 = vld [vmem:[#allocation13 + $0x590] sm:$0xff]
        %v1596 = vld [vmem:[#allocation13 + $0x598] sm:$0xff]
        %v1597 = vld [vmem:[#allocation13 + $0x5a0] sm:$0xff]
        %v1598 = vld [vmem:[#allocation13 + $0x5a8] sm:$0xff]
        %v1599 = vld [vmem:[#allocation13 + $0x5b0] sm:$0xff]
        %v1600 = vld [vmem:[#allocation13 + $0x5b8] sm:$0xff]
        %v1601 = vld [vmem:[#allocation13 + $0x5c0] sm:$0xff]
        %v1602 = vld [vmem:[#allocation13 + $0x5c8] sm:$0xff]
        %v1603 = vld [vmem:[#allocation13 + $0x5d0] sm:$0xff]
        %v1604 = vld [vmem:[#allocation13 + $0x5d8] sm:$0xff]
        %v1605 = vld [vmem:[#allocation13 + $0x5e0] sm:$0xff]
        %v1606 = vld [vmem:[#allocation13 + $0x5e8] sm:$0xff]
        %v1607 = vld [vmem:[#allocation13 + $0x5f0] sm:$0xff]
        %v1608 = vld [vmem:[#allocation13 + $0x5f8] sm:$0xff]
        %v1609 = vld [vmem:[#allocation13 + $0x600] sm:$0xff]
        %v1610 = vld [vmem:[#allocation13 + $0x608] sm:$0xff]
        %v1611 = vld [vmem:[#allocation13 + $0x610] sm:$0xff]
        %v1612 = vld [vmem:[#allocation13 + $0x618] sm:$0xff]
        %v1613 = vld [vmem:[#allocation13 + $0x620] sm:$0xff]
        %v1614 = vld [vmem:[#allocation13 + $0x628] sm:$0xff]
        %v1615 = vld [vmem:[#allocation13 + $0x630] sm:$0xff]
        %v1616 = vld [vmem:[#allocation13 + $0x638] sm:$0xff]
        %v1617 = vld [vmem:[#allocation13 + $0x640] sm:$0xff]
        %v1618 = vld [vmem:[#allocation13 + $0x648] sm:$0xff]
        %v1619 = vld [vmem:[#allocation13 + $0x650] sm:$0xff]
        %v1620 = vld [vmem:[#allocation13 + $0x658] sm:$0xff]
        %v1621 = vld [vmem:[#allocation13 + $0x660] sm:$0xff]
        %v1622 = vld [vmem:[#allocation13 + $0x668] sm:$0xff]
        %v1623 = vld [vmem:[#allocation13 + $0x670] sm:$0xff]
        %v1624 = vld [vmem:[#allocation13 + $0x678] sm:$0xff]
        %v1625 = vld [vmem:[#allocation13 + $0x680] sm:$0xff]
        %v1626 = vld [vmem:[#allocation13 + $0x688] sm:$0xff]
        %v1627 = vld [vmem:[#allocation13 + $0x690] sm:$0xff]
        %v1628 = vld [vmem:[#allocation13 + $0x698] sm:$0xff]
        %v1629 = vld [vmem:[#allocation13 + $0x6a0] sm:$0xff]
        %v1630 = vld [vmem:[#allocation13 + $0x6a8] sm:$0xff]
        %v1631 = vld [vmem:[#allocation13 + $0x6b0] sm:$0xff]
        %v1632 = vld [vmem:[#allocation13 + $0x6b8] sm:$0xff]
        %v1633 = vld [vmem:[#allocation13 + $0x6c0] sm:$0xff]
        %v1634 = vld [vmem:[#allocation13 + $0x6c8] sm:$0xff]
        %v1635 = vld [vmem:[#allocation13 + $0x6d0] sm:$0xff]
        %v1636 = vld [vmem:[#allocation13 + $0x6d8] sm:$0xff]
        %v1637 = vld [vmem:[#allocation13 + $0x6e0] sm:$0xff]
        %v1638 = vld [vmem:[#allocation13 + $0x6e8] sm:$0xff]
        %v1639 = vld [vmem:[#allocation13 + $0x6f0] sm:$0xff]
        %v1640 = vld [vmem:[#allocation13 + $0x6f8] sm:$0xff]
        %v1641 = vld [vmem:[#allocation13 + $0x700] sm:$0xff]
        %v1642 = vld [vmem:[#allocation13 + $0x708] sm:$0xff]
        %v1643 = vld [vmem:[#allocation13 + $0x710] sm:$0xff]
        %v1644 = vld [vmem:[#allocation13 + $0x718] sm:$0xff]
        %v1645 = vld [vmem:[#allocation13 + $0x720] sm:$0xff]
        %v1646 = vld [vmem:[#allocation13 + $0x728] sm:$0xff]
        %v1647 = vld [vmem:[#allocation13 + $0x730] sm:$0xff]
        %v1648 = vld [vmem:[#allocation13 + $0x738] sm:$0xff]
        %v1649 = vld [vmem:[#allocation13 + $0x740] sm:$0xff]
        %v1650 = vld [vmem:[#allocation13 + $0x748] sm:$0xff]
        %v1651 = vld [vmem:[#allocation13 + $0x750] sm:$0xff]
        %v1652 = vld [vmem:[#allocation13 + $0x758] sm:$0xff]
        %v1653 = vld [vmem:[#allocation13 + $0x760] sm:$0xff]
        %v1654 = vld [vmem:[#allocation13 + $0x768] sm:$0xff]
        %v1655 = vld [vmem:[#allocation13 + $0x770] sm:$0xff]
        %v1656 = vld [vmem:[#allocation13 + $0x778] sm:$0xff]
        %v1657 = vld [vmem:[#allocation13 + $0x780] sm:$0xff]
        %v1658 = vld [vmem:[#allocation13 + $0x788] sm:$0xff]
        %v1659 = vld [vmem:[#allocation13 + $0x790] sm:$0xff]
        %v1660 = vld [vmem:[#allocation13 + $0x798] sm:$0xff]
        %v1661 = vld [vmem:[#allocation13 + $0x7a0] sm:$0xff]
        %v1662 = vld [vmem:[#allocation13 + $0x7a8] sm:$0xff]
        %v1663 = vld [vmem:[#allocation13 + $0x7b0] sm:$0xff]
        %v1664 = vld [vmem:[#allocation13 + $0x7b8] sm:$0xff]
        %v1665 = vld [vmem:[#allocation13 + $0x7c0] sm:$0xff]
        %v1666 = vld [vmem:[#allocation13 + $0x7c8] sm:$0xff]
        %v1667 = vld [vmem:[#allocation13 + $0x7d0] sm:$0xff]
        %v1668 = vld [vmem:[#allocation13 + $0x7d8] sm:$0xff]
        %v1669 = vld [vmem:[#allocation13 + $0x7e0] sm:$0xff]
        %v1670 = vld [vmem:[#allocation13 + $0x7e8] sm:$0xff]
        %v1671 = vld [vmem:[#allocation13 + $0x7f0] sm:$0xff]
        %v1672 = vld [vmem:[#allocation13 + $0x7f8] sm:$0xff]
        %v1673 = vld [vmem:[%s12] sm:$0xff]
        %v1675 = vlaneseq
        %v1676 = vshrl.u32 %v1675, 7
        %v1677 = vsub.s32 0, %v1676
        %v1678 = vrot.slane %v1673, %v1677
        %v1679 = vlaneseq
        %v1680 = vshrl.u32 %v1679, 7
        %v1681 = vsub.s32 1, %v1680
        %v1682 = vrot.slane %v1673, %v1681
        %v1683 = vlaneseq
        %v1684 = vshrl.u32 %v1683, 7
        %v1685 = vsub.s32 2, %v1684
        %v1686 = vrot.slane %v1673, %v1685
        %v1687 = vlaneseq
        %v1688 = vshrl.u32 %v1687, 7
        %v1689 = vsub.s32 3, %v1688
        %v1690 = vrot.slane %v1673, %v1689
        %v1691 = vlaneseq
        %v1692 = vshrl.u32 %v1691, 7
        %v1693 = vsub.s32 4, %v1692
        %v1694 = vrot.slane %v1673, %v1693
        %v1695 = vlaneseq
        %v1696 = vshrl.u32 %v1695, 7
        %v1697 = vsub.s32 5, %v1696
        %v1698 = vrot.slane %v1673, %v1697
        %v1699 = vlaneseq
        %v1700 = vshrl.u32 %v1699, 7
        %v1701 = vsub.s32 6, %v1700
        %v1702 = vrot.slane %v1673, %v1701
        %v1703 = vlaneseq
        %v1704 = vshrl.u32 %v1703, 7
        %v1705 = vsub.s32 7, %v1704
        %v1706 = vrot.slane %v1673, %v1705
        %v1971 = vunpack.c.l.b16 %v1417
        %v1972 = vunpack.c.h.b16 %v1417
        %v1973 = vunpack.c.l.b16 %v1418
        %v1974 = vunpack.c.h.b16 %v1418
        %v1975 = vunpack.c.l.b16 %v1419
        %v1976 = vunpack.c.h.b16 %v1419
        %v1977 = vunpack.c.l.b16 %v1420
        %v1978 = vunpack.c.h.b16 %v1420
        %v1979 = vunpack.c.l.b16 %v1421
        %v1980 = vunpack.c.h.b16 %v1421
        %v1981 = vunpack.c.l.b16 %v1422
        %v1982 = vunpack.c.h.b16 %v1422
        %v1983 = vunpack.c.l.b16 %v1423
        %v1984 = vunpack.c.h.b16 %v1423
        %v1985 = vunpack.c.l.b16 %v1424
        %v1986 = vunpack.c.h.b16 %v1424
        %v1987 = vunpack.c.l.b16 %v1425
        %v1988 = vunpack.c.h.b16 %v1425
        %v1989 = vunpack.c.l.b16 %v1426
        %v1990 = vunpack.c.h.b16 %v1426
        %v1991 = vunpack.c.l.b16 %v1427
        %v1992 = vunpack.c.h.b16 %v1427
        %v1993 = vunpack.c.l.b16 %v1428
        %v1994 = vunpack.c.h.b16 %v1428
        %v1995 = vunpack.c.l.b16 %v1429
        %v1996 = vunpack.c.h.b16 %v1429
        %v1997 = vunpack.c.l.b16 %v1430
        %v1998 = vunpack.c.h.b16 %v1430
        %v1999 = vunpack.c.l.b16 %v1431
        %v2000 = vunpack.c.h.b16 %v1431
        %v2001 = vunpack.c.l.b16 %v1432
        %v2002 = vunpack.c.h.b16 %v1432
        %v2003 = vunpack.c.l.b16 %v1433
        %v2004 = vunpack.c.h.b16 %v1433
        %v2005 = vunpack.c.l.b16 %v1434
        %v2006 = vunpack.c.h.b16 %v1434
        %v2007 = vunpack.c.l.b16 %v1435
        %v2008 = vunpack.c.h.b16 %v1435
        %v2009 = vunpack.c.l.b16 %v1436
        %v2010 = vunpack.c.h.b16 %v1436
        %v2011 = vunpack.c.l.b16 %v1437
        %v2012 = vunpack.c.h.b16 %v1437
        %v2013 = vunpack.c.l.b16 %v1438
        %v2014 = vunpack.c.h.b16 %v1438
        %v2015 = vunpack.c.l.b16 %v1439
        %v2016 = vunpack.c.h.b16 %v1439
        %v2017 = vunpack.c.l.b16 %v1440
        %v2018 = vunpack.c.h.b16 %v1440
        %v2019 = vunpack.c.l.b16 %v1441
        %v2020 = vunpack.c.h.b16 %v1441
        %v2021 = vunpack.c.l.b16 %v1442
        %v2022 = vunpack.c.h.b16 %v1442
        %v2023 = vunpack.c.l.b16 %v1443
        %v2024 = vunpack.c.h.b16 %v1443
        %v2025 = vunpack.c.l.b16 %v1444
        %v2026 = vunpack.c.h.b16 %v1444
        %v2027 = vunpack.c.l.b16 %v1445
        %v2028 = vunpack.c.h.b16 %v1445
        %v2029 = vunpack.c.l.b16 %v1446
        %v2030 = vunpack.c.h.b16 %v1446
        %v2031 = vunpack.c.l.b16 %v1447
        %v2032 = vunpack.c.h.b16 %v1447
        %v2033 = vunpack.c.l.b16 %v1448
        %v2034 = vunpack.c.h.b16 %v1448
        %v2035 = vunpack.c.l.b16 %v1449
        %v2036 = vunpack.c.h.b16 %v1449
        %v2037 = vunpack.c.l.b16 %v1450
        %v2038 = vunpack.c.h.b16 %v1450
        %v2039 = vunpack.c.l.b16 %v1451
        %v2040 = vunpack.c.h.b16 %v1451
        %v2041 = vunpack.c.l.b16 %v1452
        %v2042 = vunpack.c.h.b16 %v1452
        %v2043 = vunpack.c.l.b16 %v1453
        %v2044 = vunpack.c.h.b16 %v1453
        %v2045 = vunpack.c.l.b16 %v1454
        %v2046 = vunpack.c.h.b16 %v1454
        %v2047 = vunpack.c.l.b16 %v1455
        %v2048 = vunpack.c.h.b16 %v1455
        %v2049 = vunpack.c.l.b16 %v1456
        %v2050 = vunpack.c.h.b16 %v1456
        %v2051 = vunpack.c.l.b16 %v1457
        %v2052 = vunpack.c.h.b16 %v1457
        %v2053 = vunpack.c.l.b16 %v1458
        %v2054 = vunpack.c.h.b16 %v1458
        %v2055 = vunpack.c.l.b16 %v1459
        %v2056 = vunpack.c.h.b16 %v1459
        %v2057 = vunpack.c.l.b16 %v1460
        %v2058 = vunpack.c.h.b16 %v1460
        %v2059 = vunpack.c.l.b16 %v1461
        %v2060 = vunpack.c.h.b16 %v1461
        %v2061 = vunpack.c.l.b16 %v1462
        %v2062 = vunpack.c.h.b16 %v1462
        %v2063 = vunpack.c.l.b16 %v1463
        %v2064 = vunpack.c.h.b16 %v1463
        %v2065 = vunpack.c.l.b16 %v1464
        %v2066 = vunpack.c.h.b16 %v1464
        %v2067 = vunpack.c.l.b16 %v1465
        %v2068 = vunpack.c.h.b16 %v1465
        %v2069 = vunpack.c.l.b16 %v1466
        %v2070 = vunpack.c.h.b16 %v1466
        %v2071 = vunpack.c.l.b16 %v1467
        %v2072 = vunpack.c.h.b16 %v1467
        %v2073 = vunpack.c.l.b16 %v1468
        %v2074 = vunpack.c.h.b16 %v1468
        %v2075 = vunpack.c.l.b16 %v1469
        %v2076 = vunpack.c.h.b16 %v1469
        %v2077 = vunpack.c.l.b16 %v1470
        %v2078 = vunpack.c.h.b16 %v1470
        %v2079 = vunpack.c.l.b16 %v1471
        %v2080 = vunpack.c.h.b16 %v1471
        %v2081 = vunpack.c.l.b16 %v1472
        %v2082 = vunpack.c.h.b16 %v1472
        %v2083 = vunpack.c.l.b16 %v1473
        %v2084 = vunpack.c.h.b16 %v1473
        %v2085 = vunpack.c.l.b16 %v1474
        %v2086 = vunpack.c.h.b16 %v1474
        %v2087 = vunpack.c.l.b16 %v1475
        %v2088 = vunpack.c.h.b16 %v1475
        %v2089 = vunpack.c.l.b16 %v1476
        %v2090 = vunpack.c.h.b16 %v1476
        %v2091 = vunpack.c.l.b16 %v1477
        %v2092 = vunpack.c.h.b16 %v1477
        %v2093 = vunpack.c.l.b16 %v1478
        %v2094 = vunpack.c.h.b16 %v1478
        %v2095 = vunpack.c.l.b16 %v1479
        %v2096 = vunpack.c.h.b16 %v1479
        %v2097 = vunpack.c.l.b16 %v1480
        %v2098 = vunpack.c.h.b16 %v1480
        %v2099 = vunpack.c.l.b16 %v1481
        %v2100 = vunpack.c.h.b16 %v1481
        %v2101 = vunpack.c.l.b16 %v1482
        %v2102 = vunpack.c.h.b16 %v1482
        %v2103 = vunpack.c.l.b16 %v1483
        %v2104 = vunpack.c.h.b16 %v1483
        %v2105 = vunpack.c.l.b16 %v1484
        %v2106 = vunpack.c.h.b16 %v1484
        %v2107 = vunpack.c.l.b16 %v1485
        %v2108 = vunpack.c.h.b16 %v1485
        %v2109 = vunpack.c.l.b16 %v1486
        %v2110 = vunpack.c.h.b16 %v1486
        %v2111 = vunpack.c.l.b16 %v1487
        %v2112 = vunpack.c.h.b16 %v1487
        %v2113 = vunpack.c.l.b16 %v1488
        %v2114 = vunpack.c.h.b16 %v1488
        %v2115 = vunpack.c.l.b16 %v1489
        %v2116 = vunpack.c.h.b16 %v1489
        %v2117 = vunpack.c.l.b16 %v1490
        %v2118 = vunpack.c.h.b16 %v1490
        %v2119 = vunpack.c.l.b16 %v1491
        %v2120 = vunpack.c.h.b16 %v1491
        %v2121 = vunpack.c.l.b16 %v1492
        %v2122 = vunpack.c.h.b16 %v1492
        %v2123 = vunpack.c.l.b16 %v1493
        %v2124 = vunpack.c.h.b16 %v1493
        %v2125 = vunpack.c.l.b16 %v1494
        %v2126 = vunpack.c.h.b16 %v1494
        %v2127 = vunpack.c.l.b16 %v1495
        %v2128 = vunpack.c.h.b16 %v1495
        %v2129 = vunpack.c.l.b16 %v1496
        %v2130 = vunpack.c.h.b16 %v1496
        %v2131 = vunpack.c.l.b16 %v1497
        %v2132 = vunpack.c.h.b16 %v1497
        %v2133 = vunpack.c.l.b16 %v1498
        %v2134 = vunpack.c.h.b16 %v1498
        %v2135 = vunpack.c.l.b16 %v1499
        %v2136 = vunpack.c.h.b16 %v1499
        %v2137 = vunpack.c.l.b16 %v1500
        %v2138 = vunpack.c.h.b16 %v1500
        %v2139 = vunpack.c.l.b16 %v1501
        %v2140 = vunpack.c.h.b16 %v1501
        %v2141 = vunpack.c.l.b16 %v1502
        %v2142 = vunpack.c.h.b16 %v1502
        %v2143 = vunpack.c.l.b16 %v1503
        %v2144 = vunpack.c.h.b16 %v1503
        %v2145 = vunpack.c.l.b16 %v1504
        %v2146 = vunpack.c.h.b16 %v1504
        %v2147 = vunpack.c.l.b16 %v1505
        %v2148 = vunpack.c.h.b16 %v1505
        %v2149 = vunpack.c.l.b16 %v1506
        %v2150 = vunpack.c.h.b16 %v1506
        %v2151 = vunpack.c.l.b16 %v1507
        %v2152 = vunpack.c.h.b16 %v1507
        %v2153 = vunpack.c.l.b16 %v1508
        %v2154 = vunpack.c.h.b16 %v1508
        %v2155 = vunpack.c.l.b16 %v1509
        %v2156 = vunpack.c.h.b16 %v1509
        %v2157 = vunpack.c.l.b16 %v1510
        %v2158 = vunpack.c.h.b16 %v1510
        %v2159 = vunpack.c.l.b16 %v1511
        %v2160 = vunpack.c.h.b16 %v1511
        %v2161 = vunpack.c.l.b16 %v1512
        %v2162 = vunpack.c.h.b16 %v1512
        %v2163 = vunpack.c.l.b16 %v1513
        %v2164 = vunpack.c.h.b16 %v1513
        %v2165 = vunpack.c.l.b16 %v1514
        %v2166 = vunpack.c.h.b16 %v1514
        %v2167 = vunpack.c.l.b16 %v1515
        %v2168 = vunpack.c.h.b16 %v1515
        %v2169 = vunpack.c.l.b16 %v1516
        %v2170 = vunpack.c.h.b16 %v1516
        %v2171 = vunpack.c.l.b16 %v1517
        %v2172 = vunpack.c.h.b16 %v1517
        %v2173 = vunpack.c.l.b16 %v1518
        %v2174 = vunpack.c.h.b16 %v1518
        %v2175 = vunpack.c.l.b16 %v1519
        %v2176 = vunpack.c.h.b16 %v1519
        %v2177 = vunpack.c.l.b16 %v1520
        %v2178 = vunpack.c.h.b16 %v1520
        %v2179 = vunpack.c.l.b16 %v1521
        %v2180 = vunpack.c.h.b16 %v1521
        %v2181 = vunpack.c.l.b16 %v1522
        %v2182 = vunpack.c.h.b16 %v1522
        %v2183 = vunpack.c.l.b16 %v1523
        %v2184 = vunpack.c.h.b16 %v1523
        %v2185 = vunpack.c.l.b16 %v1524
        %v2186 = vunpack.c.h.b16 %v1524
        %v2187 = vunpack.c.l.b16 %v1525
        %v2188 = vunpack.c.h.b16 %v1525
        %v2189 = vunpack.c.l.b16 %v1526
        %v2190 = vunpack.c.h.b16 %v1526
        %v2191 = vunpack.c.l.b16 %v1527
        %v2192 = vunpack.c.h.b16 %v1527
        %v2193 = vunpack.c.l.b16 %v1528
        %v2194 = vunpack.c.h.b16 %v1528
        %v2195 = vunpack.c.l.b16 %v1529
        %v2196 = vunpack.c.h.b16 %v1529
        %v2197 = vunpack.c.l.b16 %v1530
        %v2198 = vunpack.c.h.b16 %v1530
        %v2199 = vunpack.c.l.b16 %v1531
        %v2200 = vunpack.c.h.b16 %v1531
        %v2201 = vunpack.c.l.b16 %v1532
        %v2202 = vunpack.c.h.b16 %v1532
        %v2203 = vunpack.c.l.b16 %v1533
        %v2204 = vunpack.c.h.b16 %v1533
        %v2205 = vunpack.c.l.b16 %v1534
        %v2206 = vunpack.c.h.b16 %v1534
        %v2207 = vunpack.c.l.b16 %v1535
        %v2208 = vunpack.c.h.b16 %v1535
        %v2209 = vunpack.c.l.b16 %v1536
        %v2210 = vunpack.c.h.b16 %v1536
        %v2211 = vunpack.c.l.b16 %v1537
        %v2212 = vunpack.c.h.b16 %v1537
        %v2213 = vunpack.c.l.b16 %v1538
        %v2214 = vunpack.c.h.b16 %v1538
        %v2215 = vunpack.c.l.b16 %v1539
        %v2216 = vunpack.c.h.b16 %v1539
        %v2217 = vunpack.c.l.b16 %v1540
        %v2218 = vunpack.c.h.b16 %v1540
        %v2219 = vunpack.c.l.b16 %v1541
        %v2220 = vunpack.c.h.b16 %v1541
        %v2221 = vunpack.c.l.b16 %v1542
        %v2222 = vunpack.c.h.b16 %v1542
        %v2223 = vunpack.c.l.b16 %v1543
        %v2224 = vunpack.c.h.b16 %v1543
        %v2225 = vunpack.c.l.b16 %v1544
        %v2226 = vunpack.c.h.b16 %v1544
        %v2227 = vunpack.c.l.b16 %v1545
        %v2228 = vunpack.c.h.b16 %v1545
        %v2229 = vunpack.c.l.b16 %v1546
        %v2230 = vunpack.c.h.b16 %v1546
        %v2231 = vunpack.c.l.b16 %v1547
        %v2232 = vunpack.c.h.b16 %v1547
        %v2233 = vunpack.c.l.b16 %v1548
        %v2234 = vunpack.c.h.b16 %v1548
        %v2235 = vunpack.c.l.b16 %v1549
        %v2236 = vunpack.c.h.b16 %v1549
        %v2237 = vunpack.c.l.b16 %v1550
        %v2238 = vunpack.c.h.b16 %v1550
        %v2239 = vunpack.c.l.b16 %v1551
        %v2240 = vunpack.c.h.b16 %v1551
        %v2241 = vunpack.c.l.b16 %v1552
        %v2242 = vunpack.c.h.b16 %v1552
        %v2243 = vunpack.c.l.b16 %v1553
        %v2244 = vunpack.c.h.b16 %v1553
        %v2245 = vunpack.c.l.b16 %v1554
        %v2246 = vunpack.c.h.b16 %v1554
        %v2247 = vunpack.c.l.b16 %v1555
        %v2248 = vunpack.c.h.b16 %v1555
        %v2249 = vunpack.c.l.b16 %v1556
        %v2250 = vunpack.c.h.b16 %v1556
        %v2251 = vunpack.c.l.b16 %v1557
        %v2252 = vunpack.c.h.b16 %v1557
        %v2253 = vunpack.c.l.b16 %v1558
        %v2254 = vunpack.c.h.b16 %v1558
        %v2255 = vunpack.c.l.b16 %v1559
        %v2256 = vunpack.c.h.b16 %v1559
        %v2257 = vunpack.c.l.b16 %v1560
        %v2258 = vunpack.c.h.b16 %v1560
        %v2259 = vunpack.c.l.b16 %v1561
        %v2260 = vunpack.c.h.b16 %v1561
        %v2261 = vunpack.c.l.b16 %v1562
        %v2262 = vunpack.c.h.b16 %v1562
        %v2263 = vunpack.c.l.b16 %v1563
        %v2264 = vunpack.c.h.b16 %v1563
        %v2265 = vunpack.c.l.b16 %v1564
        %v2266 = vunpack.c.h.b16 %v1564
        %v2267 = vunpack.c.l.b16 %v1565
        %v2268 = vunpack.c.h.b16 %v1565
        %v2269 = vunpack.c.l.b16 %v1566
        %v2270 = vunpack.c.h.b16 %v1566
        %v2271 = vunpack.c.l.b16 %v1567
        %v2272 = vunpack.c.h.b16 %v1567
        %v2273 = vunpack.c.l.b16 %v1568
        %v2274 = vunpack.c.h.b16 %v1568
        %v2275 = vunpack.c.l.b16 %v1569
        %v2276 = vunpack.c.h.b16 %v1569
        %v2277 = vunpack.c.l.b16 %v1570
        %v2278 = vunpack.c.h.b16 %v1570
        %v2279 = vunpack.c.l.b16 %v1571
        %v2280 = vunpack.c.h.b16 %v1571
        %v2281 = vunpack.c.l.b16 %v1572
        %v2282 = vunpack.c.h.b16 %v1572
        %v2283 = vunpack.c.l.b16 %v1573
        %v2284 = vunpack.c.h.b16 %v1573
        %v2285 = vunpack.c.l.b16 %v1574
        %v2286 = vunpack.c.h.b16 %v1574
        %v2287 = vunpack.c.l.b16 %v1575
        %v2288 = vunpack.c.h.b16 %v1575
        %v2289 = vunpack.c.l.b16 %v1576
        %v2290 = vunpack.c.h.b16 %v1576
        %v2291 = vunpack.c.l.b16 %v1577
        %v2292 = vunpack.c.h.b16 %v1577
        %v2293 = vunpack.c.l.b16 %v1578
        %v2294 = vunpack.c.h.b16 %v1578
        %v2295 = vunpack.c.l.b16 %v1579
        %v2296 = vunpack.c.h.b16 %v1579
        %v2297 = vunpack.c.l.b16 %v1580
        %v2298 = vunpack.c.h.b16 %v1580
        %v2299 = vunpack.c.l.b16 %v1581
        %v2300 = vunpack.c.h.b16 %v1581
        %v2301 = vunpack.c.l.b16 %v1582
        %v2302 = vunpack.c.h.b16 %v1582
        %v2303 = vunpack.c.l.b16 %v1583
        %v2304 = vunpack.c.h.b16 %v1583
        %v2305 = vunpack.c.l.b16 %v1584
        %v2306 = vunpack.c.h.b16 %v1584
        %v2307 = vunpack.c.l.b16 %v1585
        %v2308 = vunpack.c.h.b16 %v1585
        %v2309 = vunpack.c.l.b16 %v1586
        %v2310 = vunpack.c.h.b16 %v1586
        %v2311 = vunpack.c.l.b16 %v1587
        %v2312 = vunpack.c.h.b16 %v1587
        %v2313 = vunpack.c.l.b16 %v1588
        %v2314 = vunpack.c.h.b16 %v1588
        %v2315 = vunpack.c.l.b16 %v1589
        %v2316 = vunpack.c.h.b16 %v1589
        %v2317 = vunpack.c.l.b16 %v1590
        %v2318 = vunpack.c.h.b16 %v1590
        %v2319 = vunpack.c.l.b16 %v1591
        %v2320 = vunpack.c.h.b16 %v1591
        %v2321 = vunpack.c.l.b16 %v1592
        %v2322 = vunpack.c.h.b16 %v1592
        %v2323 = vunpack.c.l.b16 %v1593
        %v2324 = vunpack.c.h.b16 %v1593
        %v2325 = vunpack.c.l.b16 %v1594
        %v2326 = vunpack.c.h.b16 %v1594
        %v2327 = vunpack.c.l.b16 %v1595
        %v2328 = vunpack.c.h.b16 %v1595
        %v2329 = vunpack.c.l.b16 %v1596
        %v2330 = vunpack.c.h.b16 %v1596
        %v2331 = vunpack.c.l.b16 %v1597
        %v2332 = vunpack.c.h.b16 %v1597
        %v2333 = vunpack.c.l.b16 %v1598
        %v2334 = vunpack.c.h.b16 %v1598
        %v2335 = vunpack.c.l.b16 %v1599
        %v2336 = vunpack.c.h.b16 %v1599
        %v2337 = vunpack.c.l.b16 %v1600
        %v2338 = vunpack.c.h.b16 %v1600
        %v2339 = vunpack.c.l.b16 %v1601
        %v2340 = vunpack.c.h.b16 %v1601
        %v2341 = vunpack.c.l.b16 %v1602
        %v2342 = vunpack.c.h.b16 %v1602
        %v2343 = vunpack.c.l.b16 %v1603
        %v2344 = vunpack.c.h.b16 %v1603
        %v2345 = vunpack.c.l.b16 %v1604
        %v2346 = vunpack.c.h.b16 %v1604
        %v2347 = vunpack.c.l.b16 %v1605
        %v2348 = vunpack.c.h.b16 %v1605
        %v2349 = vunpack.c.l.b16 %v1606
        %v2350 = vunpack.c.h.b16 %v1606
        %v2351 = vunpack.c.l.b16 %v1607
        %v2352 = vunpack.c.h.b16 %v1607
        %v2353 = vunpack.c.l.b16 %v1608
        %v2354 = vunpack.c.h.b16 %v1608
        %v2355 = vunpack.c.l.b16 %v1609
        %v2356 = vunpack.c.h.b16 %v1609
        %v2357 = vunpack.c.l.b16 %v1610
        %v2358 = vunpack.c.h.b16 %v1610
        %v2359 = vunpack.c.l.b16 %v1611
        %v2360 = vunpack.c.h.b16 %v1611
        %v2361 = vunpack.c.l.b16 %v1612
        %v2362 = vunpack.c.h.b16 %v1612
        %v2363 = vunpack.c.l.b16 %v1613
        %v2364 = vunpack.c.h.b16 %v1613
        %v2365 = vunpack.c.l.b16 %v1614
        %v2366 = vunpack.c.h.b16 %v1614
        %v2367 = vunpack.c.l.b16 %v1615
        %v2368 = vunpack.c.h.b16 %v1615
        %v2369 = vunpack.c.l.b16 %v1616
        %v2370 = vunpack.c.h.b16 %v1616
        %v2371 = vunpack.c.l.b16 %v1617
        %v2372 = vunpack.c.h.b16 %v1617
        %v2373 = vunpack.c.l.b16 %v1618
        %v2374 = vunpack.c.h.b16 %v1618
        %v2375 = vunpack.c.l.b16 %v1619
        %v2376 = vunpack.c.h.b16 %v1619
        %v2377 = vunpack.c.l.b16 %v1620
        %v2378 = vunpack.c.h.b16 %v1620
        %v2379 = vunpack.c.l.b16 %v1621
        %v2380 = vunpack.c.h.b16 %v1621
        %v2381 = vunpack.c.l.b16 %v1622
        %v2382 = vunpack.c.h.b16 %v1622
        %v2383 = vunpack.c.l.b16 %v1623
        %v2384 = vunpack.c.h.b16 %v1623
        %v2385 = vunpack.c.l.b16 %v1624
        %v2386 = vunpack.c.h.b16 %v1624
        %v2387 = vunpack.c.l.b16 %v1625
        %v2388 = vunpack.c.h.b16 %v1625
        %v2389 = vunpack.c.l.b16 %v1626
        %v2390 = vunpack.c.h.b16 %v1626
        %v2391 = vunpack.c.l.b16 %v1627
        %v2392 = vunpack.c.h.b16 %v1627
        %v2393 = vunpack.c.l.b16 %v1628
        %v2394 = vunpack.c.h.b16 %v1628
        %v2395 = vunpack.c.l.b16 %v1629
        %v2396 = vunpack.c.h.b16 %v1629
        %v2397 = vunpack.c.l.b16 %v1630
        %v2398 = vunpack.c.h.b16 %v1630
        %v2399 = vunpack.c.l.b16 %v1631
        %v2400 = vunpack.c.h.b16 %v1631
        %v2401 = vunpack.c.l.b16 %v1632
        %v2402 = vunpack.c.h.b16 %v1632
        %v2403 = vunpack.c.l.b16 %v1633
        %v2404 = vunpack.c.h.b16 %v1633
        %v2405 = vunpack.c.l.b16 %v1634
        %v2406 = vunpack.c.h.b16 %v1634
        %v2407 = vunpack.c.l.b16 %v1635
        %v2408 = vunpack.c.h.b16 %v1635
        %v2409 = vunpack.c.l.b16 %v1636
        %v2410 = vunpack.c.h.b16 %v1636
        %v2411 = vunpack.c.l.b16 %v1637
        %v2412 = vunpack.c.h.b16 %v1637
        %v2413 = vunpack.c.l.b16 %v1638
        %v2414 = vunpack.c.h.b16 %v1638
        %v2415 = vunpack.c.l.b16 %v1639
        %v2416 = vunpack.c.h.b16 %v1639
        %v2417 = vunpack.c.l.b16 %v1640
        %v2418 = vunpack.c.h.b16 %v1640
        %v2419 = vunpack.c.l.b16 %v1641
        %v2420 = vunpack.c.h.b16 %v1641
        %v2421 = vunpack.c.l.b16 %v1642
        %v2422 = vunpack.c.h.b16 %v1642
        %v2423 = vunpack.c.l.b16 %v1643
        %v2424 = vunpack.c.h.b16 %v1643
        %v2425 = vunpack.c.l.b16 %v1644
        %v2426 = vunpack.c.h.b16 %v1644
        %v2427 = vunpack.c.l.b16 %v1645
        %v2428 = vunpack.c.h.b16 %v1645
        %v2429 = vunpack.c.l.b16 %v1646
        %v2430 = vunpack.c.h.b16 %v1646
        %v2431 = vunpack.c.l.b16 %v1647
        %v2432 = vunpack.c.h.b16 %v1647
        %v2433 = vunpack.c.l.b16 %v1648
        %v2434 = vunpack.c.h.b16 %v1648
        %v2435 = vunpack.c.l.b16 %v1649
        %v2436 = vunpack.c.h.b16 %v1649
        %v2437 = vunpack.c.l.b16 %v1650
        %v2438 = vunpack.c.h.b16 %v1650
        %v2439 = vunpack.c.l.b16 %v1651
        %v2440 = vunpack.c.h.b16 %v1651
        %v2441 = vunpack.c.l.b16 %v1652
        %v2442 = vunpack.c.h.b16 %v1652
        %v2443 = vunpack.c.l.b16 %v1653
        %v2444 = vunpack.c.h.b16 %v1653
        %v2445 = vunpack.c.l.b16 %v1654
        %v2446 = vunpack.c.h.b16 %v1654
        %v2447 = vunpack.c.l.b16 %v1655
        %v2448 = vunpack.c.h.b16 %v1655
        %v2449 = vunpack.c.l.b16 %v1656
        %v2450 = vunpack.c.h.b16 %v1656
        %v2451 = vunpack.c.l.b16 %v1657
        %v2452 = vunpack.c.h.b16 %v1657
        %v2453 = vunpack.c.l.b16 %v1658
        %v2454 = vunpack.c.h.b16 %v1658
        %v2455 = vunpack.c.l.b16 %v1659
        %v2456 = vunpack.c.h.b16 %v1659
        %v2457 = vunpack.c.l.b16 %v1660
        %v2458 = vunpack.c.h.b16 %v1660
        %v2459 = vunpack.c.l.b16 %v1661
        %v2460 = vunpack.c.h.b16 %v1661
        %v2461 = vunpack.c.l.b16 %v1662
        %v2462 = vunpack.c.h.b16 %v1662
        %v2463 = vunpack.c.l.b16 %v1663
        %v2464 = vunpack.c.h.b16 %v1663
        %v2465 = vunpack.c.l.b16 %v1664
        %v2466 = vunpack.c.h.b16 %v1664
        %v2467 = vunpack.c.l.b16 %v1665
        %v2468 = vunpack.c.h.b16 %v1665
        %v2469 = vunpack.c.l.b16 %v1666
        %v2470 = vunpack.c.h.b16 %v1666
        %v2471 = vunpack.c.l.b16 %v1667
        %v2472 = vunpack.c.h.b16 %v1667
        %v2473 = vunpack.c.l.b16 %v1668
        %v2474 = vunpack.c.h.b16 %v1668
        %v2475 = vunpack.c.l.b16 %v1669
        %v2476 = vunpack.c.h.b16 %v1669
        %v2477 = vunpack.c.l.b16 %v1670
        %v2478 = vunpack.c.h.b16 %v1670
        %v2479 = vunpack.c.l.b16 %v1671
        %v2480 = vunpack.c.h.b16 %v1671
        %v2481 = vunpack.c.l.b16 %v1672
        %v2482 = vunpack.c.h.b16 %v1672
        %v2483 = vpack.c.b16 %v1979, %v1971
        %v2484 = vpack.c.b16 %v1980, %v1972
        %v2485 = vpack.c.b16 %v1981, %v1973
        %v2486 = vpack.c.b16 %v1982, %v1974
        %v2487 = vpack.c.b16 %v1983, %v1975
        %v2488 = vpack.c.b16 %v1984, %v1976
        %v2489 = vpack.c.b16 %v1985, %v1977
        %v2490 = vpack.c.b16 %v1986, %v1978
        %v2491 = vpack.c.b16 %v1995, %v1987
        %v2492 = vpack.c.b16 %v1996, %v1988
        %v2493 = vpack.c.b16 %v1997, %v1989
        %v2494 = vpack.c.b16 %v1998, %v1990
        %v2495 = vpack.c.b16 %v1999, %v1991
        %v2496 = vpack.c.b16 %v2000, %v1992
        %v2497 = vpack.c.b16 %v2001, %v1993
        %v2498 = vpack.c.b16 %v2002, %v1994
        %v2499 = vpack.c.b16 %v2011, %v2003
        %v2500 = vpack.c.b16 %v2012, %v2004
        %v2501 = vpack.c.b16 %v2013, %v2005
        %v2502 = vpack.c.b16 %v2014, %v2006
        %v2503 = vpack.c.b16 %v2015, %v2007
        %v2504 = vpack.c.b16 %v2016, %v2008
        %v2505 = vpack.c.b16 %v2017, %v2009
        %v2506 = vpack.c.b16 %v2018, %v2010
        %v2507 = vpack.c.b16 %v2027, %v2019
        %v2508 = vpack.c.b16 %v2028, %v2020
        %v2509 = vpack.c.b16 %v2029, %v2021
        %v2510 = vpack.c.b16 %v2030, %v2022
        %v2511 = vpack.c.b16 %v2031, %v2023
        %v2512 = vpack.c.b16 %v2032, %v2024
        %v2513 = vpack.c.b16 %v2033, %v2025
        %v2514 = vpack.c.b16 %v2034, %v2026
        %v2515 = vpack.c.b16 %v2043, %v2035
        %v2516 = vpack.c.b16 %v2044, %v2036
        %v2517 = vpack.c.b16 %v2045, %v2037
        %v2518 = vpack.c.b16 %v2046, %v2038
        %v2519 = vpack.c.b16 %v2047, %v2039
        %v2520 = vpack.c.b16 %v2048, %v2040
        %v2521 = vpack.c.b16 %v2049, %v2041
        %v2522 = vpack.c.b16 %v2050, %v2042
        %v2523 = vpack.c.b16 %v2059, %v2051
        %v2524 = vpack.c.b16 %v2060, %v2052
        %v2525 = vpack.c.b16 %v2061, %v2053
        %v2526 = vpack.c.b16 %v2062, %v2054
        %v2527 = vpack.c.b16 %v2063, %v2055
        %v2528 = vpack.c.b16 %v2064, %v2056
        %v2529 = vpack.c.b16 %v2065, %v2057
        %v2530 = vpack.c.b16 %v2066, %v2058
        %v2531 = vpack.c.b16 %v2075, %v2067
        %v2532 = vpack.c.b16 %v2076, %v2068
        %v2533 = vpack.c.b16 %v2077, %v2069
        %v2534 = vpack.c.b16 %v2078, %v2070
        %v2535 = vpack.c.b16 %v2079, %v2071
        %v2536 = vpack.c.b16 %v2080, %v2072
        %v2537 = vpack.c.b16 %v2081, %v2073
        %v2538 = vpack.c.b16 %v2082, %v2074
        %v2539 = vpack.c.b16 %v2091, %v2083
        %v2540 = vpack.c.b16 %v2092, %v2084
        %v2541 = vpack.c.b16 %v2093, %v2085
        %v2542 = vpack.c.b16 %v2094, %v2086
        %v2543 = vpack.c.b16 %v2095, %v2087
        %v2544 = vpack.c.b16 %v2096, %v2088
        %v2545 = vpack.c.b16 %v2097, %v2089
        %v2546 = vpack.c.b16 %v2098, %v2090
        %v2547 = vpack.c.b16 %v2107, %v2099
        %v2548 = vpack.c.b16 %v2108, %v2100
        %v2549 = vpack.c.b16 %v2109, %v2101
        %v2550 = vpack.c.b16 %v2110, %v2102
        %v2551 = vpack.c.b16 %v2111, %v2103
        %v2552 = vpack.c.b16 %v2112, %v2104
        %v2553 = vpack.c.b16 %v2113, %v2105
        %v2554 = vpack.c.b16 %v2114, %v2106
        %v2555 = vpack.c.b16 %v2123, %v2115
        %v2556 = vpack.c.b16 %v2124, %v2116
        %v2557 = vpack.c.b16 %v2125, %v2117
        %v2558 = vpack.c.b16 %v2126, %v2118
        %v2559 = vpack.c.b16 %v2127, %v2119
        %v2560 = vpack.c.b16 %v2128, %v2120
        %v2561 = vpack.c.b16 %v2129, %v2121
        %v2562 = vpack.c.b16 %v2130, %v2122
        %v2563 = vpack.c.b16 %v2139, %v2131
        %v2564 = vpack.c.b16 %v2140, %v2132
        %v2565 = vpack.c.b16 %v2141, %v2133
        %v2566 = vpack.c.b16 %v2142, %v2134
        %v2567 = vpack.c.b16 %v2143, %v2135
        %v2568 = vpack.c.b16 %v2144, %v2136
        %v2569 = vpack.c.b16 %v2145, %v2137
        %v2570 = vpack.c.b16 %v2146, %v2138
        %v2571 = vpack.c.b16 %v2155, %v2147
        %v2572 = vpack.c.b16 %v2156, %v2148
        %v2573 = vpack.c.b16 %v2157, %v2149
        %v2574 = vpack.c.b16 %v2158, %v2150
        %v2575 = vpack.c.b16 %v2159, %v2151
        %v2576 = vpack.c.b16 %v2160, %v2152
        %v2577 = vpack.c.b16 %v2161, %v2153
        %v2578 = vpack.c.b16 %v2162, %v2154
        %v2579 = vpack.c.b16 %v2171, %v2163
        %v2580 = vpack.c.b16 %v2172, %v2164
        %v2581 = vpack.c.b16 %v2173, %v2165
        %v2582 = vpack.c.b16 %v2174, %v2166
        %v2583 = vpack.c.b16 %v2175, %v2167
        %v2584 = vpack.c.b16 %v2176, %v2168
        %v2585 = vpack.c.b16 %v2177, %v2169
        %v2586 = vpack.c.b16 %v2178, %v2170
        %v2587 = vpack.c.b16 %v2187, %v2179
        %v2588 = vpack.c.b16 %v2188, %v2180
        %v2589 = vpack.c.b16 %v2189, %v2181
        %v2590 = vpack.c.b16 %v2190, %v2182
        %v2591 = vpack.c.b16 %v2191, %v2183
        %v2592 = vpack.c.b16 %v2192, %v2184
        %v2593 = vpack.c.b16 %v2193, %v2185
        %v2594 = vpack.c.b16 %v2194, %v2186
        %v2595 = vpack.c.b16 %v2203, %v2195
        %v2596 = vpack.c.b16 %v2204, %v2196
        %v2597 = vpack.c.b16 %v2205, %v2197
        %v2598 = vpack.c.b16 %v2206, %v2198
        %v2599 = vpack.c.b16 %v2207, %v2199
        %v2600 = vpack.c.b16 %v2208, %v2200
        %v2601 = vpack.c.b16 %v2209, %v2201
        %v2602 = vpack.c.b16 %v2210, %v2202
        %v2603 = vpack.c.b16 %v2219, %v2211
        %v2604 = vpack.c.b16 %v2220, %v2212
        %v2605 = vpack.c.b16 %v2221, %v2213
        %v2606 = vpack.c.b16 %v2222, %v2214
        %v2607 = vpack.c.b16 %v2223, %v2215
        %v2608 = vpack.c.b16 %v2224, %v2216
        %v2609 = vpack.c.b16 %v2225, %v2217
        %v2610 = vpack.c.b16 %v2226, %v2218
        %v2611 = vpack.c.b16 %v2235, %v2227
        %v2612 = vpack.c.b16 %v2236, %v2228
        %v2613 = vpack.c.b16 %v2237, %v2229
        %v2614 = vpack.c.b16 %v2238, %v2230
        %v2615 = vpack.c.b16 %v2239, %v2231
        %v2616 = vpack.c.b16 %v2240, %v2232
        %v2617 = vpack.c.b16 %v2241, %v2233
        %v2618 = vpack.c.b16 %v2242, %v2234
        %v2619 = vpack.c.b16 %v2251, %v2243
        %v2620 = vpack.c.b16 %v2252, %v2244
        %v2621 = vpack.c.b16 %v2253, %v2245
        %v2622 = vpack.c.b16 %v2254, %v2246
        %v2623 = vpack.c.b16 %v2255, %v2247
        %v2624 = vpack.c.b16 %v2256, %v2248
        %v2625 = vpack.c.b16 %v2257, %v2249
        %v2626 = vpack.c.b16 %v2258, %v2250
        %v2627 = vpack.c.b16 %v2267, %v2259
        %v2628 = vpack.c.b16 %v2268, %v2260
        %v2629 = vpack.c.b16 %v2269, %v2261
        %v2630 = vpack.c.b16 %v2270, %v2262
        %v2631 = vpack.c.b16 %v2271, %v2263
        %v2632 = vpack.c.b16 %v2272, %v2264
        %v2633 = vpack.c.b16 %v2273, %v2265
        %v2634 = vpack.c.b16 %v2274, %v2266
        %v2635 = vpack.c.b16 %v2283, %v2275
        %v2636 = vpack.c.b16 %v2284, %v2276
        %v2637 = vpack.c.b16 %v2285, %v2277
        %v2638 = vpack.c.b16 %v2286, %v2278
        %v2639 = vpack.c.b16 %v2287, %v2279
        %v2640 = vpack.c.b16 %v2288, %v2280
        %v2641 = vpack.c.b16 %v2289, %v2281
        %v2642 = vpack.c.b16 %v2290, %v2282
        %v2643 = vpack.c.b16 %v2299, %v2291
        %v2644 = vpack.c.b16 %v2300, %v2292
        %v2645 = vpack.c.b16 %v2301, %v2293
        %v2646 = vpack.c.b16 %v2302, %v2294
        %v2647 = vpack.c.b16 %v2303, %v2295
        %v2648 = vpack.c.b16 %v2304, %v2296
        %v2649 = vpack.c.b16 %v2305, %v2297
        %v2650 = vpack.c.b16 %v2306, %v2298
        %v2651 = vpack.c.b16 %v2315, %v2307
        %v2652 = vpack.c.b16 %v2316, %v2308
        %v2653 = vpack.c.b16 %v2317, %v2309
        %v2654 = vpack.c.b16 %v2318, %v2310
        %v2655 = vpack.c.b16 %v2319, %v2311
        %v2656 = vpack.c.b16 %v2320, %v2312
        %v2657 = vpack.c.b16 %v2321, %v2313
        %v2658 = vpack.c.b16 %v2322, %v2314
        %v2659 = vpack.c.b16 %v2331, %v2323
        %v2660 = vpack.c.b16 %v2332, %v2324
        %v2661 = vpack.c.b16 %v2333, %v2325
        %v2662 = vpack.c.b16 %v2334, %v2326
        %v2663 = vpack.c.b16 %v2335, %v2327
        %v2664 = vpack.c.b16 %v2336, %v2328
        %v2665 = vpack.c.b16 %v2337, %v2329
        %v2666 = vpack.c.b16 %v2338, %v2330
        %v2667 = vpack.c.b16 %v2347, %v2339
        %v2668 = vpack.c.b16 %v2348, %v2340
        %v2669 = vpack.c.b16 %v2349, %v2341
        %v2670 = vpack.c.b16 %v2350, %v2342
        %v2671 = vpack.c.b16 %v2351, %v2343
        %v2672 = vpack.c.b16 %v2352, %v2344
        %v2673 = vpack.c.b16 %v2353, %v2345
        %v2674 = vpack.c.b16 %v2354, %v2346
        %v2675 = vpack.c.b16 %v2363, %v2355
        %v2676 = vpack.c.b16 %v2364, %v2356
        %v2677 = vpack.c.b16 %v2365, %v2357
        %v2678 = vpack.c.b16 %v2366, %v2358
        %v2679 = vpack.c.b16 %v2367, %v2359
        %v2680 = vpack.c.b16 %v2368, %v2360
        %v2681 = vpack.c.b16 %v2369, %v2361
        %v2682 = vpack.c.b16 %v2370, %v2362
        %v2683 = vpack.c.b16 %v2379, %v2371
        %v2684 = vpack.c.b16 %v2380, %v2372
        %v2685 = vpack.c.b16 %v2381, %v2373
        %v2686 = vpack.c.b16 %v2382, %v2374
        %v2687 = vpack.c.b16 %v2383, %v2375
        %v2688 = vpack.c.b16 %v2384, %v2376
        %v2689 = vpack.c.b16 %v2385, %v2377
        %v2690 = vpack.c.b16 %v2386, %v2378
        %v2691 = vpack.c.b16 %v2395, %v2387
        %v2692 = vpack.c.b16 %v2396, %v2388
        %v2693 = vpack.c.b16 %v2397, %v2389
        %v2694 = vpack.c.b16 %v2398, %v2390
        %v2695 = vpack.c.b16 %v2399, %v2391
        %v2696 = vpack.c.b16 %v2400, %v2392
        %v2697 = vpack.c.b16 %v2401, %v2393
        %v2698 = vpack.c.b16 %v2402, %v2394
        %v2699 = vpack.c.b16 %v2411, %v2403
        %v2700 = vpack.c.b16 %v2412, %v2404
        %v2701 = vpack.c.b16 %v2413, %v2405
        %v2702 = vpack.c.b16 %v2414, %v2406
        %v2703 = vpack.c.b16 %v2415, %v2407
        %v2704 = vpack.c.b16 %v2416, %v2408
        %v2705 = vpack.c.b16 %v2417, %v2409
        %v2706 = vpack.c.b16 %v2418, %v2410
        %v2707 = vpack.c.b16 %v2427, %v2419
        %v2708 = vpack.c.b16 %v2428, %v2420
        %v2709 = vpack.c.b16 %v2429, %v2421
        %v2710 = vpack.c.b16 %v2430, %v2422
        %v2711 = vpack.c.b16 %v2431, %v2423
        %v2712 = vpack.c.b16 %v2432, %v2424
        %v2713 = vpack.c.b16 %v2433, %v2425
        %v2714 = vpack.c.b16 %v2434, %v2426
        %v2715 = vpack.c.b16 %v2443, %v2435
        %v2716 = vpack.c.b16 %v2444, %v2436
        %v2717 = vpack.c.b16 %v2445, %v2437
        %v2718 = vpack.c.b16 %v2446, %v2438
        %v2719 = vpack.c.b16 %v2447, %v2439
        %v2720 = vpack.c.b16 %v2448, %v2440
        %v2721 = vpack.c.b16 %v2449, %v2441
        %v2722 = vpack.c.b16 %v2450, %v2442
        %v2723 = vpack.c.b16 %v2459, %v2451
        %v2724 = vpack.c.b16 %v2460, %v2452
        %v2725 = vpack.c.b16 %v2461, %v2453
        %v2726 = vpack.c.b16 %v2462, %v2454
        %v2727 = vpack.c.b16 %v2463, %v2455
        %v2728 = vpack.c.b16 %v2464, %v2456
        %v2729 = vpack.c.b16 %v2465, %v2457
        %v2730 = vpack.c.b16 %v2466, %v2458
        %v2731 = vpack.c.b16 %v2475, %v2467
        %v2732 = vpack.c.b16 %v2476, %v2468
        %v2733 = vpack.c.b16 %v2477, %v2469
        %v2734 = vpack.c.b16 %v2478, %v2470
        %v2735 = vpack.c.b16 %v2479, %v2471
        %v2736 = vpack.c.b16 %v2480, %v2472
        %v2737 = vpack.c.b16 %v2481, %v2473
        %v2738 = vpack.c.b16 %v2482, %v2474
        %2995 = vmatprep.subr.bf16.mxu0 %v2484
        %2996 = vmatpush1.bf16.msra.mxu0 %v2483
        %2997 = vmatprep.subr.bf16.mxu0 %v2492
        %2998 = vmatpush1.bf16.msra.mxu0 %v2491
        %2999 = vmatprep.subr.bf16.mxu0 %v2500
        %3000 = vmatpush1.bf16.msra.mxu0 %v2499
        %3001 = vmatprep.subr.bf16.mxu0 %v2508
        %3002 = vmatpush1.bf16.msra.mxu0 %v2507
        %3003 = vmatprep.subr.bf16.mxu0 %v2516
        %3004 = vmatpush1.bf16.msra.mxu0 %v2515
        %3005 = vmatprep.subr.bf16.mxu0 %v2524
        %3006 = vmatpush1.bf16.msra.mxu0 %v2523
        %3007 = vmatprep.subr.bf16.mxu0 %v2532
        %3008 = vmatpush1.bf16.msra.mxu0 %v2531
        %3009 = vmatprep.subr.bf16.mxu0 %v2540
        %3010 = vmatpush1.bf16.msra.mxu0 %v2539
        %3011 = vmatprep.subr.bf16.mxu0 %v2548
        %3012 = vmatpush1.bf16.msra.mxu0 %v2547
        %3013 = vmatprep.subr.bf16.mxu0 %v2556
        %3014 = vmatpush1.bf16.msra.mxu0 %v2555
        %3015 = vmatprep.subr.bf16.mxu0 %v2564
        %3016 = vmatpush1.bf16.msra.mxu0 %v2563
        %3017 = vmatprep.subr.bf16.mxu0 %v2572
        %3018 = vmatpush1.bf16.msra.mxu0 %v2571
        %3019 = vmatprep.subr.bf16.mxu0 %v2580
        %3020 = vmatpush1.bf16.msra.mxu0 %v2579
        %3021 = vmatprep.subr.bf16.mxu0 %v2588
        %3022 = vmatpush1.bf16.msra.mxu0 %v2587
        %3023 = vmatprep.subr.bf16.mxu0 %v2596
        %3024 = vmatpush1.bf16.msra.mxu0 %v2595
        %3025 = vmatprep.subr.bf16.mxu0 %v2604
        %3026 = vmatpush1.bf16.msra.mxu0 %v2603
        %3027 = vmatprep.mubr.bf16.mxu0 %v1414
        %3028 = vmatmul.mubr.bf16.gmra.mrb[0].mxu0 %v1413
        %v3029 = vpop.f32.mrb[0].mxu0
        %v3030 = vadd.f32 %v1678, %v3029
        %v3031 = vpop.f32.mrb[0].mxu0
        %v3032 = vadd.f32 %v1682, %v3031
        %v3033 = vpop.f32.mrb[0].mxu0
        %v3034 = vadd.f32 %v1678, %v3033
        %v3035 = vpop.f32.mrb[0].mxu0
        %v3036 = vadd.f32 %v1682, %v3035
        %3037 = vdwg.mxu0
        %3038 = vmatprep.subr.bf16.mxu0 %v2612
        %3039 = vmatpush1.bf16.msra.mxu0 %v2611
        %3040 = vmatprep.subr.bf16.mxu0 %v2620
        %3041 = vmatpush1.bf16.msra.mxu0 %v2619
        %3042 = vmatprep.subr.bf16.mxu0 %v2628
        %3043 = vmatpush1.bf16.msra.mxu0 %v2627
        %3044 = vmatprep.subr.bf16.mxu0 %v2636
        %3045 = vmatpush1.bf16.msra.mxu0 %v2635
        %3046 = vmatprep.subr.bf16.mxu0 %v2644
        %3047 = vmatpush1.bf16.msra.mxu0 %v2643
        %3048 = vmatprep.subr.bf16.mxu0 %v2652
        %3049 = vmatpush1.bf16.msra.mxu0 %v2651
        %3050 = vmatprep.subr.bf16.mxu0 %v2660
        %3051 = vmatpush1.bf16.msra.mxu0 %v2659
        %3052 = vmatprep.subr.bf16.mxu0 %v2668
        %3053 = vmatpush1.bf16.msra.mxu0 %v2667
        %3054 = vmatprep.subr.bf16.mxu0 %v2676
        %3055 = vmatpush1.bf16.msra.mxu0 %v2675
        %3056 = vmatprep.subr.bf16.mxu0 %v2684
        %3057 = vmatpush1.bf16.msra.mxu0 %v2683
        %3058 = vmatprep.subr.bf16.mxu0 %v2692
        %3059 = vmatpush1.bf16.msra.mxu0 %v2691
        %3060 = vmatprep.subr.bf16.mxu0 %v2700
        %3061 = vmatpush1.bf16.msra.mxu0 %v2699
        %3062 = vmatprep.subr.bf16.mxu0 %v2708
        %3063 = vmatpush1.bf16.msra.mxu0 %v2707
        %3064 = vmatprep.subr.bf16.mxu0 %v2716
        %3065 = vmatpush1.bf16.msra.mxu0 %v2715
        %3066 = vmatprep.subr.bf16.mxu0 %v2724
        %3067 = vmatpush1.bf16.msra.mxu0 %v2723
        %3068 = vmatprep.subr.bf16.mxu0 %v2732
        %3069 = vmatpush1.bf16.msra.mxu0 %v2731
        %3070 = vmatprep.mubr.bf16.mxu0 %v1416
        %3071 = vmatmul.mubr.bf16.gmra.mrb[0].mxu0 %v1415
        %v3072 = vpop.f32.mrb[0].mxu0
        %v3073 = vadd.f32 %v3030, %v3072
        %v3074 = vpop.f32.mrb[0].mxu0
        %v3075 = vadd.f32 %v3032, %v3074
        %v3076 = vpop.f32.mrb[0].mxu0
        %v3077 = vadd.f32 %v3034, %v3076
        %v3078 = vpop.f32.mrb[0].mxu0
        %v3079 = vadd.f32 %v3036, %v3078
        %3080 = vdwg.mxu0
        %3081 = vmatprep.subr.bf16.mxu0 %v2486
        %3082 = vmatpush1.bf16.msra.mxu0 %v2485
        %3083 = vmatprep.subr.bf16.mxu0 %v2494
        %3084 = vmatpush1.bf16.msra.mxu0 %v2493
        %3085 = vmatprep.subr.bf16.mxu0 %v2502
        %3086 = vmatpush1.bf16.msra.mxu0 %v2501
        %3087 = vmatprep.subr.bf16.mxu0 %v2510
        %3088 = vmatpush1.bf16.msra.mxu0 %v2509
        %3089 = vmatprep.subr.bf16.mxu0 %v2518
        %3090 = vmatpush1.bf16.msra.mxu0 %v2517
        %3091 = vmatprep.subr.bf16.mxu0 %v2526
        %3092 = vmatpush1.bf16.msra.mxu0 %v2525
        %3093 = vmatprep.subr.bf16.mxu0 %v2534
        %3094 = vmatpush1.bf16.msra.mxu0 %v2533
        %3095 = vmatprep.subr.bf16.mxu0 %v2542
        %3096 = vmatpush1.bf16.msra.mxu0 %v2541
        %3097 = vmatprep.subr.bf16.mxu0 %v2550
        %3098 = vmatpush1.bf16.msra.mxu0 %v2549
        %3099 = vmatprep.subr.bf16.mxu0 %v2558
        %3100 = vmatpush1.bf16.msra.mxu0 %v2557
        %3101 = vmatprep.subr.bf16.mxu0 %v2566
        %3102 = vmatpush1.bf16.msra.mxu0 %v2565
        %3103 = vmatprep.subr.bf16.mxu0 %v2574
        %3104 = vmatpush1.bf16.msra.mxu0 %v2573
        %3105 = vmatprep.subr.bf16.mxu0 %v2582
        %3106 = vmatpush1.bf16.msra.mxu0 %v2581
        %3107 = vmatprep.subr.bf16.mxu0 %v2590
        %3108 = vmatpush1.bf16.msra.mxu0 %v2589
        %3109 = vmatprep.subr.bf16.mxu0 %v2598
        %3110 = vmatpush1.bf16.msra.mxu0 %v2597
        %3111 = vmatprep.subr.bf16.mxu0 %v2606
        %3112 = vmatpush1.bf16.msra.mxu0 %v2605
        %3113 = vmatprep.mubr.bf16.mxu0 %v1414
        %3114 = vmatmul.mubr.bf16.gmra.mrb[0].mxu0 %v1413
        %v3115 = vpop.f32.mrb[0].mxu0
        %v3116 = vadd.f32 %v1686, %v3115
        %v3117 = vpop.f32.mrb[0].mxu0
        %v3118 = vadd.f32 %v1690, %v3117
        %v3119 = vpop.f32.mrb[0].mxu0
        %v3120 = vadd.f32 %v1686, %v3119
        %v3121 = vpop.f32.mrb[0].mxu0
        %v3122 = vadd.f32 %v1690, %v3121
        %3123 = vdwg.mxu0
        %3124 = vmatprep.subr.bf16.mxu0 %v2614
        %3125 = vmatpush1.bf16.msra.mxu0 %v2613
        %3126 = vmatprep.subr.bf16.mxu0 %v2622
        %3127 = vmatpush1.bf16.msra.mxu0 %v2621
        %3128 = vmatprep.subr.bf16.mxu0 %v2630
        %3129 = vmatpush1.bf16.msra.mxu0 %v2629
        %3130 = vmatprep.subr.bf16.mxu0 %v2638
        %3131 = vmatpush1.bf16.msra.mxu0 %v2637
        %3132 = vmatprep.subr.bf16.mxu0 %v2646
        %3133 = vmatpush1.bf16.msra.mxu0 %v2645
        %3134 = vmatprep.subr.bf16.mxu0 %v2654
        %3135 = vmatpush1.bf16.msra.mxu0 %v2653
        %3136 = vmatprep.subr.bf16.mxu0 %v2662
        %3137 = vmatpush1.bf16.msra.mxu0 %v2661
        %3138 = vmatprep.subr.bf16.mxu0 %v2670
        %3139 = vmatpush1.bf16.msra.mxu0 %v2669
        %3140 = vmatprep.subr.bf16.mxu0 %v2678
        %3141 = vmatpush1.bf16.msra.mxu0 %v2677
        %3142 = vmatprep.subr.bf16.mxu0 %v2686
        %3143 = vmatpush1.bf16.msra.mxu0 %v2685
        %3144 = vmatprep.subr.bf16.mxu0 %v2694
        %3145 = vmatpush1.bf16.msra.mxu0 %v2693
        %3146 = vmatprep.subr.bf16.mxu0 %v2702
        %3147 = vmatpush1.bf16.msra.mxu0 %v2701
        %3148 = vmatprep.subr.bf16.mxu0 %v2710
        %3149 = vmatpush1.bf16.msra.mxu0 %v2709
        %3150 = vmatprep.subr.bf16.mxu0 %v2718
        %3151 = vmatpush1.bf16.msra.mxu0 %v2717
        %3152 = vmatprep.subr.bf16.mxu0 %v2726
        %3153 = vmatpush1.bf16.msra.mxu0 %v2725
        %3154 = vmatprep.subr.bf16.mxu0 %v2734
        %3155 = vmatpush1.bf16.msra.mxu0 %v2733
        %3156 = vmatprep.mubr.bf16.mxu0 %v1416
        %3157 = vmatmul.mubr.bf16.gmra.mrb[0].mxu0 %v1415
        %v3158 = vpop.f32.mrb[0].mxu0
        %v3159 = vadd.f32 %v3116, %v3158
        %v3160 = vpop.f32.mrb[0].mxu0
        %v3161 = vadd.f32 %v3118, %v3160
        %v3162 = vpop.f32.mrb[0].mxu0
        %v3163 = vadd.f32 %v3120, %v3162
        %v3164 = vpop.f32.mrb[0].mxu0
        %v3165 = vadd.f32 %v3122, %v3164
        %3166 = vdwg.mxu0
        %3167 = vmatprep.subr.bf16.mxu0 %v2488
        %3168 = vmatpush1.bf16.msra.mxu0 %v2487
        %3169 = vmatprep.subr.bf16.mxu0 %v2496
        %3170 = vmatpush1.bf16.msra.mxu0 %v2495
        %3171 = vmatprep.subr.bf16.mxu0 %v2504
        %3172 = vmatpush1.bf16.msra.mxu0 %v2503
        %3173 = vmatprep.subr.bf16.mxu0 %v2512
        %3174 = vmatpush1.bf16.msra.mxu0 %v2511
        %3175 = vmatprep.subr.bf16.mxu0 %v2520
        %3176 = vmatpush1.bf16.msra.mxu0 %v2519
        %3177 = vmatprep.subr.bf16.mxu0 %v2528
        %3178 = vmatpush1.bf16.msra.mxu0 %v2527
        %3179 = vmatprep.subr.bf16.mxu0 %v2536
        %3180 = vmatpush1.bf16.msra.mxu0 %v2535
        %3181 = vmatprep.subr.bf16.mxu0 %v2544
        %3182 = vmatpush1.bf16.msra.mxu0 %v2543
        %3183 = vmatprep.subr.bf16.mxu0 %v2552
        %3184 = vmatpush1.bf16.msra.mxu0 %v2551
        %3185 = vmatprep.subr.bf16.mxu0 %v2560
        %3186 = vmatpush1.bf16.msra.mxu0 %v2559
        %3187 = vmatprep.subr.bf16.mxu0 %v2568
        %3188 = vmatpush1.bf16.msra.mxu0 %v2567
        %3189 = vmatprep.subr.bf16.mxu0 %v2576
        %3190 = vmatpush1.bf16.msra.mxu0 %v2575
        %3191 = vmatprep.subr.bf16.mxu0 %v2584
        %3192 = vmatpush1.bf16.msra.mxu0 %v2583
        %3193 = vmatprep.subr.bf16.mxu0 %v2592
        %3194 = vmatpush1.bf16.msra.mxu0 %v2591
        %3195 = vmatprep.subr.bf16.mxu0 %v2600
        %3196 = vmatpush1.bf16.msra.mxu0 %v2599
        %3197 = vmatprep.subr.bf16.mxu0 %v2608
        %3198 = vmatpush1.bf16.msra.mxu0 %v2607
        %3199 = vmatprep.mubr.bf16.mxu0 %v1414
        %3200 = vmatmul.mubr.bf16.gmra.mrb[0].mxu0 %v1413
        %v3201 = vpop.f32.mrb[0].mxu0
        %v3202 = vadd.f32 %v1694, %v3201
        %v3203 = vpop.f32.mrb[0].mxu0
        %v3204 = vadd.f32 %v1698, %v3203
        %v3205 = vpop.f32.mrb[0].mxu0
        %v3206 = vadd.f32 %v1694, %v3205
        %v3207 = vpop.f32.mrb[0].mxu0
        %v3208 = vadd.f32 %v1698, %v3207
        %3209 = vdwg.mxu0
        %3210 = vmatprep.subr.bf16.mxu0 %v2616
        %3211 = vmatpush1.bf16.msra.mxu0 %v2615
        %3212 = vmatprep.subr.bf16.mxu0 %v2624
        %3213 = vmatpush1.bf16.msra.mxu0 %v2623
        %3214 = vmatprep.subr.bf16.mxu0 %v2632
        %3215 = vmatpush1.bf16.msra.mxu0 %v2631
        %3216 = vmatprep.subr.bf16.mxu0 %v2640
        %3217 = vmatpush1.bf16.msra.mxu0 %v2639
        %3218 = vmatprep.subr.bf16.mxu0 %v2648
        %3219 = vmatpush1.bf16.msra.mxu0 %v2647
        %3220 = vmatprep.subr.bf16.mxu0 %v2656
        %3221 = vmatpush1.bf16.msra.mxu0 %v2655
        %3222 = vmatprep.subr.bf16.mxu0 %v2664
        %3223 = vmatpush1.bf16.msra.mxu0 %v2663
        %3224 = vmatprep.subr.bf16.mxu0 %v2672
        %3225 = vmatpush1.bf16.msra.mxu0 %v2671
        %3226 = vmatprep.subr.bf16.mxu0 %v2680
        %3227 = vmatpush1.bf16.msra.mxu0 %v2679
        %3228 = vmatprep.subr.bf16.mxu0 %v2688
        %3229 = vmatpush1.bf16.msra.mxu0 %v2687
        %3230 = vmatprep.subr.bf16.mxu0 %v2696
        %3231 = vmatpush1.bf16.msra.mxu0 %v2695
        %3232 = vmatprep.subr.bf16.mxu0 %v2704
        %3233 = vmatpush1.bf16.msra.mxu0 %v2703
        %3234 = vmatprep.subr.bf16.mxu0 %v2712
        %3235 = vmatpush1.bf16.msra.mxu0 %v2711
        %3236 = vmatprep.subr.bf16.mxu0 %v2720
        %3237 = vmatpush1.bf16.msra.mxu0 %v2719
        %3238 = vmatprep.subr.bf16.mxu0 %v2728
        %3239 = vmatpush1.bf16.msra.mxu0 %v2727
        %3240 = vmatprep.subr.bf16.mxu0 %v2736
        %3241 = vmatpush1.bf16.msra.mxu0 %v2735
        %3242 = vmatprep.mubr.bf16.mxu0 %v1416
        %3243 = vmatmul.mubr.bf16.gmra.mrb[0].mxu0 %v1415
        %v3244 = vpop.f32.mrb[0].mxu0
        %v3245 = vadd.f32 %v3202, %v3244
        %v3246 = vpop.f32.mrb[0].mxu0
        %v3247 = vadd.f32 %v3204, %v3246
        %v3248 = vpop.f32.mrb[0].mxu0
        %v3249 = vadd.f32 %v3206, %v3248
        %v3250 = vpop.f32.mrb[0].mxu0
        %v3251 = vadd.f32 %v3208, %v3250
        %3252 = vdwg.mxu0
        %3253 = vmatprep.subr.bf16.mxu0 %v2490
        %3254 = vmatpush1.bf16.msra.mxu0 %v2489
        %3255 = vmatprep.subr.bf16.mxu0 %v2498
        %3256 = vmatpush1.bf16.msra.mxu0 %v2497
        %3257 = vmatprep.subr.bf16.mxu0 %v2506
        %3258 = vmatpush1.bf16.msra.mxu0 %v2505
        %3259 = vmatprep.subr.bf16.mxu0 %v2514
        %3260 = vmatpush1.bf16.msra.mxu0 %v2513
        %3261 = vmatprep.subr.bf16.mxu0 %v2522
        %3262 = vmatpush1.bf16.msra.mxu0 %v2521
        %3263 = vmatprep.subr.bf16.mxu0 %v2530
        %3264 = vmatpush1.bf16.msra.mxu0 %v2529
        %3265 = vmatprep.subr.bf16.mxu0 %v2538
        %3266 = vmatpush1.bf16.msra.mxu0 %v2537
        %3267 = vmatprep.subr.bf16.mxu0 %v2546
        %3268 = vmatpush1.bf16.msra.mxu0 %v2545
        %3269 = vmatprep.subr.bf16.mxu0 %v2554
        %3270 = vmatpush1.bf16.msra.mxu0 %v2553
        %3271 = vmatprep.subr.bf16.mxu0 %v2562
        %3272 = vmatpush1.bf16.msra.mxu0 %v2561
        %3273 = vmatprep.subr.bf16.mxu0 %v2570
        %3274 = vmatpush1.bf16.msra.mxu0 %v2569
        %3275 = vmatprep.subr.bf16.mxu0 %v2578
        %3276 = vmatpush1.bf16.msra.mxu0 %v2577
        %3277 = vmatprep.subr.bf16.mxu0 %v2586
        %3278 = vmatpush1.bf16.msra.mxu0 %v2585
        %3279 = vmatprep.subr.bf16.mxu0 %v2594
        %3280 = vmatpush1.bf16.msra.mxu0 %v2593
        %3281 = vmatprep.subr.bf16.mxu0 %v2602
        %3282 = vmatpush1.bf16.msra.mxu0 %v2601
        %3283 = vmatprep.subr.bf16.mxu0 %v2610
        %3284 = vmatpush1.bf16.msra.mxu0 %v2609
        %3285 = vmatprep.mubr.bf16.mxu0 %v1414
        %3286 = vmatmul.mubr.bf16.gmra.mrb[0].mxu0 %v1413
        %v3287 = vpop.f32.mrb[0].mxu0
        %v3288 = vadd.f32 %v1702, %v3287
        %v3289 = vpop.f32.mrb[0].mxu0
        %v3290 = vadd.f32 %v1706, %v3289
        %v3291 = vpop.f32.mrb[0].mxu0
        %v3292 = vadd.f32 %v1702, %v3291
        %v3293 = vpop.f32.mrb[0].mxu0
        %v3294 = vadd.f32 %v1706, %v3293
        %3295 = vdwg.mxu0
        %3296 = vmatprep.subr.bf16.mxu0 %v2618
        %3297 = vmatpush1.bf16.msra.mxu0 %v2617
        %3298 = vmatprep.subr.bf16.mxu0 %v2626
        %3299 = vmatpush1.bf16.msra.mxu0 %v2625
        %3300 = vmatprep.subr.bf16.mxu0 %v2634
        %3301 = vmatpush1.bf16.msra.mxu0 %v2633
        %3302 = vmatprep.subr.bf16.mxu0 %v2642
        %3303 = vmatpush1.bf16.msra.mxu0 %v2641
        %3304 = vmatprep.subr.bf16.mxu0 %v2650
        %3305 = vmatpush1.bf16.msra.mxu0 %v2649
        %3306 = vmatprep.subr.bf16.mxu0 %v2658
        %3307 = vmatpush1.bf16.msra.mxu0 %v2657
        %3308 = vmatprep.subr.bf16.mxu0 %v2666
        %3309 = vmatpush1.bf16.msra.mxu0 %v2665
        %3310 = vmatprep.subr.bf16.mxu0 %v2674
        %3311 = vmatpush1.bf16.msra.mxu0 %v2673
        %3312 = vmatprep.subr.bf16.mxu0 %v2682
        %3313 = vmatpush1.bf16.msra.mxu0 %v2681
        %3314 = vmatprep.subr.bf16.mxu0 %v2690
        %3315 = vmatpush1.bf16.msra.mxu0 %v2689
        %3316 = vmatprep.subr.bf16.mxu0 %v2698
        %3317 = vmatpush1.bf16.msra.mxu0 %v2697
        %3318 = vmatprep.subr.bf16.mxu0 %v2706
        %3319 = vmatpush1.bf16.msra.mxu0 %v2705
        %3320 = vmatprep.subr.bf16.mxu0 %v2714
        %3321 = vmatpush1.bf16.msra.mxu0 %v2713
        %3322 = vmatprep.subr.bf16.mxu0 %v2722
        %3323 = vmatpush1.bf16.msra.mxu0 %v2721
        %3324 = vmatprep.subr.bf16.mxu0 %v2730
        %3325 = vmatpush1.bf16.msra.mxu0 %v2729
        %3326 = vmatprep.subr.bf16.mxu0 %v2738
        %3327 = vmatpush1.bf16.msra.mxu0 %v2737
        %3328 = vmatprep.mubr.bf16.mxu0 %v1416
        %3329 = vmatmul.mubr.bf16.gmra.mrb[0].mxu0 %v1415
        %v3330 = vpop.f32.mrb[0].mxu0
        %v3331 = vadd.f32 %v3288, %v3330
        %v3332 = vpop.f32.mrb[0].mxu0
        %v3333 = vadd.f32 %v3290, %v3332
        %v3334 = vpop.f32.mrb[0].mxu0
        %v3335 = vadd.f32 %v3292, %v3334
        %v3336 = vpop.f32.mrb[0].mxu0
        %v3337 = vadd.f32 %v3294, %v3336
        %3338 = vdwg.mxu0
        %vm3339 = vcmp.ge.f32.partialorder %v3073, 0.0
        %vm3340 = vcmp.ge.f32.partialorder %v3075, 0.0
        %vm3341 = vcmp.ge.f32.partialorder %v3159, 0.0
        %vm3342 = vcmp.ge.f32.partialorder %v3161, 0.0
        %vm3343 = vcmp.ge.f32.partialorder %v3245, 0.0
        %vm3344 = vcmp.ge.f32.partialorder %v3247, 0.0
        %vm3345 = vcmp.ge.f32.partialorder %v3331, 0.0
        %vm3346 = vcmp.ge.f32.partialorder %v3333, 0.0
        %vm3347 = vcmp.ge.f32.partialorder %v3077, 0.0
        %vm3348 = vcmp.ge.f32.partialorder %v3079, 0.0
        %vm3349 = vcmp.ge.f32.partialorder %v3163, 0.0
        %vm3350 = vcmp.ge.f32.partialorder %v3165, 0.0
        %vm3351 = vcmp.ge.f32.partialorder %v3249, 0.0
        %vm3352 = vcmp.ge.f32.partialorder %v3251, 0.0
        %vm3353 = vcmp.ge.f32.partialorder %v3335, 0.0
        %vm3354 = vcmp.ge.f32.partialorder %v3337, 0.0
        %v3355 = vmul.f32 %v3073, 0.01
        %v3356 = vmul.f32 %v3075, 0.01
        %v3357 = vmul.f32 %v3159, 0.01
        %v3358 = vmul.f32 %v3161, 0.01
        %v3359 = vmul.f32 %v3245, 0.01
        %v3360 = vmul.f32 %v3247, 0.01
        %v3361 = vmul.f32 %v3331, 0.01
        %v3362 = vmul.f32 %v3333, 0.01
        %v3363 = vmul.f32 %v3077, 0.01
        %v3364 = vmul.f32 %v3079, 0.01
        %v3365 = vmul.f32 %v3163, 0.01
        %v3366 = vmul.f32 %v3165, 0.01
        %v3367 = vmul.f32 %v3249, 0.01
        %v3368 = vmul.f32 %v3251, 0.01
        %v3369 = vmul.f32 %v3335, 0.01
        %v3370 = vmul.f32 %v3337, 0.01
        %v3371 = vsel %vm3339, %v3073, %v3355
        %v3372 = vsel %vm3340, %v3075, %v3356
        %v3373 = vsel %vm3341, %v3159, %v3357
        %v3374 = vsel %vm3342, %v3161, %v3358
        %v3375 = vsel %vm3343, %v3245, %v3359
        %v3376 = vsel %vm3344, %v3247, %v3360
        %v3377 = vsel %vm3345, %v3331, %v3361
        %v3378 = vsel %vm3346, %v3333, %v3362
        %v3379 = vsel %vm3347, %v3077, %v3363
        %v3380 = vsel %vm3348, %v3079, %v3364
        %v3381 = vsel %vm3349, %v3163, %v3365
        %v3382 = vsel %vm3350, %v3165, %v3366
        %v3383 = vsel %vm3351, %v3249, %v3367
        %v3384 = vsel %vm3352, %v3251, %v3368
        %v3385 = vsel %vm3353, %v3335, %v3369
        %v3386 = vsel %vm3354, %v3337, %v3370
        %v3387 = vpack.c.bf16 %v3379, %v3371
        %v3388 = vpack.c.bf16 %v3380, %v3372
        %v3389 = vpack.c.bf16 %v3381, %v3373
        %v3390 = vpack.c.bf16 %v3382, %v3374
        %v3391 = vpack.c.bf16 %v3383, %v3375
        %v3392 = vpack.c.bf16 %v3384, %v3376
        %v3393 = vpack.c.bf16 %v3385, %v3377
        %v3394 = vpack.c.bf16 %v3386, %v3378
        %v3395 = vld [vmem:[%s13] sm:$0xff]
        %v3396 = vld [vmem:[%s13 + $0x8] sm:$0xff]
        %v3397 = vld [vmem:[%s13 + $0x10] sm:$0xff]
        %v3398 = vld [vmem:[%s13 + $0x18] sm:$0xff]
        %v3399 = vld [vmem:[%s13 + $0x20] sm:$0xff]
        %v3400 = vld [vmem:[%s13 + $0x28] sm:$0xff]
        %v3401 = vld [vmem:[%s13 + $0x30] sm:$0xff]
        %v3402 = vld [vmem:[%s13 + $0x38] sm:$0xff]
        %v3403 = vld [vmem:[%s13 + $0x40] sm:$0xff]
        %v3404 = vld [vmem:[%s13 + $0x48] sm:$0xff]
        %v3405 = vld [vmem:[%s13 + $0x50] sm:$0xff]
        %v3406 = vld [vmem:[%s13 + $0x58] sm:$0xff]
        %v3407 = vld [vmem:[%s13 + $0x60] sm:$0xff]
        %v3408 = vld [vmem:[%s13 + $0x68] sm:$0xff]
        %v3409 = vld [vmem:[%s13 + $0x70] sm:$0xff]
        %v3410 = vld [vmem:[%s13 + $0x78] sm:$0xff]
        %v3411 = vld [vmem:[%s13 + $0x80] sm:$0xff]
        %v3412 = vld [vmem:[%s13 + $0x88] sm:$0xff]
        %v3413 = vld [vmem:[%s13 + $0x90] sm:$0xff]
        %v3414 = vld [vmem:[%s13 + $0x98] sm:$0xff]
        %v3415 = vld [vmem:[%s13 + $0xa0] sm:$0xff]
        %v3416 = vld [vmem:[%s13 + $0xa8] sm:$0xff]
        %v3417 = vld [vmem:[%s13 + $0xb0] sm:$0xff]
        %v3418 = vld [vmem:[%s13 + $0xb8] sm:$0xff]
        %v3419 = vld [vmem:[%s13 + $0xc0] sm:$0xff]
        %v3420 = vld [vmem:[%s13 + $0xc8] sm:$0xff]
        %v3421 = vld [vmem:[%s13 + $0xd0] sm:$0xff]
        %v3422 = vld [vmem:[%s13 + $0xd8] sm:$0xff]
        %v3423 = vld [vmem:[%s13 + $0xe0] sm:$0xff]
        %v3424 = vld [vmem:[%s13 + $0xe8] sm:$0xff]
        %v3425 = vld [vmem:[%s13 + $0xf0] sm:$0xff]
        %v3426 = vld [vmem:[%s13 + $0xf8] sm:$0xff]
        %v3427 = vld [vmem:[%s13 + $0x100] sm:$0xff]
        %v3428 = vld [vmem:[%s13 + $0x108] sm:$0xff]
        %v3429 = vld [vmem:[%s13 + $0x110] sm:$0xff]
        %v3430 = vld [vmem:[%s13 + $0x118] sm:$0xff]
        %v3431 = vld [vmem:[%s13 + $0x120] sm:$0xff]
        %v3432 = vld [vmem:[%s13 + $0x128] sm:$0xff]
        %v3433 = vld [vmem:[%s13 + $0x130] sm:$0xff]
        %v3434 = vld [vmem:[%s13 + $0x138] sm:$0xff]
        %v3435 = vld [vmem:[%s13 + $0x140] sm:$0xff]
        %v3436 = vld [vmem:[%s13 + $0x148] sm:$0xff]
        %v3437 = vld [vmem:[%s13 + $0x150] sm:$0xff]
        %v3438 = vld [vmem:[%s13 + $0x158] sm:$0xff]
        %v3439 = vld [vmem:[%s13 + $0x160] sm:$0xff]
        %v3440 = vld [vmem:[%s13 + $0x168] sm:$0xff]
        %v3441 = vld [vmem:[%s13 + $0x170] sm:$0xff]
        %v3442 = vld [vmem:[%s13 + $0x178] sm:$0xff]
        %v3443 = vld [vmem:[%s13 + $0x180] sm:$0xff]
        %v3444 = vld [vmem:[%s13 + $0x188] sm:$0xff]
        %v3445 = vld [vmem:[%s13 + $0x190] sm:$0xff]
        %v3446 = vld [vmem:[%s13 + $0x198] sm:$0xff]
        %v3447 = vld [vmem:[%s13 + $0x1a0] sm:$0xff]
        %v3448 = vld [vmem:[%s13 + $0x1a8] sm:$0xff]
        %v3449 = vld [vmem:[%s13 + $0x1b0] sm:$0xff]
        %v3450 = vld [vmem:[%s13 + $0x1b8] sm:$0xff]
        %v3451 = vld [vmem:[%s13 + $0x1c0] sm:$0xff]
        %v3452 = vld [vmem:[%s13 + $0x1c8] sm:$0xff]
        %v3453 = vld [vmem:[%s13 + $0x1d0] sm:$0xff]
        %v3454 = vld [vmem:[%s13 + $0x1d8] sm:$0xff]
        %v3455 = vld [vmem:[%s13 + $0x1e0] sm:$0xff]
        %v3456 = vld [vmem:[%s13 + $0x1e8] sm:$0xff]
        %v3457 = vld [vmem:[%s13 + $0x1f0] sm:$0xff]
        %v3458 = vld [vmem:[%s13 + $0x1f8] sm:$0xff]
        %v3459 = vld [vmem:[%s13 + $0x200] sm:$0xff]
        %v3460 = vld [vmem:[%s13 + $0x208] sm:$0xff]
        %v3461 = vld [vmem:[%s13 + $0x210] sm:$0xff]
        %v3462 = vld [vmem:[%s13 + $0x218] sm:$0xff]
        %v3463 = vld [vmem:[%s13 + $0x220] sm:$0xff]
        %v3464 = vld [vmem:[%s13 + $0x228] sm:$0xff]
        %v3465 = vld [vmem:[%s13 + $0x230] sm:$0xff]
        %v3466 = vld [vmem:[%s13 + $0x238] sm:$0xff]
        %v3467 = vld [vmem:[%s13 + $0x240] sm:$0xff]
        %v3468 = vld [vmem:[%s13 + $0x248] sm:$0xff]
        %v3469 = vld [vmem:[%s13 + $0x250] sm:$0xff]
        %v3470 = vld [vmem:[%s13 + $0x258] sm:$0xff]
        %v3471 = vld [vmem:[%s13 + $0x260] sm:$0xff]
        %v3472 = vld [vmem:[%s13 + $0x268] sm:$0xff]
        %v3473 = vld [vmem:[%s13 + $0x270] sm:$0xff]
        %v3474 = vld [vmem:[%s13 + $0x278] sm:$0xff]
        %v3475 = vld [vmem:[%s13 + $0x280] sm:$0xff]
        %v3476 = vld [vmem:[%s13 + $0x288] sm:$0xff]
        %v3477 = vld [vmem:[%s13 + $0x290] sm:$0xff]
        %v3478 = vld [vmem:[%s13 + $0x298] sm:$0xff]
        %v3479 = vld [vmem:[%s13 + $0x2a0] sm:$0xff]
        %v3480 = vld [vmem:[%s13 + $0x2a8] sm:$0xff]
        %v3481 = vld [vmem:[%s13 + $0x2b0] sm:$0xff]
        %v3482 = vld [vmem:[%s13 + $0x2b8] sm:$0xff]
        %v3483 = vld [vmem:[%s13 + $0x2c0] sm:$0xff]
        %v3484 = vld [vmem:[%s13 + $0x2c8] sm:$0xff]
        %v3485 = vld [vmem:[%s13 + $0x2d0] sm:$0xff]
        %v3486 = vld [vmem:[%s13 + $0x2d8] sm:$0xff]
        %v3487 = vld [vmem:[%s13 + $0x2e0] sm:$0xff]
        %v3488 = vld [vmem:[%s13 + $0x2e8] sm:$0xff]
        %v3489 = vld [vmem:[%s13 + $0x2f0] sm:$0xff]
        %v3490 = vld [vmem:[%s13 + $0x2f8] sm:$0xff]
        %v3491 = vld [vmem:[%s13 + $0x300] sm:$0xff]
        %v3492 = vld [vmem:[%s13 + $0x308] sm:$0xff]
        %v3493 = vld [vmem:[%s13 + $0x310] sm:$0xff]
        %v3494 = vld [vmem:[%s13 + $0x318] sm:$0xff]
        %v3495 = vld [vmem:[%s13 + $0x320] sm:$0xff]
        %v3496 = vld [vmem:[%s13 + $0x328] sm:$0xff]
        %v3497 = vld [vmem:[%s13 + $0x330] sm:$0xff]
        %v3498 = vld [vmem:[%s13 + $0x338] sm:$0xff]
        %v3499 = vld [vmem:[%s13 + $0x340] sm:$0xff]
        %v3500 = vld [vmem:[%s13 + $0x348] sm:$0xff]
        %v3501 = vld [vmem:[%s13 + $0x350] sm:$0xff]
        %v3502 = vld [vmem:[%s13 + $0x358] sm:$0xff]
        %v3503 = vld [vmem:[%s13 + $0x360] sm:$0xff]
        %v3504 = vld [vmem:[%s13 + $0x368] sm:$0xff]
        %v3505 = vld [vmem:[%s13 + $0x370] sm:$0xff]
        %v3506 = vld [vmem:[%s13 + $0x378] sm:$0xff]
        %v3507 = vld [vmem:[%s13 + $0x380] sm:$0xff]
        %v3508 = vld [vmem:[%s13 + $0x388] sm:$0xff]
        %v3509 = vld [vmem:[%s13 + $0x390] sm:$0xff]
        %v3510 = vld [vmem:[%s13 + $0x398] sm:$0xff]
        %v3511 = vld [vmem:[%s13 + $0x3a0] sm:$0xff]
        %v3512 = vld [vmem:[%s13 + $0x3a8] sm:$0xff]
        %v3513 = vld [vmem:[%s13 + $0x3b0] sm:$0xff]
        %v3514 = vld [vmem:[%s13 + $0x3b8] sm:$0xff]
        %v3515 = vld [vmem:[%s13 + $0x3c0] sm:$0xff]
        %v3516 = vld [vmem:[%s13 + $0x3c8] sm:$0xff]
        %v3517 = vld [vmem:[%s13 + $0x3d0] sm:$0xff]
        %v3518 = vld [vmem:[%s13 + $0x3d8] sm:$0xff]
        %v3519 = vld [vmem:[%s13 + $0x3e0] sm:$0xff]
        %v3520 = vld [vmem:[%s13 + $0x3e8] sm:$0xff]
        %v3521 = vld [vmem:[%s13 + $0x3f0] sm:$0xff]
        %v3522 = vld [vmem:[%s13 + $0x3f8] sm:$0xff]
        %v3523 = vld [vmem:[#allocation15] sm:$0x3]
        %v3525 = vlaneseq
        %v3526 = vshrl.u32 %v3525, 7
        %v3527 = vsub.s32 0, %v3526
        %v3528 = vrot.slane %v3523, %v3527
        %v3529 = vlaneseq
        %v3530 = vshrl.u32 %v3529, 7
        %v3531 = vsub.s32 1, %v3530
        %v3532 = vrot.slane %v3523, %v3531
        %v3663 = vunpack.c.l.b16 %v3395
        %v3664 = vunpack.c.h.b16 %v3395
        %v3665 = vunpack.c.l.b16 %v3396
        %v3666 = vunpack.c.h.b16 %v3396
        %v3667 = vunpack.c.l.b16 %v3397
        %v3668 = vunpack.c.h.b16 %v3397
        %v3669 = vunpack.c.l.b16 %v3398
        %v3670 = vunpack.c.h.b16 %v3398
        %v3671 = vunpack.c.l.b16 %v3399
        %v3672 = vunpack.c.h.b16 %v3399
        %v3673 = vunpack.c.l.b16 %v3400
        %v3674 = vunpack.c.h.b16 %v3400
        %v3675 = vunpack.c.l.b16 %v3401
        %v3676 = vunpack.c.h.b16 %v3401
        %v3677 = vunpack.c.l.b16 %v3402
        %v3678 = vunpack.c.h.b16 %v3402
        %v3679 = vunpack.c.l.b16 %v3403
        %v3680 = vunpack.c.h.b16 %v3403
        %v3681 = vunpack.c.l.b16 %v3404
        %v3682 = vunpack.c.h.b16 %v3404
        %v3683 = vunpack.c.l.b16 %v3405
        %v3684 = vunpack.c.h.b16 %v3405
        %v3685 = vunpack.c.l.b16 %v3406
        %v3686 = vunpack.c.h.b16 %v3406
        %v3687 = vunpack.c.l.b16 %v3407
        %v3688 = vunpack.c.h.b16 %v3407
        %v3689 = vunpack.c.l.b16 %v3408
        %v3690 = vunpack.c.h.b16 %v3408
        %v3691 = vunpack.c.l.b16 %v3409
        %v3692 = vunpack.c.h.b16 %v3409
        %v3693 = vunpack.c.l.b16 %v3410
        %v3694 = vunpack.c.h.b16 %v3410
        %v3695 = vunpack.c.l.b16 %v3411
        %v3696 = vunpack.c.h.b16 %v3411
        %v3697 = vunpack.c.l.b16 %v3412
        %v3698 = vunpack.c.h.b16 %v3412
        %v3699 = vunpack.c.l.b16 %v3413
        %v3700 = vunpack.c.h.b16 %v3413
        %v3701 = vunpack.c.l.b16 %v3414
        %v3702 = vunpack.c.h.b16 %v3414
        %v3703 = vunpack.c.l.b16 %v3415
        %v3704 = vunpack.c.h.b16 %v3415
        %v3705 = vunpack.c.l.b16 %v3416
        %v3706 = vunpack.c.h.b16 %v3416
        %v3707 = vunpack.c.l.b16 %v3417
        %v3708 = vunpack.c.h.b16 %v3417
        %v3709 = vunpack.c.l.b16 %v3418
        %v3710 = vunpack.c.h.b16 %v3418
        %v3711 = vunpack.c.l.b16 %v3419
        %v3712 = vunpack.c.h.b16 %v3419
        %v3713 = vunpack.c.l.b16 %v3420
        %v3714 = vunpack.c.h.b16 %v3420
        %v3715 = vunpack.c.l.b16 %v3421
        %v3716 = vunpack.c.h.b16 %v3421
        %v3717 = vunpack.c.l.b16 %v3422
        %v3718 = vunpack.c.h.b16 %v3422
        %v3719 = vunpack.c.l.b16 %v3423
        %v3720 = vunpack.c.h.b16 %v3423
        %v3721 = vunpack.c.l.b16 %v3424
        %v3722 = vunpack.c.h.b16 %v3424
        %v3723 = vunpack.c.l.b16 %v3425
        %v3724 = vunpack.c.h.b16 %v3425
        %v3725 = vunpack.c.l.b16 %v3426
        %v3726 = vunpack.c.h.b16 %v3426
        %v3727 = vunpack.c.l.b16 %v3427
        %v3728 = vunpack.c.h.b16 %v3427
        %v3729 = vunpack.c.l.b16 %v3428
        %v3730 = vunpack.c.h.b16 %v3428
        %v3731 = vunpack.c.l.b16 %v3429
        %v3732 = vunpack.c.h.b16 %v3429
        %v3733 = vunpack.c.l.b16 %v3430
        %v3734 = vunpack.c.h.b16 %v3430
        %v3735 = vunpack.c.l.b16 %v3431
        %v3736 = vunpack.c.h.b16 %v3431
        %v3737 = vunpack.c.l.b16 %v3432
        %v3738 = vunpack.c.h.b16 %v3432
        %v3739 = vunpack.c.l.b16 %v3433
        %v3740 = vunpack.c.h.b16 %v3433
        %v3741 = vunpack.c.l.b16 %v3434
        %v3742 = vunpack.c.h.b16 %v3434
        %v3743 = vunpack.c.l.b16 %v3435
        %v3744 = vunpack.c.h.b16 %v3435
        %v3745 = vunpack.c.l.b16 %v3436
        %v3746 = vunpack.c.h.b16 %v3436
        %v3747 = vunpack.c.l.b16 %v3437
        %v3748 = vunpack.c.h.b16 %v3437
        %v3749 = vunpack.c.l.b16 %v3438
        %v3750 = vunpack.c.h.b16 %v3438
        %v3751 = vunpack.c.l.b16 %v3439
        %v3752 = vunpack.c.h.b16 %v3439
        %v3753 = vunpack.c.l.b16 %v3440
        %v3754 = vunpack.c.h.b16 %v3440
        %v3755 = vunpack.c.l.b16 %v3441
        %v3756 = vunpack.c.h.b16 %v3441
        %v3757 = vunpack.c.l.b16 %v3442
        %v3758 = vunpack.c.h.b16 %v3442
        %v3759 = vunpack.c.l.b16 %v3443
        %v3760 = vunpack.c.h.b16 %v3443
        %v3761 = vunpack.c.l.b16 %v3444
        %v3762 = vunpack.c.h.b16 %v3444
        %v3763 = vunpack.c.l.b16 %v3445
        %v3764 = vunpack.c.h.b16 %v3445
        %v3765 = vunpack.c.l.b16 %v3446
        %v3766 = vunpack.c.h.b16 %v3446
        %v3767 = vunpack.c.l.b16 %v3447
        %v3768 = vunpack.c.h.b16 %v3447
        %v3769 = vunpack.c.l.b16 %v3448
        %v3770 = vunpack.c.h.b16 %v3448
        %v3771 = vunpack.c.l.b16 %v3449
        %v3772 = vunpack.c.h.b16 %v3449
        %v3773 = vunpack.c.l.b16 %v3450
        %v3774 = vunpack.c.h.b16 %v3450
        %v3775 = vunpack.c.l.b16 %v3451
        %v3776 = vunpack.c.h.b16 %v3451
        %v3777 = vunpack.c.l.b16 %v3452
        %v3778 = vunpack.c.h.b16 %v3452
        %v3779 = vunpack.c.l.b16 %v3453
        %v3780 = vunpack.c.h.b16 %v3453
        %v3781 = vunpack.c.l.b16 %v3454
        %v3782 = vunpack.c.h.b16 %v3454
        %v3783 = vunpack.c.l.b16 %v3455
        %v3784 = vunpack.c.h.b16 %v3455
        %v3785 = vunpack.c.l.b16 %v3456
        %v3786 = vunpack.c.h.b16 %v3456
        %v3787 = vunpack.c.l.b16 %v3457
        %v3788 = vunpack.c.h.b16 %v3457
        %v3789 = vunpack.c.l.b16 %v3458
        %v3790 = vunpack.c.h.b16 %v3458
        %v3791 = vunpack.c.l.b16 %v3459
        %v3792 = vunpack.c.h.b16 %v3459
        %v3793 = vunpack.c.l.b16 %v3460
        %v3794 = vunpack.c.h.b16 %v3460
        %v3795 = vunpack.c.l.b16 %v3461
        %v3796 = vunpack.c.h.b16 %v3461
        %v3797 = vunpack.c.l.b16 %v3462
        %v3798 = vunpack.c.h.b16 %v3462
        %v3799 = vunpack.c.l.b16 %v3463
        %v3800 = vunpack.c.h.b16 %v3463
        %v3801 = vunpack.c.l.b16 %v3464
        %v3802 = vunpack.c.h.b16 %v3464
        %v3803 = vunpack.c.l.b16 %v3465
        %v3804 = vunpack.c.h.b16 %v3465
        %v3805 = vunpack.c.l.b16 %v3466
        %v3806 = vunpack.c.h.b16 %v3466
        %v3807 = vunpack.c.l.b16 %v3467
        %v3808 = vunpack.c.h.b16 %v3467
        %v3809 = vunpack.c.l.b16 %v3468
        %v3810 = vunpack.c.h.b16 %v3468
        %v3811 = vunpack.c.l.b16 %v3469
        %v3812 = vunpack.c.h.b16 %v3469
        %v3813 = vunpack.c.l.b16 %v3470
        %v3814 = vunpack.c.h.b16 %v3470
        %v3815 = vunpack.c.l.b16 %v3471
        %v3816 = vunpack.c.h.b16 %v3471
        %v3817 = vunpack.c.l.b16 %v3472
        %v3818 = vunpack.c.h.b16 %v3472
        %v3819 = vunpack.c.l.b16 %v3473
        %v3820 = vunpack.c.h.b16 %v3473
        %v3821 = vunpack.c.l.b16 %v3474
        %v3822 = vunpack.c.h.b16 %v3474
        %v3823 = vunpack.c.l.b16 %v3475
        %v3824 = vunpack.c.h.b16 %v3475
        %v3825 = vunpack.c.l.b16 %v3476
        %v3826 = vunpack.c.h.b16 %v3476
        %v3827 = vunpack.c.l.b16 %v3477
        %v3828 = vunpack.c.h.b16 %v3477
        %v3829 = vunpack.c.l.b16 %v3478
        %v3830 = vunpack.c.h.b16 %v3478
        %v3831 = vunpack.c.l.b16 %v3479
        %v3832 = vunpack.c.h.b16 %v3479
        %v3833 = vunpack.c.l.b16 %v3480
        %v3834 = vunpack.c.h.b16 %v3480
        %v3835 = vunpack.c.l.b16 %v3481
        %v3836 = vunpack.c.h.b16 %v3481
        %v3837 = vunpack.c.l.b16 %v3482
        %v3838 = vunpack.c.h.b16 %v3482
        %v3839 = vunpack.c.l.b16 %v3483
        %v3840 = vunpack.c.h.b16 %v3483
        %v3841 = vunpack.c.l.b16 %v3484
        %v3842 = vunpack.c.h.b16 %v3484
        %v3843 = vunpack.c.l.b16 %v3485
        %v3844 = vunpack.c.h.b16 %v3485
        %v3845 = vunpack.c.l.b16 %v3486
        %v3846 = vunpack.c.h.b16 %v3486
        %v3847 = vunpack.c.l.b16 %v3487
        %v3848 = vunpack.c.h.b16 %v3487
        %v3849 = vunpack.c.l.b16 %v3488
        %v3850 = vunpack.c.h.b16 %v3488
        %v3851 = vunpack.c.l.b16 %v3489
        %v3852 = vunpack.c.h.b16 %v3489
        %v3853 = vunpack.c.l.b16 %v3490
        %v3854 = vunpack.c.h.b16 %v3490
        %v3855 = vunpack.c.l.b16 %v3491
        %v3856 = vunpack.c.h.b16 %v3491
        %v3857 = vunpack.c.l.b16 %v3492
        %v3858 = vunpack.c.h.b16 %v3492
        %v3859 = vunpack.c.l.b16 %v3493
        %v3860 = vunpack.c.h.b16 %v3493
        %v3861 = vunpack.c.l.b16 %v3494
        %v3862 = vunpack.c.h.b16 %v3494
        %v3863 = vunpack.c.l.b16 %v3495
        %v3864 = vunpack.c.h.b16 %v3495
        %v3865 = vunpack.c.l.b16 %v3496
        %v3866 = vunpack.c.h.b16 %v3496
        %v3867 = vunpack.c.l.b16 %v3497
        %v3868 = vunpack.c.h.b16 %v3497
        %v3869 = vunpack.c.l.b16 %v3498
        %v3870 = vunpack.c.h.b16 %v3498
        %v3871 = vunpack.c.l.b16 %v3499
        %v3872 = vunpack.c.h.b16 %v3499
        %v3873 = vunpack.c.l.b16 %v3500
        %v3874 = vunpack.c.h.b16 %v3500
        %v3875 = vunpack.c.l.b16 %v3501
        %v3876 = vunpack.c.h.b16 %v3501
        %v3877 = vunpack.c.l.b16 %v3502
        %v3878 = vunpack.c.h.b16 %v3502
        %v3879 = vunpack.c.l.b16 %v3503
        %v3880 = vunpack.c.h.b16 %v3503
        %v3881 = vunpack.c.l.b16 %v3504
        %v3882 = vunpack.c.h.b16 %v3504
        %v3883 = vunpack.c.l.b16 %v3505
        %v3884 = vunpack.c.h.b16 %v3505
        %v3885 = vunpack.c.l.b16 %v3506
        %v3886 = vunpack.c.h.b16 %v3506
        %v3887 = vunpack.c.l.b16 %v3507
        %v3888 = vunpack.c.h.b16 %v3507
        %v3889 = vunpack.c.l.b16 %v3508
        %v3890 = vunpack.c.h.b16 %v3508
        %v3891 = vunpack.c.l.b16 %v3509
        %v3892 = vunpack.c.h.b16 %v3509
        %v3893 = vunpack.c.l.b16 %v3510
        %v3894 = vunpack.c.h.b16 %v3510
        %v3895 = vunpack.c.l.b16 %v3511
        %v3896 = vunpack.c.h.b16 %v3511
        %v3897 = vunpack.c.l.b16 %v3512
        %v3898 = vunpack.c.h.b16 %v3512
        %v3899 = vunpack.c.l.b16 %v3513
        %v3900 = vunpack.c.h.b16 %v3513
        %v3901 = vunpack.c.l.b16 %v3514
        %v3902 = vunpack.c.h.b16 %v3514
        %v3903 = vunpack.c.l.b16 %v3515
        %v3904 = vunpack.c.h.b16 %v3515
        %v3905 = vunpack.c.l.b16 %v3516
        %v3906 = vunpack.c.h.b16 %v3516
        %v3907 = vunpack.c.l.b16 %v3517
        %v3908 = vunpack.c.h.b16 %v3517
        %v3909 = vunpack.c.l.b16 %v3518
        %v3910 = vunpack.c.h.b16 %v3518
        %v3911 = vunpack.c.l.b16 %v3519
        %v3912 = vunpack.c.h.b16 %v3519
        %v3913 = vunpack.c.l.b16 %v3520
        %v3914 = vunpack.c.h.b16 %v3520
        %v3915 = vunpack.c.l.b16 %v3521
        %v3916 = vunpack.c.h.b16 %v3521
        %v3917 = vunpack.c.l.b16 %v3522
        %v3918 = vunpack.c.h.b16 %v3522
        %v3919 = vpack.c.b16 %v3665, %v3663
        %v3920 = vpack.c.b16 %v3666, %v3664
        %v3921 = vpack.c.b16 %v3669, %v3667
        %v3922 = vpack.c.b16 %v3670, %v3668
        %v3923 = vpack.c.b16 %v3673, %v3671
        %v3924 = vpack.c.b16 %v3674, %v3672
        %v3925 = vpack.c.b16 %v3677, %v3675
        %v3926 = vpack.c.b16 %v3678, %v3676
        %v3927 = vpack.c.b16 %v3681, %v3679
        %v3928 = vpack.c.b16 %v3682, %v3680
        %v3929 = vpack.c.b16 %v3685, %v3683
        %v3930 = vpack.c.b16 %v3686, %v3684
        %v3931 = vpack.c.b16 %v3689, %v3687
        %v3932 = vpack.c.b16 %v3690, %v3688
        %v3933 = vpack.c.b16 %v3693, %v3691
        %v3934 = vpack.c.b16 %v3694, %v3692
        %v3935 = vpack.c.b16 %v3697, %v3695
        %v3936 = vpack.c.b16 %v3698, %v3696
        %v3937 = vpack.c.b16 %v3701, %v3699
        %v3938 = vpack.c.b16 %v3702, %v3700
        %v3939 = vpack.c.b16 %v3705, %v3703
        %v3940 = vpack.c.b16 %v3706, %v3704
        %v3941 = vpack.c.b16 %v3709, %v3707
        %v3942 = vpack.c.b16 %v3710, %v3708
        %v3943 = vpack.c.b16 %v3713, %v3711
        %v3944 = vpack.c.b16 %v3714, %v3712
        %v3945 = vpack.c.b16 %v3717, %v3715
        %v3946 = vpack.c.b16 %v3718, %v3716
        %v3947 = vpack.c.b16 %v3721, %v3719
        %v3948 = vpack.c.b16 %v3722, %v3720
        %v3949 = vpack.c.b16 %v3725, %v3723
        %v3950 = vpack.c.b16 %v3726, %v3724
        %v3951 = vpack.c.b16 %v3729, %v3727
        %v3952 = vpack.c.b16 %v3730, %v3728
        %v3953 = vpack.c.b16 %v3733, %v3731
        %v3954 = vpack.c.b16 %v3734, %v3732
        %v3955 = vpack.c.b16 %v3737, %v3735
        %v3956 = vpack.c.b16 %v3738, %v3736
        %v3957 = vpack.c.b16 %v3741, %v3739
        %v3958 = vpack.c.b16 %v3742, %v3740
        %v3959 = vpack.c.b16 %v3745, %v3743
        %v3960 = vpack.c.b16 %v3746, %v3744
        %v3961 = vpack.c.b16 %v3749, %v3747
        %v3962 = vpack.c.b16 %v3750, %v3748
        %v3963 = vpack.c.b16 %v3753, %v3751
        %v3964 = vpack.c.b16 %v3754, %v3752
        %v3965 = vpack.c.b16 %v3757, %v3755
        %v3966 = vpack.c.b16 %v3758, %v3756
        %v3967 = vpack.c.b16 %v3761, %v3759
        %v3968 = vpack.c.b16 %v3762, %v3760
        %v3969 = vpack.c.b16 %v3765, %v3763
        %v3970 = vpack.c.b16 %v3766, %v3764
        %v3971 = vpack.c.b16 %v3769, %v3767
        %v3972 = vpack.c.b16 %v3770, %v3768
        %v3973 = vpack.c.b16 %v3773, %v3771
        %v3974 = vpack.c.b16 %v3774, %v3772
        %v3975 = vpack.c.b16 %v3777, %v3775
        %v3976 = vpack.c.b16 %v3778, %v3776
        %v3977 = vpack.c.b16 %v3781, %v3779
        %v3978 = vpack.c.b16 %v3782, %v3780
        %v3979 = vpack.c.b16 %v3785, %v3783
        %v3980 = vpack.c.b16 %v3786, %v3784
        %v3981 = vpack.c.b16 %v3789, %v3787
        %v3982 = vpack.c.b16 %v3790, %v3788
        %v3983 = vpack.c.b16 %v3793, %v3791
        %v3984 = vpack.c.b16 %v3794, %v3792
        %v3985 = vpack.c.b16 %v3797, %v3795
        %v3986 = vpack.c.b16 %v3798, %v3796
        %v3987 = vpack.c.b16 %v3801, %v3799
        %v3988 = vpack.c.b16 %v3802, %v3800
        %v3989 = vpack.c.b16 %v3805, %v3803
        %v3990 = vpack.c.b16 %v3806, %v3804
        %v3991 = vpack.c.b16 %v3809, %v3807
        %v3992 = vpack.c.b16 %v3810, %v3808
        %v3993 = vpack.c.b16 %v3813, %v3811
        %v3994 = vpack.c.b16 %v3814, %v3812
        %v3995 = vpack.c.b16 %v3817, %v3815
        %v3996 = vpack.c.b16 %v3818, %v3816
        %v3997 = vpack.c.b16 %v3821, %v3819
        %v3998 = vpack.c.b16 %v3822, %v3820
        %v3999 = vpack.c.b16 %v3825, %v3823
        %v4000 = vpack.c.b16 %v3826, %v3824
        %v4001 = vpack.c.b16 %v3829, %v3827
        %v4002 = vpack.c.b16 %v3830, %v3828
        %v4003 = vpack.c.b16 %v3833, %v3831
        %v4004 = vpack.c.b16 %v3834, %v3832
        %v4005 = vpack.c.b16 %v3837, %v3835
        %v4006 = vpack.c.b16 %v3838, %v3836
        %v4007 = vpack.c.b16 %v3841, %v3839
        %v4008 = vpack.c.b16 %v3842, %v3840
        %v4009 = vpack.c.b16 %v3845, %v3843
        %v4010 = vpack.c.b16 %v3846, %v3844
        %v4011 = vpack.c.b16 %v3849, %v3847
        %v4012 = vpack.c.b16 %v3850, %v3848
        %v4013 = vpack.c.b16 %v3853, %v3851
        %v4014 = vpack.c.b16 %v3854, %v3852
        %v4015 = vpack.c.b16 %v3857, %v3855
        %v4016 = vpack.c.b16 %v3858, %v3856
        %v4017 = vpack.c.b16 %v3861, %v3859
        %v4018 = vpack.c.b16 %v3862, %v3860
        %v4019 = vpack.c.b16 %v3865, %v3863
        %v4020 = vpack.c.b16 %v3866, %v3864
        %v4021 = vpack.c.b16 %v3869, %v3867
        %v4022 = vpack.c.b16 %v3870, %v3868
        %v4023 = vpack.c.b16 %v3873, %v3871
        %v4024 = vpack.c.b16 %v3874, %v3872
        %v4025 = vpack.c.b16 %v3877, %v3875
        %v4026 = vpack.c.b16 %v3878, %v3876
        %v4027 = vpack.c.b16 %v3881, %v3879
        %v4028 = vpack.c.b16 %v3882, %v3880
        %v4029 = vpack.c.b16 %v3885, %v3883
        %v4030 = vpack.c.b16 %v3886, %v3884
        %v4031 = vpack.c.b16 %v3889, %v3887
        %v4032 = vpack.c.b16 %v3890, %v3888
        %v4033 = vpack.c.b16 %v3893, %v3891
        %v4034 = vpack.c.b16 %v3894, %v3892
        %v4035 = vpack.c.b16 %v3897, %v3895
        %v4036 = vpack.c.b16 %v3898, %v3896
        %v4037 = vpack.c.b16 %v3901, %v3899
        %v4038 = vpack.c.b16 %v3902, %v3900
        %v4039 = vpack.c.b16 %v3905, %v3903
        %v4040 = vpack.c.b16 %v3906, %v3904
        %v4041 = vpack.c.b16 %v3909, %v3907
        %v4042 = vpack.c.b16 %v3910, %v3908
        %v4043 = vpack.c.b16 %v3913, %v3911
        %v4044 = vpack.c.b16 %v3914, %v3912
        %v4045 = vpack.c.b16 %v3917, %v3915
        %v4046 = vpack.c.b16 %v3918, %v3916
        %4175 = vmatprep.subr.bf16.mxu0 %v3920
        %4176 = vmatpush1.bf16.msra.mxu0 %v3919
        %4177 = vmatprep.subr.bf16.mxu0 %v3922
        %4178 = vmatpush1.bf16.msra.mxu0 %v3921
        %4179 = vmatprep.subr.bf16.mxu0 %v3924
        %4180 = vmatpush1.bf16.msra.mxu0 %v3923
        %4181 = vmatprep.subr.bf16.mxu0 %v3926
        %4182 = vmatpush1.bf16.msra.mxu0 %v3925
        %4183 = vmatprep.subr.bf16.mxu0 %v3928
        %4184 = vmatpush1.bf16.msra.mxu0 %v3927
        %4185 = vmatprep.subr.bf16.mxu0 %v3930
        %4186 = vmatpush1.bf16.msra.mxu0 %v3929
        %4187 = vmatprep.subr.bf16.mxu0 %v3932
        %4188 = vmatpush1.bf16.msra.mxu0 %v3931
        %4189 = vmatprep.subr.bf16.mxu0 %v3934
        %4190 = vmatpush1.bf16.msra.mxu0 %v3933
        %4191 = vmatprep.subr.bf16.mxu0 %v3936
        %4192 = vmatpush1.bf16.msra.mxu0 %v3935
        %4193 = vmatprep.subr.bf16.mxu0 %v3938
        %4194 = vmatpush1.bf16.msra.mxu0 %v3937
        %4195 = vmatprep.subr.bf16.mxu0 %v3940
        %4196 = vmatpush1.bf16.msra.mxu0 %v3939
        %4197 = vmatprep.subr.bf16.mxu0 %v3942
        %4198 = vmatpush1.bf16.msra.mxu0 %v3941
        %4199 = vmatprep.subr.bf16.mxu0 %v3944
        %4200 = vmatpush1.bf16.msra.mxu0 %v3943
        %4201 = vmatprep.subr.bf16.mxu0 %v3946
        %4202 = vmatpush1.bf16.msra.mxu0 %v3945
        %4203 = vmatprep.subr.bf16.mxu0 %v3948
        %4204 = vmatpush1.bf16.msra.mxu0 %v3947
        %4205 = vmatprep.subr.bf16.mxu0 %v3950
        %4206 = vmatpush1.bf16.msra.mxu0 %v3949
        %4207 = vmatprep.mubr.bf16.mxu0 %v3388
        %4208 = vmatmul.mubr.bf16.gmra.mrb[0].mxu0 %v3387
        %v4209 = vpop.f32.mrb[0].mxu0
        %v4210 = vadd.f32 %v3528, %v4209
        %v4211 = vpop.f32.mrb[0].mxu0
        %v4212 = vadd.f32 %v3532, %v4211
        %v4213 = vpop.f32.mrb[0].mxu0
        %v4214 = vadd.f32 %v3528, %v4213
        %v4215 = vpop.f32.mrb[0].mxu0
        %v4216 = vadd.f32 %v3532, %v4215
        %4217 = vdwg.mxu0
        %4218 = vmatprep.subr.bf16.mxu0 %v3952
        %4219 = vmatpush1.bf16.msra.mxu0 %v3951
        %4220 = vmatprep.subr.bf16.mxu0 %v3954
        %4221 = vmatpush1.bf16.msra.mxu0 %v3953
        %4222 = vmatprep.subr.bf16.mxu0 %v3956
        %4223 = vmatpush1.bf16.msra.mxu0 %v3955
        %4224 = vmatprep.subr.bf16.mxu0 %v3958
        %4225 = vmatpush1.bf16.msra.mxu0 %v3957
        %4226 = vmatprep.subr.bf16.mxu0 %v3960
        %4227 = vmatpush1.bf16.msra.mxu0 %v3959
        %4228 = vmatprep.subr.bf16.mxu0 %v3962
        %4229 = vmatpush1.bf16.msra.mxu0 %v3961
        %4230 = vmatprep.subr.bf16.mxu0 %v3964
        %4231 = vmatpush1.bf16.msra.mxu0 %v3963
        %4232 = vmatprep.subr.bf16.mxu0 %v3966
        %4233 = vmatpush1.bf16.msra.mxu0 %v3965
        %4234 = vmatprep.subr.bf16.mxu0 %v3968
        %4235 = vmatpush1.bf16.msra.mxu0 %v3967
        %4236 = vmatprep.subr.bf16.mxu0 %v3970
        %4237 = vmatpush1.bf16.msra.mxu0 %v3969
        %4238 = vmatprep.subr.bf16.mxu0 %v3972
        %4239 = vmatpush1.bf16.msra.mxu0 %v3971
        %4240 = vmatprep.subr.bf16.mxu0 %v3974
        %4241 = vmatpush1.bf16.msra.mxu0 %v3973
        %4242 = vmatprep.subr.bf16.mxu0 %v3976
        %4243 = vmatpush1.bf16.msra.mxu0 %v3975
        %4244 = vmatprep.subr.bf16.mxu0 %v3978
        %4245 = vmatpush1.bf16.msra.mxu0 %v3977
        %4246 = vmatprep.subr.bf16.mxu0 %v3980
        %4247 = vmatpush1.bf16.msra.mxu0 %v3979
        %4248 = vmatprep.subr.bf16.mxu0 %v3982
        %4249 = vmatpush1.bf16.msra.mxu0 %v3981
        %4250 = vmatprep.mubr.bf16.mxu0 %v3390
        %4251 = vmatmul.mubr.bf16.gmra.mrb[0].mxu0 %v3389
        %v4252 = vpop.f32.mrb[0].mxu0
        %v4253 = vadd.f32 %v4210, %v4252
        %v4254 = vpop.f32.mrb[0].mxu0
        %v4255 = vadd.f32 %v4212, %v4254
        %v4256 = vpop.f32.mrb[0].mxu0
        %v4257 = vadd.f32 %v4214, %v4256
        %v4258 = vpop.f32.mrb[0].mxu0
        %v4259 = vadd.f32 %v4216, %v4258
        %4260 = vdwg.mxu0
        %4261 = vmatprep.subr.bf16.mxu0 %v3984
        %4262 = vmatpush1.bf16.msra.mxu0 %v3983
        %4263 = vmatprep.subr.bf16.mxu0 %v3986
        %4264 = vmatpush1.bf16.msra.mxu0 %v3985
        %4265 = vmatprep.subr.bf16.mxu0 %v3988
        %4266 = vmatpush1.bf16.msra.mxu0 %v3987
        %4267 = vmatprep.subr.bf16.mxu0 %v3990
        %4268 = vmatpush1.bf16.msra.mxu0 %v3989
        %4269 = vmatprep.subr.bf16.mxu0 %v3992
        %4270 = vmatpush1.bf16.msra.mxu0 %v3991
        %4271 = vmatprep.subr.bf16.mxu0 %v3994
        %4272 = vmatpush1.bf16.msra.mxu0 %v3993
        %4273 = vmatprep.subr.bf16.mxu0 %v3996
        %4274 = vmatpush1.bf16.msra.mxu0 %v3995
        %4275 = vmatprep.subr.bf16.mxu0 %v3998
        %4276 = vmatpush1.bf16.msra.mxu0 %v3997
        %4277 = vmatprep.subr.bf16.mxu0 %v4000
        %4278 = vmatpush1.bf16.msra.mxu0 %v3999
        %4279 = vmatprep.subr.bf16.mxu0 %v4002
        %4280 = vmatpush1.bf16.msra.mxu0 %v4001
        %4281 = vmatprep.subr.bf16.mxu0 %v4004
        %4282 = vmatpush1.bf16.msra.mxu0 %v4003
        %4283 = vmatprep.subr.bf16.mxu0 %v4006
        %4284 = vmatpush1.bf16.msra.mxu0 %v4005
        %4285 = vmatprep.subr.bf16.mxu0 %v4008
        %4286 = vmatpush1.bf16.msra.mxu0 %v4007
        %4287 = vmatprep.subr.bf16.mxu0 %v4010
        %4288 = vmatpush1.bf16.msra.mxu0 %v4009
        %4289 = vmatprep.subr.bf16.mxu0 %v4012
        %4290 = vmatpush1.bf16.msra.mxu0 %v4011
        %4291 = vmatprep.subr.bf16.mxu0 %v4014
        %4292 = vmatpush1.bf16.msra.mxu0 %v4013
        %4293 = vmatprep.mubr.bf16.mxu0 %v3392
        %4294 = vmatmul.mubr.bf16.gmra.mrb[0].mxu0 %v3391
        %v4295 = vpop.f32.mrb[0].mxu0
        %v4296 = vadd.f32 %v4253, %v4295
        %v4297 = vpop.f32.mrb[0].mxu0
        %v4298 = vadd.f32 %v4255, %v4297
        %v4299 = vpop.f32.mrb[0].mxu0
        %v4300 = vadd.f32 %v4257, %v4299
        %v4301 = vpop.f32.mrb[0].mxu0
        %v4302 = vadd.f32 %v4259, %v4301
        %4303 = vdwg.mxu0
        %4304 = vmatprep.subr.bf16.mxu0 %v4016
        %4305 = vmatpush1.bf16.msra.mxu0 %v4015
        %4306 = vmatprep.subr.bf16.mxu0 %v4018
        %4307 = vmatpush1.bf16.msra.mxu0 %v4017
        %4308 = vmatprep.subr.bf16.mxu0 %v4020
        %4309 = vmatpush1.bf16.msra.mxu0 %v4019
        %4310 = vmatprep.subr.bf16.mxu0 %v4022
        %4311 = vmatpush1.bf16.msra.mxu0 %v4021
        %4312 = vmatprep.subr.bf16.mxu0 %v4024
        %4313 = vmatpush1.bf16.msra.mxu0 %v4023
        %4314 = vmatprep.subr.bf16.mxu0 %v4026
        %4315 = vmatpush1.bf16.msra.mxu0 %v4025
        %4316 = vmatprep.subr.bf16.mxu0 %v4028
        %4317 = vmatpush1.bf16.msra.mxu0 %v4027
        %4318 = vmatprep.subr.bf16.mxu0 %v4030
        %4319 = vmatpush1.bf16.msra.mxu0 %v4029
        %4320 = vmatprep.subr.bf16.mxu0 %v4032
        %4321 = vmatpush1.bf16.msra.mxu0 %v4031
        %4322 = vmatprep.subr.bf16.mxu0 %v4034
        %4323 = vmatpush1.bf16.msra.mxu0 %v4033
        %4324 = vmatprep.subr.bf16.mxu0 %v4036
        %4325 = vmatpush1.bf16.msra.mxu0 %v4035
        %4326 = vmatprep.subr.bf16.mxu0 %v4038
        %4327 = vmatpush1.bf16.msra.mxu0 %v4037
        %4328 = vmatprep.subr.bf16.mxu0 %v4040
        %4329 = vmatpush1.bf16.msra.mxu0 %v4039
        %4330 = vmatprep.subr.bf16.mxu0 %v4042
        %4331 = vmatpush1.bf16.msra.mxu0 %v4041
        %4332 = vmatprep.subr.bf16.mxu0 %v4044
        %4333 = vmatpush1.bf16.msra.mxu0 %v4043
        %4334 = vmatprep.subr.bf16.mxu0 %v4046
        %4335 = vmatpush1.bf16.msra.mxu0 %v4045
        %4336 = vmatprep.mubr.bf16.mxu0 %v3394
        %4337 = vmatmul.mubr.bf16.gmra.mrb[0].mxu0 %v3393
        %v4338 = vpop.f32.mrb[0].mxu0
        %v4339 = vadd.f32 %v4296, %v4338
        %v4340 = vpop.f32.mrb[0].mxu0
        %v4341 = vadd.f32 %v4298, %v4340
        %v4342 = vpop.f32.mrb[0].mxu0
        %v4343 = vadd.f32 %v4300, %v4342
        %v4344 = vpop.f32.mrb[0].mxu0
        %v4345 = vadd.f32 %v4302, %v4344
        %4346 = vdwg.mxu0
        %v4347 = vsel %vm641, %v4343, 0.0
        %v4348 = vadd.f32 %v4339, %v4347
        %v4349 = vrot.slane %v4348, 4
        %v4350 = vadd.f32 %v4348, %v4349
        %v4351 = vrot.slane %v4350, 2
        %v4352 = vadd.f32 %v4350, %v4351
        %v4353 = vrot.slane %v4352, 1
        %v4354 = vadd.f32 %v4352, %v4353
        %v4355 = vsel %vm641, %v4345, 0.0
        %v4356 = vadd.f32 %v4341, %v4355
        %v4357 = vrot.slane %v4356, 4
        %v4358 = vadd.f32 %v4356, %v4357
        %v4359 = vrot.slane %v4358, 2
        %v4360 = vadd.f32 %v4358, %v4359
        %v4361 = vrot.slane %v4360, 1
        %v4362 = vadd.f32 %v4360, %v4361
        %v4365 = vcombine.low %v4354, %v4362
        %v4367 = vunpack.c.l.s4 1966171168
        %v4368 = vunpack.c.0.s8 %v4367
        %v4369 = vlaneseq
        %v4370 = vshrl.u32 %v4369, 7
        %v4371 = vsub.s32 %v4368, %v4370
        %v4372 = vrot.slane %v4365, %v4371
        %v4374 = vunpack.c.l.s4 1966171168
        %v4375 = vunpack.c.0.s8 %v4374
        %v4376 = vlaneseq
        %v4377 = vshrl.u32 %v4376, 7
        %v4378 = vsub.s32 %v4375, %v4377
        %v4379 = vrot.slane %v4372, %v4378
        %v4381 = vlaneseq
        %vm4382 = vcmp.ge.s32.totalorder %v4381, 0
        %vm4383 = vcmp.lt.s32.totalorder %v4381, 256
        %vm4384 = vmand %vm4382, %vm4383
        %4385 = vst.msk [vmem:[%s613] sm:$0x3] %vm4384, %v4379
        %p4386 = scmp.lt.s32.totalorder %s31, 1
        %s4387 = scalar_select %p4386, %s31, 1
        %s4388 = smul.addr %s4387, 2
        %s4389 = scalar_lea.vmem %s15, %s4388
        // Predicated region
        $region117: #{fwd.3} parent=79 // pred_check
          %p4390 = pneg %p369
        $region118: #{fwd.3} parent=79 // pred_check_branch
          %4392 = sbr.rel (%p4390) target = $region120
        $region119: #{fwd.3} parent=79 // pred_region
          _
        $region120: #{fwd.3} parent=79 // pred_fallthru
          _
      $region80: #{fwd.3} parent=5 // pred_fallthru
        _
      %p4393 = scmp.le.s32.totalorder 2, %s26
      // Predicated region
      $region121: #{fwd.3} parent=5 // pred_check
        %p4394 = pneg %p4393
      $region122: #{fwd.3} parent=5 // pred_check_branch
        %4396 = sbr.rel (%p4394) target = $region124
      $region123: #{fwd.3} parent=5 // pred_region
        %s4397 = ssub.s32 %s26, 2
        // Predicated region
        $region125: #{fwd.3} parent=123 // pred_check
          %p4398 = pneg %p375
        $region126: #{fwd.3} parent=123 // pred_check_branch
          %4400 = sbr.rel (%p4398) target = $region128
        $region127: #{fwd.3} parent=123 // pred_region
          %p4401 = scmp.lt.s32.totalorder %s32, 1
          %s4402 = scalar_select %p4401, %s32, 1
          %s4403 = smul.addr %s4402, 2
          %s4404 = scalar_lea.vmem %s15, %s4403
        $region128: #{fwd.3} parent=123 // pred_fallthru
          _
      $region124: #{fwd.3} parent=5 // pred_fallthru
        _
    $region6: #{fwd.3} parent=1 // loop_footer
      %s30 = sadd.s32 1, %s26
    $region7: #{fwd.3} parent=1 // loop_footer_branch
      %25 = sbr.rel target = $region3
    $region8: #{fwd.3} parent=1 // loop_exit
      _
    %4405 = vsyncpa [#allocation3], 1
    %s4406 = scalar_lea.sflag [#allocation3], 1
    %4407 = vsyncpa %s4406, 1
    %4408 = vsyncpa [#allocation5], 1
    %4409 = vsyncpa [#allocation8], 1
    %4410 = vsyncpa [#allocation11], 1
    %4411 = vsyncpa [#allocation14], 1

</llo_original>
